<compile_context>
chip_gen: v5e
topology: v5e:2x2
jax: 0.10.0
libtpu: 0.0.40
codegen_flags: <defaults>
</compile_context>

<pallas_src>
import functools
import numpy as np

import jax
import jax.numpy as jnp
from jax.experimental import pallas as pl
from jax.experimental.pallas import tpu as pltpu

# ----------------------------- configuration ------------------------------
IMAGE_SIZE = 16
PATCH_SIZE = 4
IN_CHANS = 3
EMB_DIM = 32
MLP_DIM = 64
NUM_HEADS = 4
NUM_LAYERS = 2
NUM_CLASSES = 10
BATCH = 2
LN_EPS = 1e-5                      # PyTorch nn.LayerNorm default eps

HEAD_DIM = EMB_DIM // NUM_HEADS
GRID_H = IMAGE_SIZE // PATCH_SIZE
NUM_PATCHES = GRID_H * GRID_H
SEQ_LEN = NUM_PATCHES + 1          # +1 for cls token
PATCH_DIM = IN_CHANS * PATCH_SIZE * PATCH_SIZE
TOKENS = BATCH * SEQ_LEN           # 34: flattened (batch, seq) token slab
OUT_ROWS = 8                       # padded sublane rows of the logits output (>= BATCH)
OUT_LANES = 128                    # padded lane width of the logits output (>= NUM_CLASSES)
GHEAD = 8                          # header rows of the global slab (before classifier weight)

assert BATCH <= OUT_ROWS and NUM_CLASSES <= OUT_LANES
assert 4 * EMB_DIM == 128 and 2 * MLP_DIM == 128 and MLP_DIM + 2 * EMB_DIM == 128


# ----------------------------- in-kernel helpers ---------------------------
def _ln(x, g, b):
    mu = jnp.mean(x, axis=-1, keepdims=True)
    var = jnp.mean((x - mu) ** 2, axis=-1, keepdims=True)
    return (x - mu) * jax.lax.rsqrt(var + LN_EPS) * g + b


def _gelu(x, exact):
    if exact:
        # PyTorch nn.GELU() default: exact erf-based GELU.
        return 0.5 * x * (1.0 + jax.lax.erf(x * np.float32(1.0 / np.sqrt(2.0))))
    # TODO(synk): tanh-GELU fallback (only if lax.erf has no Mosaic lowering here)
    # is not bit-compatible with PyTorch's exact erf GELU.
    c = np.float32(np.sqrt(2.0 / np.pi))
    return 0.5 * x * (1.0 + jnp.tanh(c * (x + np.float32(0.044715) * x * x * x)))


# --------------------------- single fused kernel ---------------------------
def _vit_forward_kernel(xt_ref, posc_ref, abias_ref, wp_ref, wslab_ref, bslab_ref,
                        gslab_ref, o_ref, *, exact_gelu):
    f32 = jnp.float32
    bf16 = jnp.bfloat16
    D, H, Hd, M = EMB_DIM, NUM_HEADS, HEAD_DIM, MLP_DIM
    inv_scale = np.float32(1.0 / np.sqrt(Hd))

    # ---- patch embedding (conv as im2col matmul); cls/pos/conv-bias folded into posc ----
    x = jnp.dot(xt_ref[...], wp_ref[...], preferred_element_type=f32) + posc_ref[...]  # (34, D)
    abias = abias_ref[...]                                                              # (34, 34)

    for l in range(NUM_LAYERS):                         # static unroll over layers
        # -- packed per-layer weights (bf16) and biases/LN (f32), static slab slices --
        wqkv = wslab_ref[l, 0:D, 0:3 * D]               # (D, 3D)  [Wq | Wk | Wv]
        wo = wslab_ref[l, 0:D, 3 * D:4 * D]             # (H*Hd, D) concat-heads out proj
        w1 = wslab_ref[l, D:2 * D, 0:M]                 # (D, M)
        w2t = wslab_ref[l, D:2 * D, M:2 * M]            # (D, M) == W2^T

        bqkv = bslab_ref[l, 0:1, 0:3 * D]               # (1, 3D)
        ln1g = bslab_ref[l, 1:2, 0:D]
        ln1b = bslab_ref[l, 1:2, D:2 * D]
        ln2g = bslab_ref[l, 1:2, 2 * D:3 * D]
        ln2b = bslab_ref[l, 1:2, 3 * D:4 * D]
        b1 = bslab_ref[l, 2:3, 0:M]
        bo = bslab_ref[l, 2:3, M:M + D]
        b2 = bslab_ref[l, 2:3, M + D:M + 2 * D]

        # ---- attention branch (pre-LN): one fused lane-dense QKV matmul ----
        xn = _ln(x, ln1g, ln1b)
        qkv = jnp.dot(xn.astype(bf16), wqkv, preferred_element_type=f32) + bqkv    # (34, 3D)

        # split heads with tiny static lane slices -> (H, 34, Hd); keep f32 from here on
        q3 = jnp.stack([qkv[:, h * Hd:(h + 1) * Hd] for h in range(H)], axis=0)
        k3 = jnp.stack([qkv[:, D + h * Hd:D + (h + 1) * Hd] for h in range(H)], axis=0)
        v3 = jnp.stack([qkv[:, 2 * D + h * Hd:2 * D + (h + 1) * Hd] for h in range(H)], axis=0)

        s = jnp.einsum("hqd,hkd->hqk", q3, k3,
                       preferred_element_type=f32) * inv_scale + abias             # (H, 34, 34)
        s = s - jnp.max(s, axis=-1, keepdims=True)
        p = jnp.exp(s)
        p = p * pl.reciprocal(jnp.sum(p, axis=-1, keepdims=True), approx=False)
        oh = jnp.einsum("hqk,hkd->hqd", p, v3, preferred_element_type=f32)         # (H, 34, Hd)

        # concat heads -> (34, H*Hd); single lane-dense output projection
        oh_cat = jnp.concatenate([oh[h] for h in range(H)], axis=-1)               # (34, D)
        x = x + jnp.dot(oh_cat.astype(bf16), wo, preferred_element_type=f32) + bo  # residual 1

        # ---- MLP branch (pre-LN) ----
        xn2 = _ln(x, ln2g, ln2b)
        h1 = jnp.dot(xn2.astype(bf16), w1, preferred_element_type=f32) + b1        # (34, M)
        h1 = _gelu(h1, exact_gelu)
        x = x + jnp.einsum("mk,dk->md", h1.astype(bf16), w2t,
                           preferred_element_type=f32) + b2                        # residual 2

    # ---- final LN, cls-row select (iota selector matmul), classifier head in f32 ----
    x = _ln(x, gslab_ref[0:1, 0:D], gslab_ref[1:2, 0:D])
    rows = jax.lax.broadcasted_iota(jnp.int32, (OUT_ROWS, TOKENS), 0)
    cols = jax.lax.broadcasted_iota(jnp.int32, (OUT_ROWS, TOKENS), 1)
    sel = (cols == rows * SEQ_LEN).astype(f32)           # rows >= BATCH select nothing (zeros)
    feat = jnp.dot(sel, x, preferred_element_type=f32)   # (OUT_ROWS, D)
    wc = gslab_ref[GHEAD:GHEAD + D, :]                   # (D, 128), zero-padded classes
    bc = gslab_ref[2:3, :]                               # (1, 128)
    o_ref[...] = jnp.dot(feat, wc, preferred_element_type=f32) + bc   # lane-dense (8,128) store


# ------------------------------- forward -----------------------------------
@functools.partial(jax.jit, static_argnums=(2,))
def forward(x_img, packed, exact_gelu):
    B = x_img.shape[0]
    assert B == BATCH

    # im2col of the strided patch conv; insert a zero row per batch at the cls slot
    # so the kernel needs no scatter / placement matmul.
    patches = x_img.reshape(B, IN_CHANS, GRID_H, PATCH_SIZE, GRID_H, PATCH_SIZE)
    patches = patches.transpose(0, 2, 4, 1, 3, 5).reshape(B, NUM_PATCHES, PATCH_DIM)
    patches = jnp.pad(patches, ((0, 0), (1, 0), (0, 0)))           # (B, SEQ_LEN, PATCH_DIM)
    xt = patches.reshape(B * SEQ_LEN, PATCH_DIM).astype(jnp.bfloat16)

    kernel = functools.partial(_vit_forward_kernel, exact_gelu=exact_gelu)
    vmem = pl.BlockSpec(memory_space=pltpu.MemorySpace.VMEM)

    # Single ungridded call: all activations/weights fit trivially in VMEM.
    # TODO(synk): for real batch sizes add grid=(B,) with dimension_semantics=("parallel",)
    # to use v7x's second TensorCore; the block-diagonal abias then becomes unnecessary.
    out = pl.pallas_call(
        kernel,
        out_shape=jax.ShapeDtypeStruct((OUT_ROWS, OUT_LANES), jnp.float32),
        in_specs=[vmem] * 7,
        out_specs=vmem,
    )(xt, packed["posc"], packed["abias"], packed["wp"],
      packed["wslab"], packed["bslab"], packed["gslab"])
    return out[:B, :NUM_CLASSES]


# ----------------------- parameter init (deterministic) --------------------
def init_params(key):
    D, H, Hd, M, L = EMB_DIM, NUM_HEADS, HEAD_DIM, MLP_DIM, NUM_LAYERS
    ks = list(jax.random.split(key, 3 + 6 * L))
    nxt = ks.pop
    std = 0.05

    params = {}
    # Conv2d(3, emb, kernel=patch, stride=patch) as a matmul over im2col patches.
    conv_w = jax.random.normal(nxt(), (D, IN_CHANS, PATCH_SIZE, PATCH_SIZE), jnp.float32) * std
    params["wp"] = jnp.transpose(conv_w.reshape(D, PATCH_DIM))      # (PATCH_DIM, D)
    params["bp"] = jnp.zeros((D,), jnp.float32)
    params["cls"] = jnp.zeros((1, 1, D), jnp.float32)               # nn.Parameter(zeros)
    params["pos"] = jax.random.normal(nxt(), (1, SEQ_LEN, D), jnp.float32) * std

    wq, wk, wv, wo, w1, w2 = [], [], [], [], [], []
    for _ in range(L):
        # LinearGeneral((D,), (H, Hd)) weight is (D, H, Hd).
        wq.append(jax.random.normal(nxt(), (D, H, Hd), jnp.float32) * std)
        wk.append(jax.random.normal(nxt(), (D, H, Hd), jnp.float32) * std)
        wv.append(jax.random.normal(nxt(), (D, H, Hd), jnp.float32) * std)
        # LinearGeneral((H, Hd), (D,)) weight is (H, Hd, D).
        wo.append(jax.random.normal(nxt(), (H, Hd, D), jnp.float32) * std)
        w1.append(jax.random.normal(nxt(), (D, M), jnp.float32) * std)
        w2.append(jax.random.normal(nxt(), (M, D), jnp.float32) * std)
    params["wq"] = jnp.stack(wq)
    params["wk"] = jnp.stack(wk)
    params["wv"] = jnp.stack(wv)
    params["wo"] = jnp.stack(wo)
    params["w1"] = jnp.stack(w1)
    params["w2"] = jnp.stack(w2)
    params["bq"] = jnp.zeros((L, H, Hd), jnp.float32)
    params["bk"] = jnp.zeros((L, H, Hd), jnp.float32)
    params["bv"] = jnp.zeros((L, H, Hd), jnp.float32)
    params["bo"] = jnp.zeros((L, D), jnp.float32)
    params["ln1_g"] = jnp.ones((L, D), jnp.float32)
    params["ln1_b"] = jnp.zeros((L, D), jnp.float32)
    params["ln2_g"] = jnp.ones((L, D), jnp.float32)
    params["ln2_b"] = jnp.zeros((L, D), jnp.float32)
    params["b1"] = jnp.zeros((L, M), jnp.float32)
    params["b2"] = jnp.zeros((L, D), jnp.float32)
    params["lnf_g"] = jnp.ones((D,), jnp.float32)
    params["lnf_b"] = jnp.zeros((D,), jnp.float32)
    params["wc"] = jax.random.normal(nxt(), (D, NUM_CLASSES), jnp.float32) * std
    params["bc"] = jnp.zeros((NUM_CLASSES,), jnp.float32)
    return params


# ------------------ pack params into lane-dense kernel slabs ----------------
def pack_params(params):
    D, H, Hd, M, L = EMB_DIM, NUM_HEADS, HEAD_DIM, MLP_DIM, NUM_LAYERS

    # per-layer bf16 weight slab (L, 2D, 128):
    #   rows 0:D  -> [Wq | Wk | Wv | Wo_concat]   (each D-wide, 128 lanes total)
    #   rows D:2D -> [W1 | W2^T]                  (each M-wide, 128 lanes total)
    wq = params["wq"].reshape(L, D, H * Hd)
    wk = params["wk"].reshape(L, D, H * Hd)
    wv = params["wv"].reshape(L, D, H * Hd)
    wo = params["wo"].reshape(L, H * Hd, D)
    top = jnp.concatenate([wq, wk, wv, wo], axis=-1)                        # (L, D, 128)
    bot = jnp.concatenate([params["w1"], jnp.swapaxes(params["w2"], 1, 2)], axis=-1)  # (L, D, 128)
    wslab = jnp.concatenate([top, bot], axis=1).astype(jnp.bfloat16)        # (L, 2D, 128)

    # per-layer f32 bias/LN slab (L, 3, 128):
    #   row 0: [bq | bk | bv | pad] ; row 1: [ln1_g | ln1_b | ln2_g | ln2_b]
    #   row 2: [b1 | bo | b2]
    bqkv = jnp.concatenate([params["bq"].reshape(L, H * Hd),
                            params["bk"].reshape(L, H * Hd),
                            params["bv"].reshape(L, H * Hd)], axis=-1)      # (L, 3D)
    row0 = jnp.pad(bqkv, ((0, 0), (0, 128 - 3 * D)))
    row1 = jnp.concatenate([params["ln1_g"], params["ln1_b"],
                            params["ln2_g"], params["ln2_b"]], axis=-1)     # (L, 128)
    row2 = jnp.concatenate([params["b1"], params["bo"], params["b2"]], axis=-1)  # (L, 128)
    bslab = jnp.stack([row0, row1, row2], axis=1).astype(jnp.float32)       # (L, 3, 128)

    # global f32 slab (GHEAD + D, 128): rows 0/1 = final LN gamma/beta, row 2 = bc (padded),
    # rows GHEAD:GHEAD+D = classifier weight (classes padded to 128 lanes).
    lnf_g = jnp.pad(params["lnf_g"].reshape(1, D), ((0, 0), (0, 128 - D)))
    lnf_b = jnp.pad(params["lnf_b"].reshape(1, D), ((0, 0), (0, 128 - D)))
    bc = jnp.pad(params["bc"].reshape(1, NUM_CLASSES), ((0, 0), (0, 128 - NUM_CLASSES)))
    pad_rows = jnp.zeros((GHEAD - 3, 128), jnp.float32)
    wc = jnp.pad(params["wc"], ((0, 0), (0, 128 - NUM_CLASSES)))            # (D, 128)
    gslab = jnp.concatenate([lnf_g, lnf_b, bc, pad_rows, wc], axis=0).astype(jnp.float32)

    # additive token constant: cls rows get cls+pos[0]; patch rows get pos[1+i]+conv bias
    pos = params["pos"][0]                                                   # (SEQ_LEN, D)
    per_batch = jnp.concatenate(
        [params["cls"].reshape(1, D) + pos[0:1],
         pos[1:] + params["bp"].reshape(1, D)], axis=0)                      # (SEQ_LEN, D)
    posc = jnp.tile(per_batch, (BATCH, 1))                                   # (TOKENS, D)

    # block-diagonal attention bias: prevents cross-batch attention in the flat token slab.
    bid = np.arange(TOKENS) // SEQ_LEN
    abias = jnp.asarray(np.where(bid[:, None] == bid[None, :], 0.0, -1e30).astype(np.float32))

    return {"wp": params["wp"].astype(jnp.bfloat16),
            "posc": posc, "abias": abias,
            "wslab": wslab, "bslab": bslab, "gslab": gslab}


def _probe_exact_gelu():
    """Check whether lax.erf lowers on this Mosaic version; else use tanh-GELU."""
    def k(x_ref, o_ref):
        o_ref[...] = 0.5 * x_ref[...] * (
            1.0 + jax.lax.erf(x_ref[...] * np.float32(0.7071067811865476)))
    try:
        pl.pallas_call(
            k, out_shape=jax.ShapeDtypeStruct((8, 128), jnp.float32)
        )(jnp.zeros((8, 128), jnp.float32)).block_until_ready()
        return True
    except Exception:
        # TODO(synk): fallback is the tanh approximation, not bit-exact vs PyTorch erf GELU.
        return False


if __name__ == "__main__":
    key = jax.random.PRNGKey(0)
    pkey, xkey = jax.random.split(key)
    params = init_params(pkey)
    packed = pack_params(params)
    x = jax.random.normal(xkey, (BATCH, IN_CHANS, IMAGE_SIZE, IMAGE_SIZE), jnp.float32)

    exact = _probe_exact_gelu()
    out = forward(x, packed, exact)
    out = jax.block_until_ready(out)
    assert out.shape == (BATCH, NUM_CLASSES)
    assert bool(jnp.all(jnp.isfinite(out)))
    print("KERNEL_OK")
</pallas_src>

<mosaic_0001>
module attributes {stable_mosaic.version = 11 : i64} {
  func.func @k(%arg0: memref<8x128xf32, #tpu.memory_space<vmem>>, %arg1: memref<8x128xf32, #tpu.memory_space<vmem>>) attributes {dimension_semantics = [], scalar_prefetch = 0 : i64, scratch_operands = 0 : i64, tpu.core_type = #tpu.core_type<tc>} {
    %c0 = arith.constant 0 : index
    %c0_0 = arith.constant 0 : index
    %0 = vector.load %arg0[%c0, %c0_0] : memref<8x128xf32, #tpu.memory_space<vmem>>, vector<8x128xf32>
    %cst = arith.constant 5.000000e-01 : f32
    %1 = vector.broadcast %cst : f32 to vector<8x128xf32>
    %2 = arith.mulf %1, %0 : vector<8x128xf32>
    %c0_1 = arith.constant 0 : index
    %c0_2 = arith.constant 0 : index
    %3 = vector.load %arg0[%c0_1, %c0_2] : memref<8x128xf32, #tpu.memory_space<vmem>>, vector<8x128xf32>
    %cst_3 = arith.constant 0.707106769 : f32
    %4 = vector.broadcast %cst_3 : f32 to vector<8x128xf32>
    %5 = arith.mulf %3, %4 : vector<8x128xf32>
    %6 = math.erf %5 : vector<8x128xf32>
    %cst_4 = arith.constant 1.000000e+00 : f32
    %7 = vector.broadcast %cst_4 : f32 to vector<8x128xf32>
    %8 = arith.addf %7, %6 : vector<8x128xf32>
    %9 = arith.mulf %2, %8 : vector<8x128xf32>
    %c0_5 = arith.constant 0 : index
    %c0_6 = arith.constant 0 : index
    %10 = vector.load %arg1[%c0_5, %c0_6] : memref<8x128xf32, #tpu.memory_space<vmem>>, vector<8x128xf32>
    tpu.vector_store %arg1[%c0_5, %c0_6], %9 {strides = array<i32>} : memref<8x128xf32, #tpu.memory_space<vmem>>, vector<8x128xf32>,
    return
  }
}

module attributes {stable_mosaic.version = 11 : i64} {
  func.func @_vit_forward_kernel(%arg0: memref<34x48xbf16, #tpu.memory_space<vmem>>, %arg1: memref<34x32xf32, #tpu.memory_space<vmem>>, %arg2: memref<34x34xf32, #tpu.memory_space<vmem>>, %arg3: memref<48x32xbf16, #tpu.memory_space<vmem>>, %arg4: memref<2x64x128xbf16, #tpu.memory_space<vmem>>, %arg5: memref<2x3x128xf32, #tpu.memory_space<vmem>>, %arg6: memref<40x128xf32, #tpu.memory_space<vmem>>, %arg7: memref<8x128xf32, #tpu.memory_space<vmem>>) attributes {dimension_semantics = [], scalar_prefetch = 0 : i64, scratch_operands = 0 : i64, tpu.core_type = #tpu.core_type<tc>} {
    %c0 = arith.constant 0 : index
    %c0_0 = arith.constant 0 : index
    %0 = vector.load %arg0[%c0, %c0_0] : memref<34x48xbf16, #tpu.memory_space<vmem>>, vector<34x48xbf16>
    %c0_1 = arith.constant 0 : index
    %c0_2 = arith.constant 0 : index
    %1 = vector.load %arg3[%c0_1, %c0_2] : memref<48x32xbf16, #tpu.memory_space<vmem>>, vector<48x32xbf16>
    %cst = arith.constant dense<0.000000e+00> : vector<34x32xf32>
    %2 = tpu.matmul %0, %1, %cst {dimension_numbers = #tpu.dot_dimension_numbers<[1], [0], [0], [1], [0, 0, 1, 1], [], []>} : vector<34x48xbf16>, vector<48x32xbf16>, vector<34x32xf32> -> vector<34x32xf32>
    %c0_3 = arith.constant 0 : index
    %c0_4 = arith.constant 0 : index
    %3 = vector.load %arg1[%c0_3, %c0_4] : memref<34x32xf32, #tpu.memory_space<vmem>>, vector<34x32xf32>
    %4 = arith.addf %2, %3 : vector<34x32xf32>
    %c0_5 = arith.constant 0 : index
    %c0_6 = arith.constant 0 : index
    %5 = vector.load %arg2[%c0_5, %c0_6] : memref<34x34xf32, #tpu.memory_space<vmem>>, vector<34x34xf32>
    %c0_7 = arith.constant 0 : index
    %c0_8 = arith.constant 0 : index
    %c0_9 = arith.constant 0 : index
    %6 = vector.load %arg4[%c0_7, %c0_8, %c0_9] : memref<2x64x128xbf16, #tpu.memory_space<vmem>>, vector<1x32x96xbf16>
    %7 = vector.shape_cast %6 : vector<1x32x96xbf16> to vector<32x96xbf16>
    %c0_10 = arith.constant 0 : index
    %c0_11 = arith.constant 0 : index
    %c96 = arith.constant 96 : index
    %8 = vector.load %arg4[%c0_10, %c0_11, %c96] : memref<2x64x128xbf16, #tpu.memory_space<vmem>>, vector<1x32x32xbf16>
    %9 = vector.shape_cast %8 : vector<1x32x32xbf16> to vector<32x32xbf16>
    %c0_12 = arith.constant 0 : index
    %c32 = arith.constant 32 : index
    %c0_13 = arith.constant 0 : index
    %10 = vector.load %arg4[%c0_12, %c32, %c0_13] : memref<2x64x128xbf16, #tpu.memory_space<vmem>>, vector<1x32x64xbf16>
    %11 = vector.shape_cast %10 : vector<1x32x64xbf16> to vector<32x64xbf16>
    %c0_14 = arith.constant 0 : index
    %c32_15 = arith.constant 32 : index
    %c64 = arith.constant 64 : index
    %12 = vector.load %arg4[%c0_14, %c32_15, %c64] : memref<2x64x128xbf16, #tpu.memory_space<vmem>>, vector<1x32x64xbf16>
    %13 = vector.shape_cast %12 : vector<1x32x64xbf16> to vector<32x64xbf16>
    %c0_16 = arith.constant 0 : index
    %c0_17 = arith.constant 0 : index
    %c0_18 = arith.constant 0 : index
    %14 = vector.load %arg5[%c0_16, %c0_17, %c0_18] : memref<2x3x128xf32, #tpu.memory_space<vmem>>, vector<1x1x96xf32>
    %15 = vector.shape_cast %14 : vector<1x1x96xf32> to vector<1x96xf32>
    %c0_19 = arith.constant 0 : index
    %c1 = arith.constant 1 : index
    %c0_20 = arith.constant 0 : index
    %16 = vector.load %arg5[%c0_19, %c1, %c0_20] : memref<2x3x128xf32, #tpu.memory_space<vmem>>, vector<1x1x32xf32>
    %17 = vector.shape_cast %16 : vector<1x1x32xf32> to vector<1x32xf32>
    %c0_21 = arith.constant 0 : index
    %c1_22 = arith.constant 1 : index
    %c32_23 = arith.constant 32 : index
    %18 = vector.load %arg5[%c0_21, %c1_22, %c32_23] : memref<2x3x128xf32, #tpu.memory_space<vmem>>, vector<1x1x32xf32>
    %19 = vector.shape_cast %18 : vector<1x1x32xf32> to vector<1x32xf32>
    %c0_24 = arith.constant 0 : index
    %c1_25 = arith.constant 1 : index
    %c64_26 = arith.constant 64 : index
    %20 = vector.load %arg5[%c0_24, %c1_25, %c64_26] : memref<2x3x128xf32, #tpu.memory_space<vmem>>, vector<1x1x32xf32>
    %21 = vector.shape_cast %20 : vector<1x1x32xf32> to vector<1x32xf32>
    %c0_27 = arith.constant 0 : index
    %c1_28 = arith.constant 1 : index
    %c96_29 = arith.constant 96 : index
    %22 = vector.load %arg5[%c0_27, %c1_28, %c96_29] : memref<2x3x128xf32, #tpu.memory_space<vmem>>, vector<1x1x32xf32>
    %23 = vector.shape_cast %22 : vector<1x1x32xf32> to vector<1x32xf32>
    %c0_30 = arith.constant 0 : index
    %c2 = arith.constant 2 : index
    %c0_31 = arith.constant 0 : index
    %24 = vector.load %arg5[%c0_30, %c2, %c0_31] : memref<2x3x128xf32, #tpu.memory_space<vmem>>, vector<1x1x64xf32>
    %25 = vector.shape_cast %24 : vector<1x1x64xf32> to vector<1x64xf32>
    %c0_32 = arith.constant 0 : index
    %c2_33 = arith.constant 2 : index
    %c64_34 = arith.constant 64 : index
    %26 = vector.load %arg5[%c0_32, %c2_33, %c64_34] : memref<2x3x128xf32, #tpu.memory_space<vmem>>, vector<1x1x32xf32>
    %27 = vector.shape_cast %26 : vector<1x1x32xf32> to vector<1x32xf32>
    %c0_35 = arith.constant 0 : index
    %c2_36 = arith.constant 2 : index
    %c96_37 = arith.constant 96 : index
    %28 = vector.load %arg5[%c0_35, %c2_36, %c96_37] : memref<2x3x128xf32, #tpu.memory_space<vmem>>, vector<1x1x32xf32>
    %29 = vector.shape_cast %28 : vector<1x1x32xf32> to vector<1x32xf32>
    %cst_38 = arith.constant dense<0.000000e+00> : vector<34xf32>
    %30 = vector.multi_reduction <add>, %4, %cst_38 [1] : vector<34x32xf32> to vector<34xf32>
    %31 = vector.shape_cast %30 : vector<34xf32> to vector<34x1xf32>
    %cst_39 = arith.constant 3.200000e+01 : f32
    %32 = vector.broadcast %cst_39 : f32 to vector<34x1xf32>
    %33 = arith.divf %31, %32 : vector<34x1xf32>
    %34 = vector.broadcast %33 : vector<34x1xf32> to vector<34x32xf32>
    %35 = arith.subf %4, %34 : vector<34x32xf32>
    %36 = arith.mulf %35, %35 : vector<34x32xf32>
    %cst_40 = arith.constant dense<0.000000e+00> : vector<34xf32>
    %37 = vector.multi_reduction <add>, %36, %cst_40 [1] : vector<34x32xf32> to vector<34xf32>
    %38 = vector.shape_cast %37 : vector<34xf32> to vector<34x1xf32>
    %cst_41 = arith.constant 3.200000e+01 : f32
    %39 = vector.broadcast %cst_41 : f32 to vector<34x1xf32>
    %40 = arith.divf %38, %39 : vector<34x1xf32>
    %41 = vector.broadcast %33 : vector<34x1xf32> to vector<34x32xf32>
    %42 = arith.subf %4, %41 : vector<34x32xf32>
    %cst_42 = arith.constant 9.99999974E-6 : f32
    %43 = vector.broadcast %cst_42 : f32 to vector<34x1xf32>
    %44 = arith.addf %40, %43 : vector<34x1xf32>
    %45 = math.rsqrt %44 : vector<34x1xf32>
    %46 = vector.broadcast %45 : vector<34x1xf32> to vector<34x32xf32>
    %47 = arith.mulf %42, %46 : vector<34x32xf32>
    %48 = vector.broadcast %17 : vector<1x32xf32> to vector<34x32xf32>
    %49 = arith.mulf %47, %48 : vector<34x32xf32>
    %50 = vector.broadcast %19 : vector<1x32xf32> to vector<34x32xf32>
    %51 = arith.addf %49, %50 : vector<34x32xf32>
    %52 = arith.truncf %51 : vector<34x32xf32> to vector<34x32xbf16>
    %cst_43 = arith.constant dense<0.000000e+00> : vector<34x96xf32>
    %53 = tpu.matmul %52, %7, %cst_43 {dimension_numbers = #tpu.dot_dimension_numbers<[1], [0], [0], [1], [0, 0, 1, 1], [], []>} : vector<34x32xbf16>, vector<32x96xbf16>, vector<34x96xf32> -> vector<34x96xf32>
    %54 = vector.broadcast %15 : vector<1x96xf32> to vector<34x96xf32>
    %55 = arith.addf %53, %54 : vector<34x96xf32>
    %56 = vector.extract_strided_slice %55 {offsets = [0, 0], sizes = [34, 8], strides = [1, 1]} : vector<34x96xf32> to vector<34x8xf32>
    %57 = vector.extract_strided_slice %55 {offsets = [0, 8], sizes = [34, 8], strides = [1, 1]} : vector<34x96xf32> to vector<34x8xf32>
    %58 = vector.extract_strided_slice %55 {offsets = [0, 16], sizes = [34, 8], strides = [1, 1]} : vector<34x96xf32> to vector<34x8xf32>
    %59 = vector.extract_strided_slice %55 {offsets = [0, 24], sizes = [34, 8], strides = [1, 1]} : vector<34x96xf32> to vector<34x8xf32>
    %60 = vector.shape_cast %56 : vector<34x8xf32> to vector<1x34x8xf32>
    %61 = vector.shape_cast %57 : vector<34x8xf32> to vector<1x34x8xf32>
    %62 = vector.shape_cast %58 : vector<34x8xf32> to vector<1x34x8xf32>
    %63 = vector.shape_cast %59 : vector<34x8xf32> to vector<1x34x8xf32>
    %64 = tpu.concatenate %60, %61, %62, %63 in 0 : vector<1x34x8xf32>, vector<1x34x8xf32>, vector<1x34x8xf32>, vector<1x34x8xf32> -> vector<4x34x8xf32>
    %65 = vector.extract_strided_slice %55 {offsets = [0, 32], sizes = [34, 8], strides = [1, 1]} : vector<34x96xf32> to vector<34x8xf32>
    %66 = vector.extract_strided_slice %55 {offsets = [0, 40], sizes = [34, 8], strides = [1, 1]} : vector<34x96xf32> to vector<34x8xf32>
    %67 = vector.extract_strided_slice %55 {offsets = [0, 48], sizes = [34, 8], strides = [1, 1]} : vector<34x96xf32> to vector<34x8xf32>
    %68 = vector.extract_strided_slice %55 {offsets = [0, 56], sizes = [34, 8], strides = [1, 1]} : vector<34x96xf32> to vector<34x8xf32>
    %69 = vector.shape_cast %65 : vector<34x8xf32> to vector<1x34x8xf32>
    %70 = vector.shape_cast %66 : vector<34x8xf32> to vector<1x34x8xf32>
    %71 = vector.shape_cast %67 : vector<34x8xf32> to vector<1x34x8xf32>
    %72 = vector.shape_cast %68 : vector<34x8xf32> to vector<1x34x8xf32>
    %73 = tpu.concatenate %69, %70, %71, %72 in 0 : vector<1x34x8xf32>, vector<1x34x8xf32>, vector<1x34x8xf32>, vector<1x34x8xf32> -> vector<4x34x8xf32>
    %74 = vector.extract_strided_slice %55 {offsets = [0, 64], sizes = [34, 8], strides = [1, 1]} : vector<34x96xf32> to vector<34x8xf32>
    %75 = vector.extract_strided_slice %55 {offsets = [0, 72], sizes = [34, 8], strides = [1, 1]} : vector<34x96xf32> to vector<34x8xf32>
    %76 = vector.extract_strided_slice %55 {offsets = [0, 80], sizes = [34, 8], strides = [1, 1]} : vector<34x96xf32> to vector<34x8xf32>
    %77 = vector.extract_strided_slice %55 {offsets = [0, 88], sizes = [34, 8], strides = [1, 1]} : vector<34x96xf32> to vector<34x8xf32>
    %78 = vector.shape_cast %74 : vector<34x8xf32> to vector<1x34x8xf32>
    %79 = vector.shape_cast %75 : vector<34x8xf32> to vector<1x34x8xf32>
    %80 = vector.shape_cast %76 : vector<34x8xf32> to vector<1x34x8xf32>
    %81 = vector.shape_cast %77 : vector<34x8xf32> to vector<1x34x8xf32>
    %82 = tpu.concatenate %78, %79, %80, %81 in 0 : vector<1x34x8xf32>, vector<1x34x8xf32>, vector<1x34x8xf32>, vector<1x34x8xf32> -> vector<4x34x8xf32>
    "tpu.trace_start"() <{level = 10 : i32, message = "hqd,hkd->hqk"}> : () -> ()
    %cst_44 = arith.constant dense<0.000000e+00> : vector<4x34x34xf32>
    %83 = tpu.matmul %64, %73, %cst_44 {dimension_numbers = #tpu.dot_dimension_numbers<[2], [2], [1], [1], [0, 0, 0, 1, 1, 1], [0], [0]>} : vector<4x34x8xf32>, vector<4x34x8xf32>, vector<4x34x34xf32> -> vector<4x34x34xf32>
    "tpu.trace_stop"() : () -> ()
    %cst_45 = arith.constant 0.353553385 : f32
    %84 = vector.broadcast %cst_45 : f32 to vector<4x34x34xf32>
    %85 = arith.mulf %83, %84 : vector<4x34x34xf32>
    %86 = vector.shape_cast %5 : vector<34x34xf32> to vector<1x34x34xf32>
    %87 = vector.broadcast %86 : vector<1x34x34xf32> to vector<4x34x34xf32>
    %88 = arith.addf %85, %87 : vector<4x34x34xf32>
    %cst_46 = arith.constant dense<0xFF800000> : vector<4x34xf32>
    %89 = vector.multi_reduction <maximumf>, %88, %cst_46 [2] : vector<4x34x34xf32> to vector<4x34xf32>
    %90 = vector.shape_cast %89 : vector<4x34xf32> to vector<4x34x1xf32>
    %91 = vector.broadcast %90 : vector<4x34x1xf32> to vector<4x34x34xf32>
    %92 = arith.subf %88, %91 : vector<4x34x34xf32>
    %93 = math.exp %92 : vector<4x34x34xf32>
    %cst_47 = arith.constant dense<0.000000e+00> : vector<4x34xf32>
    %94 = vector.multi_reduction <add>, %93, %cst_47 [2] : vector<4x34x34xf32> to vector<4x34xf32>
    %95 = vector.shape_cast %94 : vector<4x34xf32> to vector<4x34x1xf32>
    %96 = tpu.reciprocal %95 : vector<4x34x1xf32> -> vector<4x34x1xf32>
    %97 = vector.broadcast %96 : vector<4x34x1xf32> to vector<4x34x34xf32>
    %98 = arith.mulf %93, %97 : vector<4x34x34xf32>
    "tpu.trace_start"() <{level = 10 : i32, message = "hqk,hkd->hqd"}> : () -> ()
    %cst_48 = arith.constant dense<0.000000e+00> : vector<4x34x8xf32>
    %99 = tpu.matmul %98, %82, %cst_48 {dimension_numbers = #tpu.dot_dimension_numbers<[2], [1], [1], [2], [0, 0, 0, 1, 1, 2], [0], [0]>} : vector<4x34x34xf32>, vector<4x34x8xf32>, vector<4x34x8xf32> -> vector<4x34x8xf32>
    "tpu.trace_stop"() : () -> ()
    %100 = vector.extract_strided_slice %99 {offsets = [0, 0, 0], sizes = [1, 34, 8], strides = [1, 1, 1]} : vector<4x34x8xf32> to vector<1x34x8xf32>
    %101 = vector.shape_cast %100 : vector<1x34x8xf32> to vector<34x8xf32>
    %102 = vector.extract_strided_slice %99 {offsets = [1, 0, 0], sizes = [1, 34, 8], strides = [1, 1, 1]} : vector<4x34x8xf32> to vector<1x34x8xf32>
    %103 = vector.shape_cast %102 : vector<1x34x8xf32> to vector<34x8xf32>
    %104 = vector.extract_strided_slice %99 {offsets = [2, 0, 0], sizes = [1, 34, 8], strides = [1, 1, 1]} : vector<4x34x8xf32> to vector<1x34x8xf32>
    %105 = vector.shape_cast %104 : vector<1x34x8xf32> to vector<34x8xf32>
    %106 = vector.extract_strided_slice %99 {offsets = [3, 0, 0], sizes = [1, 34, 8], strides = [1, 1, 1]} : vector<4x34x8xf32> to vector<1x34x8xf32>
    %107 = vector.shape_cast %106 : vector<1x34x8xf32> to vector<34x8xf32>
    %108 = tpu.concatenate %101, %103, %105, %107 in 1 : vector<34x8xf32>, vector<34x8xf32>, vector<34x8xf32>, vector<34x8xf32> -> vector<34x32xf32>
    %109 = arith.truncf %108 : vector<34x32xf32> to vector<34x32xbf16>
    %cst_49 = arith.constant dense<0.000000e+00> : vector<34x32xf32>
    %110 = tpu.matmul %109, %9, %cst_49 {dimension_numbers = #tpu.dot_dimension_numbers<[1], [0], [0], [1], [0, 0, 1, 1], [], []>} : vector<34x32xbf16>, vector<32x32xbf16>, vector<34x32xf32> -> vector<34x32xf32>
    %111 = arith.addf %4, %110 : vector<34x32xf32>
    %112 = vector.broadcast %27 : vector<1x32xf32> to vector<34x32xf32>
    %113 = arith.addf %111, %112 : vector<34x32xf32>
    %cst_50 = arith.constant dense<0.000000e+00> : vector<34xf32>
    %114 = vector.multi_reduction <add>, %113, %cst_50 [1] : vector<34x32xf32> to vector<34xf32>
    %115 = vector.shape_cast %114 : vector<34xf32> to vector<34x1xf32>
    %cst_51 = arith.constant 3.200000e+01 : f32
    %116 = vector.broadcast %cst_51 : f32 to vector<34x1xf32>
    %117 = arith.divf %115, %116 : vector<34x1xf32>
    %118 = vector.broadcast %117 : vector<34x1xf32> to vector<34x32xf32>
    %119 = arith.subf %113, %118 : vector<34x32xf32>
    %120 = arith.mulf %119, %119 : vector<34x32xf32>
    %cst_52 = arith.constant dense<0.000000e+00> : vector<34xf32>
    %121 = vector.multi_reduction <add>, %120, %cst_52 [1] : vector<34x32xf32> to vector<34xf32>
    %122 = vector.shape_cast %121 : vector<34xf32> to vector<34x1xf32>
    %cst_53 = arith.constant 3.200000e+01 : f32
    %123 = vector.broadcast %cst_53 : f32 to vector<34x1xf32>
    %124 = arith.divf %122, %123 : vector<34x1xf32>
    %125 = vector.broadcast %117 : vector<34x1xf32> to vector<34x32xf32>
    %126 = arith.subf %113, %125 : vector<34x32xf32>
    %cst_54 = arith.constant 9.99999974E-6 : f32
    %127 = vector.broadcast %cst_54 : f32 to vector<34x1xf32>
    %128 = arith.addf %124, %127 : vector<34x1xf32>
    %129 = math.rsqrt %128 : vector<34x1xf32>
    %130 = vector.broadcast %129 : vector<34x1xf32> to vector<34x32xf32>
    %131 = arith.mulf %126, %130 : vector<34x32xf32>
    %132 = vector.broadcast %21 : vector<1x32xf32> to vector<34x32xf32>
    %133 = arith.mulf %131, %132 : vector<34x32xf32>
    %134 = vector.broadcast %23 : vector<1x32xf32> to vector<34x32xf32>
    %135 = arith.addf %133, %134 : vector<34x32xf32>
    %136 = arith.truncf %135 : vector<34x32xf32> to vector<34x32xbf16>
    %cst_55 = arith.constant dense<0.000000e+00> : vector<34x64xf32>
    %137 = tpu.matmul %136, %11, %cst_55 {dimension_numbers = #tpu.dot_dimension_numbers<[1], [0], [0], [1], [0, 0, 1, 1], [], []>} : vector<34x32xbf16>, vector<32x64xbf16>, vector<34x64xf32> -> vector<34x64xf32>
    %138 = vector.broadcast %25 : vector<1x64xf32> to vector<34x64xf32>
    %139 = arith.addf %137, %138 : vector<34x64xf32>
    %cst_56 = arith.constant 5.000000e-01 : f32
    %140 = vector.broadcast %cst_56 : f32 to vector<34x64xf32>
    %141 = arith.mulf %140, %139 : vector<34x64xf32>
    %cst_57 = arith.constant 4.471500e-02 : f32
    %142 = vector.broadcast %cst_57 : f32 to vector<34x64xf32>
    %143 = arith.mulf %142, %139 : vector<34x64xf32>
    %144 = arith.mulf %143, %139 : vector<34x64xf32>
    %145 = arith.mulf %144, %139 : vector<34x64xf32>
    %146 = arith.addf %139, %145 : vector<34x64xf32>
    %cst_58 = arith.constant 0.797884583 : f32
    %147 = vector.broadcast %cst_58 : f32 to vector<34x64xf32>
    %148 = arith.mulf %147, %146 : vector<34x64xf32>
    %149 = math.tanh %148 : vector<34x64xf32>
    %cst_59 = arith.constant 1.000000e+00 : f32
    %150 = vector.broadcast %cst_59 : f32 to vector<34x64xf32>
    %151 = arith.addf %150, %149 : vector<34x64xf32>
    %152 = arith.mulf %141, %151 : vector<34x64xf32>
    %153 = arith.truncf %152 : vector<34x64xf32> to vector<34x64xbf16>
    "tpu.trace_start"() <{level = 10 : i32, message = "mk,dk->md"}> : () -> ()
    %cst_60 = arith.constant dense<0.000000e+00> : vector<34x32xf32>
    %154 = tpu.matmul %153, %13, %cst_60 {dimension_numbers = #tpu.dot_dimension_numbers<[1], [1], [0], [0], [0, 0, 1, 0], [], []>} : vector<34x64xbf16>, vector<32x64xbf16>, vector<34x32xf32> -> vector<34x32xf32>
    "tpu.trace_stop"() : () -> ()
    %155 = arith.addf %113, %154 : vector<34x32xf32>
    %156 = vector.broadcast %29 : vector<1x32xf32> to vector<34x32xf32>
    %157 = arith.addf %155, %156 : vector<34x32xf32>
    %c1_61 = arith.constant 1 : index
    %c0_62 = arith.constant 0 : index
    %c0_63 = arith.constant 0 : index
    %158 = vector.load %arg4[%c1_61, %c0_62, %c0_63] : memref<2x64x128xbf16, #tpu.memory_space<vmem>>, vector<1x32x96xbf16>
    %159 = vector.shape_cast %158 : vector<1x32x96xbf16> to vector<32x96xbf16>
    %c1_64 = arith.constant 1 : index
    %c0_65 = arith.constant 0 : index
    %c96_66 = arith.constant 96 : index
    %160 = vector.load %arg4[%c1_64, %c0_65, %c96_66] : memref<2x64x128xbf16, #tpu.memory_space<vmem>>, vector<1x32x32xbf16>
    %161 = vector.shape_cast %160 : vector<1x32x32xbf16> to vector<32x32xbf16>
    %c1_67 = arith.constant 1 : index
    %c32_68 = arith.constant 32 : index
    %c0_69 = arith.constant 0 : index
    %162 = vector.load %arg4[%c1_67, %c32_68, %c0_69] : memref<2x64x128xbf16, #tpu.memory_space<vmem>>, vector<1x32x64xbf16>
    %163 = vector.shape_cast %162 : vector<1x32x64xbf16> to vector<32x64xbf16>
    %c1_70 = arith.constant 1 : index
    %c32_71 = arith.constant 32 : index
    %c64_72 = arith.constant 64 : index
    %164 = vector.load %arg4[%c1_70, %c32_71, %c64_72] : memref<2x64x128xbf16, #tpu.memory_space<vmem>>, vector<1x32x64xbf16>
    %165 = vector.shape_cast %164 : vector<1x32x64xbf16> to vector<32x64xbf16>
    %c1_73 = arith.constant 1 : index
    %c0_74 = arith.constant 0 : index
    %c0_75 = arith.constant 0 : index
    %166 = vector.load %arg5[%c1_73, %c0_74, %c0_75] : memref<2x3x128xf32, #tpu.memory_space<vmem>>, vector<1x1x96xf32>
    %167 = vector.shape_cast %166 : vector<1x1x96xf32> to vector<1x96xf32>
    %c1_76 = arith.constant 1 : index
    %c1_77 = arith.constant 1 : index
    %c0_78 = arith.constant 0 : index
    %168 = vector.load %arg5[%c1_76, %c1_77, %c0_78] : memref<2x3x128xf32, #tpu.memory_space<vmem>>, vector<1x1x32xf32>
    %169 = vector.shape_cast %168 : vector<1x1x32xf32> to vector<1x32xf32>
    %c1_79 = arith.constant 1 : index
    %c1_80 = arith.constant 1 : index
    %c32_81 = arith.constant 32 : index
    %170 = vector.load %arg5[%c1_79, %c1_80, %c32_81] : memref<2x3x128xf32, #tpu.memory_space<vmem>>, vector<1x1x32xf32>
    %171 = vector.shape_cast %170 : vector<1x1x32xf32> to vector<1x32xf32>
    %c1_82 = arith.constant 1 : index
    %c1_83 = arith.constant 1 : index
    %c64_84 = arith.constant 64 : index
    %172 = vector.load %arg5[%c1_82, %c1_83, %c64_84] : memref<2x3x128xf32, #tpu.memory_space<vmem>>, vector<1x1x32xf32>
    %173 = vector.shape_cast %172 : vector<1x1x32xf32> to vector<1x32xf32>
    %c1_85 = arith.constant 1 : index
    %c1_86 = arith.constant 1 : index
    %c96_87 = arith.constant 96 : index
    %174 = vector.load %arg5[%c1_85, %c1_86, %c96_87] : memref<2x3x128xf32, #tpu.memory_space<vmem>>, vector<1x1x32xf32>
    %175 = vector.shape_cast %174 : vector<1x1x32xf32> to vector<1x32xf32>
    %c1_88 = arith.constant 1 : index
    %c2_89 = arith.constant 2 : index
    %c0_90 = arith.constant 0 : index
    %176 = vector.load %arg5[%c1_88, %c2_89, %c0_90] : memref<2x3x128xf32, #tpu.memory_space<vmem>>, vector<1x1x64xf32>
    %177 = vector.shape_cast %176 : vector<1x1x64xf32> to vector<1x64xf32>
    %c1_91 = arith.constant 1 : index
    %c2_92 = arith.constant 2 : index
    %c64_93 = arith.constant 64 : index
    %178 = vector.load %arg5[%c1_91, %c2_92, %c64_93] : memref<2x3x128xf32, #tpu.memory_space<vmem>>, vector<1x1x32xf32>
    %179 = vector.shape_cast %178 : vector<1x1x32xf32> to vector<1x32xf32>
    %c1_94 = arith.constant 1 : index
    %c2_95 = arith.constant 2 : index
    %c96_96 = arith.constant 96 : index
    %180 = vector.load %arg5[%c1_94, %c2_95, %c96_96] : memref<2x3x128xf32, #tpu.memory_space<vmem>>, vector<1x1x32xf32>
    %181 = vector.shape_cast %180 : vector<1x1x32xf32> to vector<1x32xf32>
    %cst_97 = arith.constant dense<0.000000e+00> : vector<34xf32>
    %182 = vector.multi_reduction <add>, %157, %cst_97 [1] : vector<34x32xf32> to vector<34xf32>
    %183 = vector.shape_cast %182 : vector<34xf32> to vector<34x1xf32>
    %cst_98 = arith.constant 3.200000e+01 : f32
    %184 = vector.broadcast %cst_98 : f32 to vector<34x1xf32>
    %185 = arith.divf %183, %184 : vector<34x1xf32>
    %186 = vector.broadcast %185 : vector<34x1xf32> to vector<34x32xf32>
    %187 = arith.subf %157, %186 : vector<34x32xf32>
    %188 = arith.mulf %187, %187 : vector<34x32xf32>
    %cst_99 = arith.constant dense<0.000000e+00> : vector<34xf32>
    %189 = vector.multi_reduction <add>, %188, %cst_99 [1] : vector<34x32xf32> to vector<34xf32>
    %190 = vector.shape_cast %189 : vector<34xf32> to vector<34x1xf32>
    %cst_100 = arith.constant 3.200000e+01 : f32
    %191 = vector.broadcast %cst_100 : f32 to vector<34x1xf32>
    %192 = arith.divf %190, %191 : vector<34x1xf32>
    %193 = vector.broadcast %185 : vector<34x1xf32> to vector<34x32xf32>
    %194 = arith.subf %157, %193 : vector<34x32xf32>
    %cst_101 = arith.constant 9.99999974E-6 : f32
    %195 = vector.broadcast %cst_101 : f32 to vector<34x1xf32>
    %196 = arith.addf %192, %195 : vector<34x1xf32>
    %197 = math.rsqrt %196 : vector<34x1xf32>
    %198 = vector.broadcast %197 : vector<34x1xf32> to vector<34x32xf32>
    %199 = arith.mulf %194, %198 : vector<34x32xf32>
    %200 = vector.broadcast %169 : vector<1x32xf32> to vector<34x32xf32>
    %201 = arith.mulf %199, %200 : vector<34x32xf32>
    %202 = vector.broadcast %171 : vector<1x32xf32> to vector<34x32xf32>
    %203 = arith.addf %201, %202 : vector<34x32xf32>
    %204 = arith.truncf %203 : vector<34x32xf32> to vector<34x32xbf16>
    %cst_102 = arith.constant dense<0.000000e+00> : vector<34x96xf32>
    %205 = tpu.matmul %204, %159, %cst_102 {dimension_numbers = #tpu.dot_dimension_numbers<[1], [0], [0], [1], [0, 0, 1, 1], [], []>} : vector<34x32xbf16>, vector<32x96xbf16>, vector<34x96xf32> -> vector<34x96xf32>
    %206 = vector.broadcast %167 : vector<1x96xf32> to vector<34x96xf32>
    %207 = arith.addf %205, %206 : vector<34x96xf32>
    %208 = vector.extract_strided_slice %207 {offsets = [0, 0], sizes = [34, 8], strides = [1, 1]} : vector<34x96xf32> to vector<34x8xf32>
    %209 = vector.extract_strided_slice %207 {offsets = [0, 8], sizes = [34, 8], strides = [1, 1]} : vector<34x96xf32> to vector<34x8xf32>
    %210 = vector.extract_strided_slice %207 {offsets = [0, 16], sizes = [34, 8], strides = [1, 1]} : vector<34x96xf32> to vector<34x8xf32>
    %211 = vector.extract_strided_slice %207 {offsets = [0, 24], sizes = [34, 8], strides = [1, 1]} : vector<34x96xf32> to vector<34x8xf32>
    %212 = vector.shape_cast %208 : vector<34x8xf32> to vector<1x34x8xf32>
    %213 = vector.shape_cast %209 : vector<34x8xf32> to vector<1x34x8xf32>
    %214 = vector.shape_cast %210 : vector<34x8xf32> to vector<1x34x8xf32>
    %215 = vector.shape_cast %211 : vector<34x8xf32> to vector<1x34x8xf32>
    %216 = tpu.concatenate %212, %213, %214, %215 in 0 : vector<1x34x8xf32>, vector<1x34x8xf32>, vector<1x34x8xf32>, vector<1x34x8xf32> -> vector<4x34x8xf32>
    %217 = vector.extract_strided_slice %207 {offsets = [0, 32], sizes = [34, 8], strides = [1, 1]} : vector<34x96xf32> to vector<34x8xf32>
    %218 = vector.extract_strided_slice %207 {offsets = [0, 40], sizes = [34, 8], strides = [1, 1]} : vector<34x96xf32> to vector<34x8xf32>
    %219 = vector.extract_strided_slice %207 {offsets = [0, 48], sizes = [34, 8], strides = [1, 1]} : vector<34x96xf32> to vector<34x8xf32>
    %220 = vector.extract_strided_slice %207 {offsets = [0, 56], sizes = [34, 8], strides = [1, 1]} : vector<34x96xf32> to vector<34x8xf32>
    %221 = vector.shape_cast %217 : vector<34x8xf32> to vector<1x34x8xf32>
    %222 = vector.shape_cast %218 : vector<34x8xf32> to vector<1x34x8xf32>
    %223 = vector.shape_cast %219 : vector<34x8xf32> to vector<1x34x8xf32>
    %224 = vector.shape_cast %220 : vector<34x8xf32> to vector<1x34x8xf32>
    %225 = tpu.concatenate %221, %222, %223, %224 in 0 : vector<1x34x8xf32>, vector<1x34x8xf32>, vector<1x34x8xf32>, vector<1x34x8xf32> -> vector<4x34x8xf32>
    %226 = vector.extract_strided_slice %207 {offsets = [0, 64], sizes = [34, 8], strides = [1, 1]} : vector<34x96xf32> to vector<34x8xf32>
    %227 = vector.extract_strided_slice %207 {offsets = [0, 72], sizes = [34, 8], strides = [1, 1]} : vector<34x96xf32> to vector<34x8xf32>
    %228 = vector.extract_strided_slice %207 {offsets = [0, 80], sizes = [34, 8], strides = [1, 1]} : vector<34x96xf32> to vector<34x8xf32>
    %229 = vector.extract_strided_slice %207 {offsets = [0, 88], sizes = [34, 8], strides = [1, 1]} : vector<34x96xf32> to vector<34x8xf32>
    %230 = vector.shape_cast %226 : vector<34x8xf32> to vector<1x34x8xf32>
    %231 = vector.shape_cast %227 : vector<34x8xf32> to vector<1x34x8xf32>
    %232 = vector.shape_cast %228 : vector<34x8xf32> to vector<1x34x8xf32>
    %233 = vector.shape_cast %229 : vector<34x8xf32> to vector<1x34x8xf32>
    %234 = tpu.concatenate %230, %231, %232, %233 in 0 : vector<1x34x8xf32>, vector<1x34x8xf32>, vector<1x34x8xf32>, vector<1x34x8xf32> -> vector<4x34x8xf32>
    "tpu.trace_start"() <{level = 10 : i32, message = "hqd,hkd->hqk"}> : () -> ()
    %cst_103 = arith.constant dense<0.000000e+00> : vector<4x34x34xf32>
    %235 = tpu.matmul %216, %225, %cst_103 {dimension_numbers = #tpu.dot_dimension_numbers<[2], [2], [1], [1], [0, 0, 0, 1, 1, 1], [0], [0]>} : vector<4x34x8xf32>, vector<4x34x8xf32>, vector<4x34x34xf32> -> vector<4x34x34xf32>
    "tpu.trace_stop"() : () -> ()
    %cst_104 = arith.constant 0.353553385 : f32
    %236 = vector.broadcast %cst_104 : f32 to vector<4x34x34xf32>
    %237 = arith.mulf %235, %236 : vector<4x34x34xf32>
    %238 = vector.shape_cast %5 : vector<34x34xf32> to vector<1x34x34xf32>
    %239 = vector.broadcast %238 : vector<1x34x34xf32> to vector<4x34x34xf32>
    %240 = arith.addf %237, %239 : vector<4x34x34xf32>
    %cst_105 = arith.constant dense<0xFF800000> : vector<4x34xf32>
    %241 = vector.multi_reduction <maximumf>, %240, %cst_105 [2] : vector<4x34x34xf32> to vector<4x34xf32>
    %242 = vector.shape_cast %241 : vector<4x34xf32> to vector<4x34x1xf32>
    %243 = vector.broadcast %242 : vector<4x34x1xf32> to vector<4x34x34xf32>
    %244 = arith.subf %240, %243 : vector<4x34x34xf32>
    %245 = math.exp %244 : vector<4x34x34xf32>
    %cst_106 = arith.constant dense<0.000000e+00> : vector<4x34xf32>
    %246 = vector.multi_reduction <add>, %245, %cst_106 [2] : vector<4x34x34xf32> to vector<4x34xf32>
    %247 = vector.shape_cast %246 : vector<4x34xf32> to vector<4x34x1xf32>
    %248 = tpu.reciprocal %247 : vector<4x34x1xf32> -> vector<4x34x1xf32>
    %249 = vector.broadcast %248 : vector<4x34x1xf32> to vector<4x34x34xf32>
    %250 = arith.mulf %245, %249 : vector<4x34x34xf32>
    "tpu.trace_start"() <{level = 10 : i32, message = "hqk,hkd->hqd"}> : () -> ()
    %cst_107 = arith.constant dense<0.000000e+00> : vector<4x34x8xf32>
    %251 = tpu.matmul %250, %234, %cst_107 {dimension_numbers = #tpu.dot_dimension_numbers<[2], [1], [1], [2], [0, 0, 0, 1, 1, 2], [0], [0]>} : vector<4x34x34xf32>, vector<4x34x8xf32>, vector<4x34x8xf32> -> vector<4x34x8xf32>
    "tpu.trace_stop"() : () -> ()
    %252 = vector.extract_strided_slice %251 {offsets = [0, 0, 0], sizes = [1, 34, 8], strides = [1, 1, 1]} : vector<4x34x8xf32> to vector<1x34x8xf32>
    %253 = vector.shape_cast %252 : vector<1x34x8xf32> to vector<34x8xf32>
    %254 = vector.extract_strided_slice %251 {offsets = [1, 0, 0], sizes = [1, 34, 8], strides = [1, 1, 1]} : vector<4x34x8xf32> to vector<1x34x8xf32>
    %255 = vector.shape_cast %254 : vector<1x34x8xf32> to vector<34x8xf32>
    %256 = vector.extract_strided_slice %251 {offsets = [2, 0, 0], sizes = [1, 34, 8], strides = [1, 1, 1]} : vector<4x34x8xf32> to vector<1x34x8xf32>
    %257 = vector.shape_cast %256 : vector<1x34x8xf32> to vector<34x8xf32>
    %258 = vector.extract_strided_slice %251 {offsets = [3, 0, 0], sizes = [1, 34, 8], strides = [1, 1, 1]} : vector<4x34x8xf32> to vector<1x34x8xf32>
    %259 = vector.shape_cast %258 : vector<1x34x8xf32> to vector<34x8xf32>
    %260 = tpu.concatenate %253, %255, %257, %259 in 1 : vector<34x8xf32>, vector<34x8xf32>, vector<34x8xf32>, vector<34x8xf32> -> vector<34x32xf32>
    %261 = arith.truncf %260 : vector<34x32xf32> to vector<34x32xbf16>
    %cst_108 = arith.constant dense<0.000000e+00> : vector<34x32xf32>
    %262 = tpu.matmul %261, %161, %cst_108 {dimension_numbers = #tpu.dot_dimension_numbers<[1], [0], [0], [1], [0, 0, 1, 1], [], []>} : vector<34x32xbf16>, vector<32x32xbf16>, vector<34x32xf32> -> vector<34x32xf32>
    %263 = arith.addf %157, %262 : vector<34x32xf32>
    %264 = vector.broadcast %179 : vector<1x32xf32> to vector<34x32xf32>
    %265 = arith.addf %263, %264 : vector<34x32xf32>
    %cst_109 = arith.constant dense<0.000000e+00> : vector<34xf32>
    %266 = vector.multi_reduction <add>, %265, %cst_109 [1] : vector<34x32xf32> to vector<34xf32>
    %267 = vector.shape_cast %266 : vector<34xf32> to vector<34x1xf32>
    %cst_110 = arith.constant 3.200000e+01 : f32
    %268 = vector.broadcast %cst_110 : f32 to vector<34x1xf32>
    %269 = arith.divf %267, %268 : vector<34x1xf32>
    %270 = vector.broadcast %269 : vector<34x1xf32> to vector<34x32xf32>
    %271 = arith.subf %265, %270 : vector<34x32xf32>
    %272 = arith.mulf %271, %271 : vector<34x32xf32>
    %cst_111 = arith.constant dense<0.000000e+00> : vector<34xf32>
    %273 = vector.multi_reduction <add>, %272, %cst_111 [1] : vector<34x32xf32> to vector<34xf32>
    %274 = vector.shape_cast %273 : vector<34xf32> to vector<34x1xf32>
    %cst_112 = arith.constant 3.200000e+01 : f32
    %275 = vector.broadcast %cst_112 : f32 to vector<34x1xf32>
    %276 = arith.divf %274, %275 : vector<34x1xf32>
    %277 = vector.broadcast %269 : vector<34x1xf32> to vector<34x32xf32>
    %278 = arith.subf %265, %277 : vector<34x32xf32>
    %cst_113 = arith.constant 9.99999974E-6 : f32
    %279 = vector.broadcast %cst_113 : f32 to vector<34x1xf32>
    %280 = arith.addf %276, %279 : vector<34x1xf32>
    %281 = math.rsqrt %280 : vector<34x1xf32>
    %282 = vector.broadcast %281 : vector<34x1xf32> to vector<34x32xf32>
    %283 = arith.mulf %278, %282 : vector<34x32xf32>
    %284 = vector.broadcast %173 : vector<1x32xf32> to vector<34x32xf32>
    %285 = arith.mulf %283, %284 : vector<34x32xf32>
    %286 = vector.broadcast %175 : vector<1x32xf32> to vector<34x32xf32>
    %287 = arith.addf %285, %286 : vector<34x32xf32>
    %288 = arith.truncf %287 : vector<34x32xf32> to vector<34x32xbf16>
    %cst_114 = arith.constant dense<0.000000e+00> : vector<34x64xf32>
    %289 = tpu.matmul %288, %163, %cst_114 {dimension_numbers = #tpu.dot_dimension_numbers<[1], [0], [0], [1], [0, 0, 1, 1], [], []>} : vector<34x32xbf16>, vector<32x64xbf16>, vector<34x64xf32> -> vector<34x64xf32>
    %290 = vector.broadcast %177 : vector<1x64xf32> to vector<34x64xf32>
    %291 = arith.addf %289, %290 : vector<34x64xf32>
    %cst_115 = arith.constant 5.000000e-01 : f32
    %292 = vector.broadcast %cst_115 : f32 to vector<34x64xf32>
    %293 = arith.mulf %292, %291 : vector<34x64xf32>
    %cst_116 = arith.constant 4.471500e-02 : f32
    %294 = vector.broadcast %cst_116 : f32 to vector<34x64xf32>
    %295 = arith.mulf %294, %291 : vector<34x64xf32>
    %296 = arith.mulf %295, %291 : vector<34x64xf32>
    %297 = arith.mulf %296, %291 : vector<34x64xf32>
    %298 = arith.addf %291, %297 : vector<34x64xf32>
    %cst_117 = arith.constant 0.797884583 : f32
    %299 = vector.broadcast %cst_117 : f32 to vector<34x64xf32>
    %300 = arith.mulf %299, %298 : vector<34x64xf32>
    %301 = math.tanh %300 : vector<34x64xf32>
    %cst_118 = arith.constant 1.000000e+00 : f32
    %302 = vector.broadcast %cst_118 : f32 to vector<34x64xf32>
    %303 = arith.addf %302, %301 : vector<34x64xf32>
    %304 = arith.mulf %293, %303 : vector<34x64xf32>
    %305 = arith.truncf %304 : vector<34x64xf32> to vector<34x64xbf16>
    "tpu.trace_start"() <{level = 10 : i32, message = "mk,dk->md"}> : () -> ()
    %cst_119 = arith.constant dense<0.000000e+00> : vector<34x32xf32>
    %306 = tpu.matmul %305, %165, %cst_119 {dimension_numbers = #tpu.dot_dimension_numbers<[1], [1], [0], [0], [0, 0, 1, 0], [], []>} : vector<34x64xbf16>, vector<32x64xbf16>, vector<34x32xf32> -> vector<34x32xf32>
    "tpu.trace_stop"() : () -> ()
    %307 = arith.addf %265, %306 : vector<34x32xf32>
    %308 = vector.broadcast %181 : vector<1x32xf32> to vector<34x32xf32>
    %309 = arith.addf %307, %308 : vector<34x32xf32>
    %c0_120 = arith.constant 0 : index
    %c0_121 = arith.constant 0 : index
    %310 = vector.load %arg6[%c0_120, %c0_121] : memref<40x128xf32, #tpu.memory_space<vmem>>, vector<1x32xf32>
    %c1_122 = arith.constant 1 : index
    %c0_123 = arith.constant 0 : index
    %311 = vector.load %arg6[%c1_122, %c0_123] : memref<40x128xf32, #tpu.memory_space<vmem>>, vector<1x32xf32>
    %cst_124 = arith.constant dense<0.000000e+00> : vector<34xf32>
    %312 = vector.multi_reduction <add>, %309, %cst_124 [1] : vector<34x32xf32> to vector<34xf32>
    %313 = vector.shape_cast %312 : vector<34xf32> to vector<34x1xf32>
    %cst_125 = arith.constant 3.200000e+01 : f32
    %314 = vector.broadcast %cst_125 : f32 to vector<34x1xf32>
    %315 = arith.divf %313, %314 : vector<34x1xf32>
    %316 = vector.broadcast %315 : vector<34x1xf32> to vector<34x32xf32>
    %317 = arith.subf %309, %316 : vector<34x32xf32>
    %318 = arith.mulf %317, %317 : vector<34x32xf32>
    %cst_126 = arith.constant dense<0.000000e+00> : vector<34xf32>
    %319 = vector.multi_reduction <add>, %318, %cst_126 [1] : vector<34x32xf32> to vector<34xf32>
    %320 = vector.shape_cast %319 : vector<34xf32> to vector<34x1xf32>
    %cst_127 = arith.constant 3.200000e+01 : f32
    %321 = vector.broadcast %cst_127 : f32 to vector<34x1xf32>
    %322 = arith.divf %320, %321 : vector<34x1xf32>
    %323 = vector.broadcast %315 : vector<34x1xf32> to vector<34x32xf32>
    %324 = arith.subf %309, %323 : vector<34x32xf32>
    %cst_128 = arith.constant 9.99999974E-6 : f32
    %325 = vector.broadcast %cst_128 : f32 to vector<34x1xf32>
    %326 = arith.addf %322, %325 : vector<34x1xf32>
    %327 = math.rsqrt %326 : vector<34x1xf32>
    %328 = vector.broadcast %327 : vector<34x1xf32> to vector<34x32xf32>
    %329 = arith.mulf %324, %328 : vector<34x32xf32>
    %330 = vector.broadcast %310 : vector<1x32xf32> to vector<34x32xf32>
    %331 = arith.mulf %329, %330 : vector<34x32xf32>
    %332 = vector.broadcast %311 : vector<1x32xf32> to vector<34x32xf32>
    %333 = arith.addf %331, %332 : vector<34x32xf32>
    %334 = tpu.iota {dimensions = array<i32: 0>} : vector<8x34xi32>
    %335 = tpu.iota {dimensions = array<i32: 1>} : vector<8x34xi32>
    %c17_i32 = arith.constant 17 : i32
    %336 = vector.broadcast %c17_i32 : i32 to vector<8x34xi32>
    %337 = arith.muli %334, %336 : vector<8x34xi32>
    %338 = arith.cmpi eq, %335, %337 : vector<8x34xi32>
    %339 = arith.extui %338 : vector<8x34xi1> to vector<8x34xi32>
    %340 = arith.sitofp %339 : vector<8x34xi32> to vector<8x34xf32>
    %cst_129 = arith.constant dense<0.000000e+00> : vector<8x32xf32>
    %341 = tpu.matmul %340, %333, %cst_129 {dimension_numbers = #tpu.dot_dimension_numbers<[1], [0], [0], [1], [0, 0, 1, 1], [], []>} : vector<8x34xf32>, vector<34x32xf32>, vector<8x32xf32> -> vector<8x32xf32>
    %c8 = arith.constant 8 : index
    %c0_130 = arith.constant 0 : index
    %342 = vector.load %arg6[%c8, %c0_130] : memref<40x128xf32, #tpu.memory_space<vmem>>, vector<32x128xf32>
    %c2_131 = arith.constant 2 : index
    %c0_132 = arith.constant 0 : index
    %343 = vector.load %arg6[%c2_131, %c0_132] : memref<40x128xf32, #tpu.memory_space<vmem>>, vector<1x128xf32>
    %cst_133 = arith.constant dense<0.000000e+00> : vector<8x128xf32>
    %344 = tpu.matmul %341, %342, %cst_133 {dimension_numbers = #tpu.dot_dimension_numbers<[1], [0], [0], [1], [0, 0, 1, 1], [], []>} : vector<8x32xf32>, vector<32x128xf32>, vector<8x128xf32> -> vector<8x128xf32>
    %345 = vector.broadcast %343 : vector<1x128xf32> to vector<8x128xf32>
    %346 = arith.addf %344, %345 : vector<8x128xf32>
    %c0_134 = arith.constant 0 : index
    %c0_135 = arith.constant 0 : index
    %347 = vector.load %arg7[%c0_134, %c0_135] : memref<8x128xf32, #tpu.memory_space<vmem>>, vector<8x128xf32>
    tpu.vector_store %arg7[%c0_134, %c0_135], %346 {strides = array<i32>} : memref<8x128xf32, #tpu.memory_space<vmem>>, vector<8x128xf32>,
    return
  }
}

</mosaic_0001>

<llo_original>
// kernel: tpu_custom_call.1
$region0: #{tpu_custom_call.1}
  #allocation0 [shape = 'u32[]', space=smem, size = 0x4, offset = 0x4, fixed_abs, tag = 'smem constant byte address 0x4 - core index']
  #allocation1 [shape = 'u32[72,128]{1,0:T(1,128)}', space=vmem, size = 0x9000, scoped, tag = 'internal scratch']
  %s0 = inlined_call_operand.hbm [shape: f32[8,128], index: 0, kind: input, shape index: {}]
  %s1 = inlined_call_operand.hbm [shape: f32[8,128], index: 1, kind: output, shape index: {}]
  %s2 = sld [smem:[#allocation0]]
  $region18: #{tpu_custom_call.1} parent=0
    _
  %s4 = ssub.s32 1, %s2
  %s5 = scalar_select 0, %s4, %s2
  $region1: #{tpu_custom_call.1} parent=0
    #allocation2 [shape = 'u8[4096]{0}', space=vmem, size = 0x1000, scoped, tag = 'input window, operand 0, single buffered']
    #allocation3 [shape = 's32[1]{0}', space=sflag, size = 0x4, scoped, tag = 'scoped memory for tpu_custom_call.1']
    #allocation4 [shape = 's32[1]{0}', space=sflag, size = 0x4, scoped, tag = 'scoped memory for tpu_custom_call.1']
    #allocation5 [shape = 'u8[4096]{0}', space=vmem, size = 0x1000, scoped, tag = 'output window, operand 0, single buffered']
    %6 = vsyncpa [#allocation3], 0
    %7 = vsyncpa [#allocation4], 0
    // Predicated region
    $region2: #{tpu_custom_call.1} parent=1 // pred_check
      _
    $region3: #{tpu_custom_call.1} parent=1 // pred_check_branch
      %9 = sbr.rel (0) target = $region5
    $region4: #{tpu_custom_call.1} parent=1 // pred_region
      %11 = vsyncadd [#allocation3], 0
      %s13 = sshll.u32 %s0, 4
      %s14 = int_to_ptr.hbm [resolvable:$true] %s13
      %s15 = sshll.u32 [#allocation2], 4
      %s16 = int_to_ptr.vmem [resolvable:$true] %s15
      %18 = dma.hbm_to_vmem [thread:$0]  %s14, 128, %s16, [#allocation3]
    $region5: #{tpu_custom_call.1} parent=1 // pred_fallthru
      _
    // Predicated region
    $region6: #{tpu_custom_call.1} parent=1 // pred_check
      _
    $region7: #{tpu_custom_call.1} parent=1 // pred_check_branch
      %20 = sbr.rel (0) target = $region9
    $region8: #{tpu_custom_call.1} parent=1 // pred_region
      %22 = dma.done [#allocation3], 128
    $region9: #{tpu_custom_call.1} parent=1 // pred_fallthru
      _
    %v23 = vld [vmem:[#allocation2] sm:$0xff]
    %v24 = vmul.f32 %v23, 0.5
    %v25 = vmul.f32 %v23, 0.70710677
    %v26 = vmul.f32 %v25, %v25
    %v27 = vmin.f32 16.0, %v26
    %v28 = vmul.f32 %v27, 2.1237322e-06
    %v29 = vadd.f32 %v28, 0.00028619796
    %v30 = vmul.f32 %v27, %v29
    %v31 = vadd.f32 %v30, 0.0036580483
    %v32 = vmul.f32 %v27, %v31
    %v33 = vadd.f32 %v32, 0.05243302
    %v34 = vmul.f32 %v27, %v33
    %v35 = vadd.f32 %v34, 0.18741608
    %v36 = vmul.f32 %v27, %v35
    %v37 = vadd.f32 %v36, 1.1283791
    %v38 = vmul.f32 %v25, %v37
    %v39 = vmul.f32 %v27, 3.8918573e-05
    %v40 = vadd.f32 %v39, 0.001143296
    %v41 = vmul.f32 %v27, %v40
    %v42 = vadd.f32 %v41, 0.014752088
    %v43 = vmul.f32 %v27, %v42
    %v44 = vadd.f32 %v43, 0.112945676
    %v45 = vmul.f32 %v27, %v44
    %v46 = vadd.f32 %v45, 0.4994258
    %v47 = vmul.f32 %v27, %v46
    %v48 = vadd.f32 %v47, 1.0
    %v49 = vrcp.pop %v48
    %v50 = vmul.f32 %v48, %v49
    %v51 = vsub.f32 1.0, %v50
    %v52 = vmul.f32 %v49, %v51
    %v53 = vadd.f32 %v49, %v52
    %vm54 = vweird.f32 %v48
    %vm55 = vweird.f32 %v49
    %vm56 = vmor %vm54, %vm55
    %v57 = vsel %vm56, %v49, %v53
    %v58 = vand.u32 2147483647, %v48
    %vm59 = vcmp.eq.f32.partialorder %v58, 8.507059e+37
    %v60 = vand.u32 %v48, 2147483648
    %v61 = vor.u32 1.1754944e-38, %v60
    %v62 = vsel %vm59, %v61, %v57
    %v63 = vmul.f32 %v38, %v62
    %v64 = vmin.f32 %v63, 1.0
    %v65 = vmax.f32 %v64, -1.0
    %v66 = vadd.f32 %v65, 1.0
    %v67 = vmul.f32 %v24, %v66
    %68 = vst [vmem:[#allocation5] sm:$0xff] %v67
    // Predicated region
    $region10: #{tpu_custom_call.1} parent=1 // pred_check
      _
    $region11: #{tpu_custom_call.1} parent=1 // pred_check_branch
      %70 = sbr.rel (0) target = $region13
    $region12: #{tpu_custom_call.1} parent=1 // pred_region
      %72 = vsyncadd [#allocation4], 0
      %s74 = sshll.u32 [#allocation5], 4
      %s75 = int_to_ptr.vmem [resolvable:$true] %s74
      %s76 = sshll.u32 %s1, 4
      %s77 = int_to_ptr.hbm [resolvable:$true] %s76
      %79 = dma.vmem_to_hbm [thread:$0]  %s75, 128, %s77, [#allocation4]
    $region13: #{tpu_custom_call.1} parent=1 // pred_fallthru
      _
    // Predicated region
    $region14: #{tpu_custom_call.1} parent=1 // pred_check
      _
    $region15: #{tpu_custom_call.1} parent=1 // pred_check_branch
      %81 = sbr.rel (0) target = $region17
    $region16: #{tpu_custom_call.1} parent=1 // pred_region
      %83 = dma.done [#allocation4], 128
    $region17: #{tpu_custom_call.1} parent=1 // pred_fallthru
      _
    %84 = vsyncpa [#allocation3], 1
    %85 = vsyncpa [#allocation4], 1

// kernel: forward.1
$region0: #{forward.1}
  #allocation0 [shape = 'u32[]', space=smem, size = 0x4, offset = 0x4, fixed_abs, tag = 'smem constant byte address 0x4 - core index']
  #allocation1 [shape = 'u32[72,128]{1,0:T(1,128)}', space=vmem, size = 0x9000, scoped, tag = 'internal scratch']
  %s0 = inlined_call_operand.vmem [shape: bf16[34,48], index: 0, kind: input, shape index: {}]
  %s1 = inlined_call_operand.vmem [shape: f32[34,32], index: 1, kind: input, shape index: {}]
  %s2 = inlined_call_operand.vmem [shape: f32[34,34], index: 2, kind: input, shape index: {}]
  %s3 = inlined_call_operand.vmem [shape: bf16[48,32], index: 3, kind: input, shape index: {}]
  %s4 = inlined_call_operand.vmem [shape: bf16[2,64,128], index: 4, kind: input, shape index: {}]
  %s5 = inlined_call_operand.vmem [shape: f32[2,3,128], index: 5, kind: input, shape index: {}]
  %s6 = inlined_call_operand.vmem [shape: f32[40,128], index: 6, kind: input, shape index: {}]
  %s7 = inlined_call_operand.vmem [shape: f32[8,128], index: 7, kind: output, shape index: {}]
  %s8 = sld [smem:[#allocation0]]
  $region38: #{forward.1} parent=0
    _
  %s10 = ssub.s32 1, %s8
  %s11 = scalar_select 0, %s10, %s8
  // Predicated region
  $region2: #{forward.1} parent=0 // pred_check
    _
  $region3: #{forward.1} parent=0 // pred_check_branch
    %13 = sbr.rel (0) target = $region5
  $region4: #{forward.1} parent=0 // pred_region
    _
  $region5: #{forward.1} parent=0 // pred_fallthru
    _
  // Predicated region
  $region6: #{forward.1} parent=0 // pred_check
    _
  $region7: #{forward.1} parent=0 // pred_check_branch
    %15 = sbr.rel (0) target = $region9
  $region8: #{forward.1} parent=0 // pred_region
    _
  $region9: #{forward.1} parent=0 // pred_fallthru
    _
  // Predicated region
  $region10: #{forward.1} parent=0 // pred_check
    _
  $region11: #{forward.1} parent=0 // pred_check_branch
    %17 = sbr.rel (0) target = $region13
  $region12: #{forward.1} parent=0 // pred_region
    _
  $region13: #{forward.1} parent=0 // pred_fallthru
    _
  // Predicated region
  $region14: #{forward.1} parent=0 // pred_check
    _
  $region15: #{forward.1} parent=0 // pred_check_branch
    %19 = sbr.rel (0) target = $region17
  $region16: #{forward.1} parent=0 // pred_region
    _
  $region17: #{forward.1} parent=0 // pred_fallthru
    _
  // Predicated region
  $region18: #{forward.1} parent=0 // pred_check
    _
  $region19: #{forward.1} parent=0 // pred_check_branch
    %21 = sbr.rel (0) target = $region21
  $region20: #{forward.1} parent=0 // pred_region
    _
  $region21: #{forward.1} parent=0 // pred_fallthru
    _
  // Predicated region
  $region22: #{forward.1} parent=0 // pred_check
    _
  $region23: #{forward.1} parent=0 // pred_check_branch
    %23 = sbr.rel (0) target = $region25
  $region24: #{forward.1} parent=0 // pred_region
    _
  $region25: #{forward.1} parent=0 // pred_fallthru
    _
  // Predicated region
  $region26: #{forward.1} parent=0 // pred_check
    _
  $region27: #{forward.1} parent=0 // pred_check_branch
    %25 = sbr.rel (0) target = $region29
  $region28: #{forward.1} parent=0 // pred_region
    _
  $region29: #{forward.1} parent=0 // pred_fallthru
    _
  %v27 = vld [vmem:[%s0] sm:$0xf]
  %v28 = vld [vmem:[%s0 + $0x4] sm:$0xf]
  %v29 = vld [vmem:[%s0 + $0x8] sm:$0xf]
  %v30 = vld [vmem:[%s0 + $0xc] sm:$0xf]
  %v31 = vld [vmem:[%s0 + $0x10] sm:$0x1]
  %v32 = vld [vmem:[%s3] sm:$0xf]
  %v33 = vld [vmem:[%s3 + $0x4] sm:$0xf]
  %v34 = vld [vmem:[%s3 + $0x8] sm:$0xf]
  %v35 = vld [vmem:[%s3 + $0xc] sm:$0xf]
  %v36 = vld [vmem:[%s3 + $0x10] sm:$0xf]
  %v37 = vld [vmem:[%s3 + $0x14] sm:$0xf]
  %v38 = vld [vmem:[%s1] sm:$0xff]
  %v39 = vld [vmem:[%s1 + $0x8] sm:$0xff]
  %v40 = vld [vmem:[%s1 + $0x10] sm:$0xff]
  %v41 = vld [vmem:[%s1 + $0x18] sm:$0xff]
  %v42 = vld [vmem:[%s1 + $0x20] sm:$0x3]
  %v48 = vunpack.c.l.b16 %v27
  %v49 = vunpack.c.l.b16 %v28
  %v50 = vunpack.c.l.b16 %v29
  %v51 = vunpack.c.l.b16 %v30
  %v52 = vunpack.c.l.b16 %v31
  %v53 = vpack.c.b16 %v49, %v48
  %v54 = vpack.c.b16 %v51, %v50
  %v55 = vpack.c.b16 %v52, %v52
  %v62 = vunpack.c.l.b16 %v32
  %v63 = vunpack.c.l.b16 %v33
  %v64 = vunpack.c.l.b16 %v34
  %v65 = vunpack.c.l.b16 %v35
  %v66 = vunpack.c.l.b16 %v36
  %v67 = vunpack.c.l.b16 %v37
  %v68 = vpack.c.b16 %v63, %v62
  %v69 = vpack.c.b16 %v65, %v64
  %v70 = vpack.c.b16 %v67, %v66
  %vm74 = vcmask 392192
  %v76 = vsel %vm74, %v53, 0
  %v79 = vsel %vm74, %v54, 0
  %v82 = vsel %vm74, %v55, 0
  %84 = vmatpush.bf16.msra.mxu0 0
  %85 = vmatpush.bf16.msra.mxu0 0
  %86 = vmatpush.bf16.msra.mxu0 0
  %87 = vmatpush.bf16.msra.mxu0 0
  %88 = vmatpush.bf16.msra.mxu0 0
  %89 = vmatpush.bf16.msra.mxu0 %v70
  %90 = vmatpush.bf16.msra.mxu0 %v69
  %91 = vmatpush.bf16.msra.mxu0 %v68
  %92 = vmatmul.bf16.gmra.mxu0 %v76
  %v93 = vpop.f32.mrf.mxu0
  %v94 = vadd.f32 %v38, %v93
  %v95 = vpop.f32.mrf.mxu0
  %v96 = vadd.f32 %v39, %v95
  %97 = vmatmul.bf16.gmra.mxu0 %v79
  %v98 = vpop.f32.mrf.mxu0
  %v99 = vadd.f32 %v40, %v98
  %v100 = vpop.f32.mrf.mxu0
  %v101 = vadd.f32 %v41, %v100
  %102 = vmatmul.bf16.gmra.mxu0 %v82
  %v103 = vpop.f32.mrf.mxu0
  %v104 = vadd.f32 %v42, %v103
  %v105 = vpop.f32.mrf.mxu0
  %106 = vdwg.mxu0
  %v107 = vld [vmem:[%s2] sm:$0xff]
  %v108 = vld [vmem:[%s2 + $0x8] sm:$0xff]
  %v109 = vld [vmem:[%s2 + $0x10] sm:$0xff]
  %v110 = vld [vmem:[%s2 + $0x18] sm:$0xff]
  %v111 = vld [vmem:[%s2 + $0x20] sm:$0x3]
  %v112 = vld [vmem:[%s4] sm:$0xf]
  %v113 = vld [vmem:[%s4 + $0x4] sm:$0xf]
  %v114 = vld [vmem:[%s4 + $0x8] sm:$0xf]
  %v115 = vld [vmem:[%s4 + $0xc] sm:$0xf]
  %v116 = vld [vmem:[%s4 + $0x10] sm:$0xf]
  %v117 = vld [vmem:[%s4 + $0x14] sm:$0xf]
  %v118 = vld [vmem:[%s4 + $0x18] sm:$0xf]
  %v119 = vld [vmem:[%s4 + $0x1c] sm:$0xf]
  %v120 = vld [vmem:[%s5] sm:$0x1]
  %v121 = vld [vmem:[%s5 + $0x1] sm:$0x1]
  %v122 = vld [vmem:[%s5 + $0x2] sm:$0x1]
  %vm123 = vcmask 261120
  %v124 = vsel %vm123, %v94, 0.0
  %125 = vadd.xlane.f32.xlu0 %v124
  %v126 = vpop.xlane.xlu0 %125
  %v127 = vsel %vm123, %v96, 0.0
  %128 = vadd.xlane.f32.xlu0 %v127
  %v129 = vpop.xlane.xlu0 %128
  %v130 = vsel %vm123, %v99, 0.0
  %131 = vadd.xlane.f32.xlu0 %v130
  %v132 = vpop.xlane.xlu0 %131
  %v133 = vsel %vm123, %v101, 0.0
  %134 = vadd.xlane.f32.xlu0 %v133
  %v135 = vpop.xlane.xlu0 %134
  %vm136 = vcmask 254976
  %v137 = vsel %vm136, %v104, 0.0
  %138 = vadd.xlane.f32.xlu0 %v137
  %v139 = vpop.xlane.xlu0 %138
  %v140 = vrcp.pop 32.0
  %v141 = vmul.f32 32.0, %v140
  %v142 = vsub.f32 1.0, %v141
  %v143 = vmul.f32 %v140, %v142
  %v144 = vadd.f32 %v140, %v143
  %vm145 = vweird.f32 %v140
  %v146 = vsel %vm145, %v140, %v144
  %v147 = vmul.f32 %v126, %v146
  %v148 = vmul.f32 %v129, %v146
  %v149 = vmul.f32 %v132, %v146
  %v150 = vmul.f32 %v135, %v146
  %v151 = vmul.f32 %v139, %v146
  %v152 = vsub.f32 %v94, %v147
  %v153 = vsub.f32 %v96, %v148
  %v154 = vsub.f32 %v99, %v149
  %v155 = vsub.f32 %v101, %v150
  %v156 = vsub.f32 %v104, %v151
  %v157 = vmul.f32 %v152, %v152
  %v158 = vmul.f32 %v153, %v153
  %v159 = vmul.f32 %v154, %v154
  %v160 = vmul.f32 %v155, %v155
  %v161 = vmul.f32 %v156, %v156
  %v162 = vsel %vm123, %v157, 0.0
  %163 = vadd.xlane.f32.xlu0 %v162
  %v164 = vpop.xlane.xlu0 %163
  %v165 = vsel %vm123, %v158, 0.0
  %166 = vadd.xlane.f32.xlu0 %v165
  %v167 = vpop.xlane.xlu0 %166
  %v168 = vsel %vm123, %v159, 0.0
  %169 = vadd.xlane.f32.xlu0 %v168
  %v170 = vpop.xlane.xlu0 %169
  %v171 = vsel %vm123, %v160, 0.0
  %172 = vadd.xlane.f32.xlu0 %v171
  %v173 = vpop.xlane.xlu0 %172
  %v174 = vsel %vm136, %v161, 0.0
  %175 = vadd.xlane.f32.xlu0 %v174
  %v176 = vpop.xlane.xlu0 %175
  %v177 = vmul.f32 %v164, %v146
  %v178 = vmul.f32 %v167, %v146
  %v179 = vmul.f32 %v170, %v146
  %v180 = vmul.f32 %v173, %v146
  %v181 = vmul.f32 %v176, %v146
  %v182 = vadd.f32 %v177, 1e-05
  %v183 = vadd.f32 %v178, 1e-05
  %v184 = vadd.f32 %v179, 1e-05
  %v185 = vadd.f32 %v180, 1e-05
  %v186 = vadd.f32 %v181, 1e-05
  %v187 = vrsqrt.pop %v182
  %v188 = vmul.f32 %v187, %v182
  %v189 = vmul.f32 %v188, %v187
  %v190 = vmul.f32 0.5, %v189
  %v191 = vsub.f32 1.5, %v190
  %v192 = vmul.f32 %v187, %v191
  %vm193 = vweird.f32 %v182
  %vm194 = vweird.f32 %v187
  %vm195 = vmor %vm193, %vm194
  %v196 = vsel %vm195, %v187, %v192
  %v197 = vrsqrt.pop %v183
  %v198 = vmul.f32 %v197, %v183
  %v199 = vmul.f32 %v198, %v197
  %v200 = vmul.f32 0.5, %v199
  %v201 = vsub.f32 1.5, %v200
  %v202 = vmul.f32 %v197, %v201
  %vm203 = vweird.f32 %v183
  %vm204 = vweird.f32 %v197
  %vm205 = vmor %vm203, %vm204
  %v206 = vsel %vm205, %v197, %v202
  %v207 = vrsqrt.pop %v184
  %v208 = vmul.f32 %v207, %v184
  %v209 = vmul.f32 %v208, %v207
  %v210 = vmul.f32 0.5, %v209
  %v211 = vsub.f32 1.5, %v210
  %v212 = vmul.f32 %v207, %v211
  %vm213 = vweird.f32 %v184
  %vm214 = vweird.f32 %v207
  %vm215 = vmor %vm213, %vm214
  %v216 = vsel %vm215, %v207, %v212
  %v217 = vrsqrt.pop %v185
  %v218 = vmul.f32 %v217, %v185
  %v219 = vmul.f32 %v218, %v217
  %v220 = vmul.f32 0.5, %v219
  %v221 = vsub.f32 1.5, %v220
  %v222 = vmul.f32 %v217, %v221
  %vm223 = vweird.f32 %v185
  %vm224 = vweird.f32 %v217
  %vm225 = vmor %vm223, %vm224
  %v226 = vsel %vm225, %v217, %v222
  %v227 = vrsqrt.pop %v186
  %v228 = vmul.f32 %v227, %v186
  %v229 = vmul.f32 %v228, %v227
  %v230 = vmul.f32 0.5, %v229
  %v231 = vsub.f32 1.5, %v230
  %v232 = vmul.f32 %v227, %v231
  %vm233 = vweird.f32 %v186
  %vm234 = vweird.f32 %v227
  %vm235 = vmor %vm233, %vm234
  %v236 = vsel %vm235, %v227, %v232
  %v237 = vmul.f32 %v152, %v196
  %v238 = vmul.f32 %v153, %v206
  %v239 = vmul.f32 %v154, %v216
  %v240 = vmul.f32 %v155, %v226
  %v241 = vmul.f32 %v156, %v236
  %v242 = vperm.slane %v121, 0
  %v243 = vmul.f32 %v237, %v242
  %v244 = vmul.f32 %v238, %v242
  %v245 = vmul.f32 %v239, %v242
  %v246 = vmul.f32 %v240, %v242
  %v247 = vmul.f32 %v241, %v242
  %249 = vrot.lane.b32.xlu0 %v242, 96
  %v250 = vpop.permute.xlu0 %249
  %v252 = vadd.f32 %v243, %v250
  %v253 = vadd.f32 %v244, %v250
  %v254 = vadd.f32 %v245, %v250
  %v255 = vadd.f32 %v246, %v250
  %v256 = vadd.f32 %v247, %v250
  %v257 = vpack.c.bf16 %v253, %v252
  %v258 = vpack.c.bf16 %v255, %v254
  %v259 = vpack.c.bf16 %v256, %v256
  %v260 = vperm.slane %v120, 0
  %v265 = vunpack.c.l.b16 %v112
  %v266 = vunpack.c.l.b16 %v113
  %v267 = vunpack.c.l.b16 %v114
  %v268 = vunpack.c.l.b16 %v115
  %v269 = vpack.c.b16 %v266, %v265
  %v270 = vpack.c.b16 %v268, %v267
  %v274 = vsel %vm123, %v257, 0
  %v277 = vsel %vm123, %v258, 0
  %v280 = vsel %vm123, %v259, 0
  %282 = vmatpush.bf16.msra.mxu0 0
  %283 = vmatpush.bf16.msra.mxu0 0
  %284 = vmatpush.bf16.msra.mxu0 0
  %285 = vmatpush.bf16.msra.mxu0 0
  %286 = vmatpush.bf16.msra.mxu0 0
  %287 = vmatpush.bf16.msra.mxu0 0
  %288 = vmatpush.bf16.msra.mxu0 %v270
  %289 = vmatpush.bf16.msra.mxu0 %v269
  %290 = vmatmul.bf16.gmra.mxu0 %v274
  %v291 = vpop.f32.mrf.mxu0
  %v292 = vadd.f32 %v260, %v291
  %v293 = vpop.f32.mrf.mxu0
  %v294 = vadd.f32 %v260, %v293
  %295 = vmatmul.bf16.gmra.mxu0 %v277
  %v296 = vpop.f32.mrf.mxu0
  %v297 = vadd.f32 %v260, %v296
  %v298 = vpop.f32.mrf.mxu0
  %v299 = vadd.f32 %v260, %v298
  %300 = vmatmul.bf16.gmra.mxu0 %v280
  %v301 = vpop.f32.mrf.mxu0
  %v302 = vadd.f32 %v260, %v301
  %v303 = vpop.f32.mrf.mxu0
  %304 = vdwg.mxu0
  %310 = vrot.lane.b32.xlu0 %v292, 120
  %v311 = vpop.permute.xlu0 %310
  %312 = vrot.lane.b32.xlu0 %v294, 120
  %v313 = vpop.permute.xlu0 %312
  %314 = vrot.lane.b32.xlu0 %v297, 120
  %v315 = vpop.permute.xlu0 %314
  %316 = vrot.lane.b32.xlu0 %v299, 120
  %v317 = vpop.permute.xlu0 %316
  %318 = vrot.lane.b32.xlu0 %v302, 120
  %v319 = vpop.permute.xlu0 %318
  %320 = vrot.lane.b32.xlu0 %v292, 112
  %v321 = vpop.permute.xlu0 %320
  %322 = vrot.lane.b32.xlu0 %v294, 112
  %v323 = vpop.permute.xlu0 %322
  %324 = vrot.lane.b32.xlu0 %v297, 112
  %v325 = vpop.permute.xlu0 %324
  %326 = vrot.lane.b32.xlu0 %v299, 112
  %v327 = vpop.permute.xlu0 %326
  %328 = vrot.lane.b32.xlu0 %v302, 112
  %v329 = vpop.permute.xlu0 %328
  %330 = vrot.lane.b32.xlu0 %v292, 104
  %v331 = vpop.permute.xlu0 %330
  %332 = vrot.lane.b32.xlu0 %v294, 104
  %v333 = vpop.permute.xlu0 %332
  %334 = vrot.lane.b32.xlu0 %v297, 104
  %v335 = vpop.permute.xlu0 %334
  %336 = vrot.lane.b32.xlu0 %v299, 104
  %v337 = vpop.permute.xlu0 %336
  %338 = vrot.lane.b32.xlu0 %v302, 104
  %v339 = vpop.permute.xlu0 %338
  %340 = vrot.lane.b32.xlu0 %v292, 96
  %v341 = vpop.permute.xlu0 %340
  %342 = vrot.lane.b32.xlu0 %v294, 96
  %v343 = vpop.permute.xlu0 %342
  %344 = vrot.lane.b32.xlu0 %v297, 96
  %v345 = vpop.permute.xlu0 %344
  %346 = vrot.lane.b32.xlu0 %v299, 96
  %v347 = vpop.permute.xlu0 %346
  %348 = vrot.lane.b32.xlu0 %v302, 96
  %v349 = vpop.permute.xlu0 %348
  %vm350 = vcmask 64512
  %v351 = vsel %vm350, %v292, 0
  %v353 = vsel %vm350, %v294, 0
  %v355 = vsel %vm350, %v297, 0
  %v357 = vsel %vm350, %v299, 0
  %v359 = vsel %vm350, %v302, 0
  %v361 = vsel %vm350, %v341, 0
  %v363 = vsel %vm350, %v343, 0
  %v365 = vsel %vm350, %v345, 0
  %v367 = vsel %vm350, %v347, 0
  %v369 = vsel %vm350, %v349, 0
  %371 = vmatpush.xpose.msra.mxu0 0.0
  %372 = vmatpush.xpose.msra.mxu0 0.0
  %373 = vmatpush.xpose.msra.mxu0 0.0
  %374 = vmatpush.xpose.msra.mxu0 0.0
  %375 = vmatpush.xpose.msra.mxu0 0.0
  %376 = vmatpush.xpose.msra.mxu0 0.0
  %377 = vmatpush.xpose.msra.mxu0 0.0
  %378 = vmatpush.xpose.msra.mxu0 0.0
  %379 = vmatpush.xpose.msra.mxu0 0.0
  %380 = vmatpush.xpose.msra.mxu0 0.0
  %381 = vmatpush.xpose.msra.mxu0 0.0
  %382 = vmatpush.xpose.msra.mxu0 %v369
  %383 = vmatpush.xpose.msra.mxu0 %v367
  %384 = vmatpush.xpose.msra.mxu0 %v365
  %385 = vmatpush.xpose.msra.mxu0 %v363
  %386 = vmatpush.xpose.msra.mxu0 %v361
  %387 = vmatmul.f32.gmra.mxu0 %v351
  %v388 = vpop.f32.mrf.mxu0
  %v389 = vadd.f32 0.0, %v388
  %390 = vmatmul.f32.gmra.mxu0 %v353
  %v391 = vpop.f32.mrf.mxu0
  %v392 = vadd.f32 0.0, %v391
  %393 = vmatmul.f32.gmra.mxu0 %v355
  %v394 = vpop.f32.mrf.mxu0
  %v395 = vadd.f32 0.0, %v394
  %396 = vmatmul.f32.gmra.mxu0 %v357
  %v397 = vpop.f32.mrf.mxu0
  %v398 = vadd.f32 0.0, %v397
  %399 = vmatmul.f32.gmra.mxu0 %v359
  %v400 = vpop.f32.mrf.mxu0
  %v401 = vadd.f32 0.0, %v400
  %402 = vdwg.mxu0
  %403 = vrot.lane.b32.xlu0 %v311, 96
  %v404 = vpop.permute.xlu0 %403
  %405 = vrot.lane.b32.xlu0 %v313, 96
  %v406 = vpop.permute.xlu0 %405
  %407 = vrot.lane.b32.xlu0 %v315, 96
  %v408 = vpop.permute.xlu0 %407
  %409 = vrot.lane.b32.xlu0 %v317, 96
  %v410 = vpop.permute.xlu0 %409
  %411 = vrot.lane.b32.xlu0 %v319, 96
  %v412 = vpop.permute.xlu0 %411
  %v413 = vsel %vm350, %v311, 0
  %v415 = vsel %vm350, %v313, 0
  %v417 = vsel %vm350, %v315, 0
  %v419 = vsel %vm350, %v317, 0
  %v421 = vsel %vm350, %v319, 0
  %v423 = vsel %vm350, %v404, 0
  %v425 = vsel %vm350, %v406, 0
  %v427 = vsel %vm350, %v408, 0
  %v429 = vsel %vm350, %v410, 0
  %v431 = vsel %vm350, %v412, 0
  %433 = vmatpush.xpose.msra.mxu0 0.0
  %434 = vmatpush.xpose.msra.mxu0 0.0
  %435 = vmatpush.xpose.msra.mxu0 0.0
  %436 = vmatpush.xpose.msra.mxu0 0.0
  %437 = vmatpush.xpose.msra.mxu0 0.0
  %438 = vmatpush.xpose.msra.mxu0 0.0
  %439 = vmatpush.xpose.msra.mxu0 0.0
  %440 = vmatpush.xpose.msra.mxu0 0.0
  %441 = vmatpush.xpose.msra.mxu0 0.0
  %442 = vmatpush.xpose.msra.mxu0 0.0
  %443 = vmatpush.xpose.msra.mxu0 0.0
  %444 = vmatpush.xpose.msra.mxu0 %v431
  %445 = vmatpush.xpose.msra.mxu0 %v429
  %446 = vmatpush.xpose.msra.mxu0 %v427
  %447 = vmatpush.xpose.msra.mxu0 %v425
  %448 = vmatpush.xpose.msra.mxu0 %v423
  %449 = vmatmul.f32.gmra.mxu0 %v413
  %v450 = vpop.f32.mrf.mxu0
  %v451 = vadd.f32 0.0, %v450
  %452 = vmatmul.f32.gmra.mxu0 %v415
  %v453 = vpop.f32.mrf.mxu0
  %v454 = vadd.f32 0.0, %v453
  %455 = vmatmul.f32.gmra.mxu0 %v417
  %v456 = vpop.f32.mrf.mxu0
  %v457 = vadd.f32 0.0, %v456
  %458 = vmatmul.f32.gmra.mxu0 %v419
  %v459 = vpop.f32.mrf.mxu0
  %v460 = vadd.f32 0.0, %v459
  %461 = vmatmul.f32.gmra.mxu0 %v421
  %v462 = vpop.f32.mrf.mxu0
  %v463 = vadd.f32 0.0, %v462
  %464 = vdwg.mxu0
  %465 = vrot.lane.b32.xlu0 %v321, 96
  %v466 = vpop.permute.xlu0 %465
  %467 = vrot.lane.b32.xlu0 %v323, 96
  %v468 = vpop.permute.xlu0 %467
  %469 = vrot.lane.b32.xlu0 %v325, 96
  %v470 = vpop.permute.xlu0 %469
  %471 = vrot.lane.b32.xlu0 %v327, 96
  %v472 = vpop.permute.xlu0 %471
  %473 = vrot.lane.b32.xlu0 %v329, 96
  %v474 = vpop.permute.xlu0 %473
  %v475 = vsel %vm350, %v321, 0
  %v477 = vsel %vm350, %v323, 0
  %v479 = vsel %vm350, %v325, 0
  %v481 = vsel %vm350, %v327, 0
  %v483 = vsel %vm350, %v329, 0
  %v485 = vsel %vm350, %v466, 0
  %v487 = vsel %vm350, %v468, 0
  %v489 = vsel %vm350, %v470, 0
  %v491 = vsel %vm350, %v472, 0
  %v493 = vsel %vm350, %v474, 0
  %495 = vmatpush.xpose.msra.mxu0 0.0
  %496 = vmatpush.xpose.msra.mxu0 0.0
  %497 = vmatpush.xpose.msra.mxu0 0.0
  %498 = vmatpush.xpose.msra.mxu0 0.0
  %499 = vmatpush.xpose.msra.mxu0 0.0
  %500 = vmatpush.xpose.msra.mxu0 0.0
  %501 = vmatpush.xpose.msra.mxu0 0.0
  %502 = vmatpush.xpose.msra.mxu0 0.0
  %503 = vmatpush.xpose.msra.mxu0 0.0
  %504 = vmatpush.xpose.msra.mxu0 0.0
  %505 = vmatpush.xpose.msra.mxu0 0.0
  %506 = vmatpush.xpose.msra.mxu0 %v493
  %507 = vmatpush.xpose.msra.mxu0 %v491
  %508 = vmatpush.xpose.msra.mxu0 %v489
  %509 = vmatpush.xpose.msra.mxu0 %v487
  %510 = vmatpush.xpose.msra.mxu0 %v485
  %511 = vmatmul.f32.gmra.mxu0 %v475
  %v512 = vpop.f32.mrf.mxu0
  %v513 = vadd.f32 0.0, %v512
  %514 = vmatmul.f32.gmra.mxu0 %v477
  %v515 = vpop.f32.mrf.mxu0
  %v516 = vadd.f32 0.0, %v515
  %517 = vmatmul.f32.gmra.mxu0 %v479
  %v518 = vpop.f32.mrf.mxu0
  %v519 = vadd.f32 0.0, %v518
  %520 = vmatmul.f32.gmra.mxu0 %v481
  %v521 = vpop.f32.mrf.mxu0
  %v522 = vadd.f32 0.0, %v521
  %523 = vmatmul.f32.gmra.mxu0 %v483
  %v524 = vpop.f32.mrf.mxu0
  %v525 = vadd.f32 0.0, %v524
  %526 = vdwg.mxu0
  %527 = vrot.lane.b32.xlu0 %v331, 96
  %v528 = vpop.permute.xlu0 %527
  %529 = vrot.lane.b32.xlu0 %v333, 96
  %v530 = vpop.permute.xlu0 %529
  %531 = vrot.lane.b32.xlu0 %v335, 96
  %v532 = vpop.permute.xlu0 %531
  %533 = vrot.lane.b32.xlu0 %v337, 96
  %v534 = vpop.permute.xlu0 %533
  %535 = vrot.lane.b32.xlu0 %v339, 96
  %v536 = vpop.permute.xlu0 %535
  %v537 = vsel %vm350, %v331, 0
  %v539 = vsel %vm350, %v333, 0
  %v541 = vsel %vm350, %v335, 0
  %v543 = vsel %vm350, %v337, 0
  %v545 = vsel %vm350, %v339, 0
  %v547 = vsel %vm350, %v528, 0
  %v549 = vsel %vm350, %v530, 0
  %v551 = vsel %vm350, %v532, 0
  %v553 = vsel %vm350, %v534, 0
  %v555 = vsel %vm350, %v536, 0
  %557 = vmatpush.xpose.msra.mxu0 0.0
  %558 = vmatpush.xpose.msra.mxu0 0.0
  %559 = vmatpush.xpose.msra.mxu0 0.0
  %560 = vmatpush.xpose.msra.mxu0 0.0
  %561 = vmatpush.xpose.msra.mxu0 0.0
  %562 = vmatpush.xpose.msra.mxu0 0.0
  %563 = vmatpush.xpose.msra.mxu0 0.0
  %564 = vmatpush.xpose.msra.mxu0 0.0
  %565 = vmatpush.xpose.msra.mxu0 0.0
  %566 = vmatpush.xpose.msra.mxu0 0.0
  %567 = vmatpush.xpose.msra.mxu0 0.0
  %568 = vmatpush.xpose.msra.mxu0 %v555
  %569 = vmatpush.xpose.msra.mxu0 %v553
  %570 = vmatpush.xpose.msra.mxu0 %v551
  %571 = vmatpush.xpose.msra.mxu0 %v549
  %572 = vmatpush.xpose.msra.mxu0 %v547
  %573 = vmatmul.f32.gmra.mxu0 %v537
  %v574 = vpop.f32.mrf.mxu0
  %v575 = vadd.f32 0.0, %v574
  %576 = vmatmul.f32.gmra.mxu0 %v539
  %v577 = vpop.f32.mrf.mxu0
  %v578 = vadd.f32 0.0, %v577
  %579 = vmatmul.f32.gmra.mxu0 %v541
  %v580 = vpop.f32.mrf.mxu0
  %v581 = vadd.f32 0.0, %v580
  %582 = vmatmul.f32.gmra.mxu0 %v543
  %v583 = vpop.f32.mrf.mxu0
  %v584 = vadd.f32 0.0, %v583
  %585 = vmatmul.f32.gmra.mxu0 %v545
  %v586 = vpop.f32.mrf.mxu0
  %v587 = vadd.f32 0.0, %v586
  %588 = vdwg.mxu0
  %v589 = vmul.f32 %v389, 0.35355338
  %v590 = vmul.f32 %v392, 0.35355338
  %v591 = vmul.f32 %v395, 0.35355338
  %v592 = vmul.f32 %v398, 0.35355338
  %v593 = vmul.f32 %v401, 0.35355338
  %v594 = vmul.f32 %v451, 0.35355338
  %v595 = vmul.f32 %v454, 0.35355338
  %v596 = vmul.f32 %v457, 0.35355338
  %v597 = vmul.f32 %v460, 0.35355338
  %v598 = vmul.f32 %v463, 0.35355338
  %v599 = vmul.f32 %v513, 0.35355338
  %v600 = vmul.f32 %v516, 0.35355338
  %v601 = vmul.f32 %v519, 0.35355338
  %v602 = vmul.f32 %v522, 0.35355338
  %v603 = vmul.f32 %v525, 0.35355338
  %v604 = vmul.f32 %v575, 0.35355338
  %v605 = vmul.f32 %v578, 0.35355338
  %v606 = vmul.f32 %v581, 0.35355338
  %v607 = vmul.f32 %v584, 0.35355338
  %v608 = vmul.f32 %v587, 0.35355338
  %v609 = vadd.f32 %v589, %v107
  %v610 = vadd.f32 %v590, %v108
  %v611 = vadd.f32 %v591, %v109
  %v612 = vadd.f32 %v592, %v110
  %v613 = vadd.f32 %v593, %v111
  %v614 = vadd.f32 %v594, %v107
  %v615 = vadd.f32 %v595, %v108
  %v616 = vadd.f32 %v596, %v109
  %v617 = vadd.f32 %v597, %v110
  %v618 = vadd.f32 %v598, %v111
  %v619 = vadd.f32 %v599, %v107
  %v620 = vadd.f32 %v600, %v108
  %v621 = vadd.f32 %v601, %v109
  %v622 = vadd.f32 %v602, %v110
  %v623 = vadd.f32 %v603, %v111
  %v624 = vadd.f32 %v604, %v107
  %v625 = vadd.f32 %v605, %v108
  %v626 = vadd.f32 %v606, %v109
  %v627 = vadd.f32 %v607, %v110
  %v628 = vadd.f32 %v608, %v111
  %vm629 = vcmask 277504
  %v630 = vsel %vm629, %v609, -inf
  %631 = vmax.xlane.f32.xlu0 %v630
  %v632 = vpop.xlane.xlu0 %631
  %v633 = vsel %vm629, %v610, -inf
  %634 = vmax.xlane.f32.xlu0 %v633
  %v635 = vpop.xlane.xlu0 %634
  %v636 = vsel %vm629, %v611, -inf
  %637 = vmax.xlane.f32.xlu0 %v636
  %v638 = vpop.xlane.xlu0 %637
  %v639 = vsel %vm629, %v612, -inf
  %640 = vmax.xlane.f32.xlu0 %v639
  %v641 = vpop.xlane.xlu0 %640
  %vm642 = vcmask 271360
  %v643 = vsel %vm642, %v613, -inf
  %644 = vmax.xlane.f32.xlu0 %v643
  %v645 = vpop.xlane.xlu0 %644
  %v646 = vsel %vm629, %v614, -inf
  %647 = vmax.xlane.f32.xlu0 %v646
  %v648 = vpop.xlane.xlu0 %647
  %v649 = vsel %vm629, %v615, -inf
  %650 = vmax.xlane.f32.xlu0 %v649
  %v651 = vpop.xlane.xlu0 %650
  %v652 = vsel %vm629, %v616, -inf
  %653 = vmax.xlane.f32.xlu0 %v652
  %v654 = vpop.xlane.xlu0 %653
  %v655 = vsel %vm629, %v617, -inf
  %656 = vmax.xlane.f32.xlu0 %v655
  %v657 = vpop.xlane.xlu0 %656
  %v658 = vsel %vm642, %v618, -inf
  %659 = vmax.xlane.f32.xlu0 %v658
  %v660 = vpop.xlane.xlu0 %659
  %v661 = vsel %vm629, %v619, -inf
  %662 = vmax.xlane.f32.xlu0 %v661
  %v663 = vpop.xlane.xlu0 %662
  %v664 = vsel %vm629, %v620, -inf
  %665 = vmax.xlane.f32.xlu0 %v664
  %v666 = vpop.xlane.xlu0 %665
  %v667 = vsel %vm629, %v621, -inf
  %668 = vmax.xlane.f32.xlu0 %v667
  %v669 = vpop.xlane.xlu0 %668
  %v670 = vsel %vm629, %v622, -inf
  %671 = vmax.xlane.f32.xlu0 %v670
  %v672 = vpop.xlane.xlu0 %671
  %v673 = vsel %vm642, %v623, -inf
  %674 = vmax.xlane.f32.xlu0 %v673
  %v675 = vpop.xlane.xlu0 %674
  %v676 = vsel %vm629, %v624, -inf
  %677 = vmax.xlane.f32.xlu0 %v676
  %v678 = vpop.xlane.xlu0 %677
  %v679 = vsel %vm629, %v625, -inf
  %680 = vmax.xlane.f32.xlu0 %v679
  %v681 = vpop.xlane.xlu0 %680
  %v682 = vsel %vm629, %v626, -inf
  %683 = vmax.xlane.f32.xlu0 %v682
  %v684 = vpop.xlane.xlu0 %683
  %v685 = vsel %vm629, %v627, -inf
  %686 = vmax.xlane.f32.xlu0 %v685
  %v687 = vpop.xlane.xlu0 %686
  %v688 = vsel %vm642, %v628, -inf
  %689 = vmax.xlane.f32.xlu0 %v688
  %v690 = vpop.xlane.xlu0 %689
  %v691 = vsub.f32 %v609, %v632
  %v692 = vsub.f32 %v610, %v635
  %v693 = vsub.f32 %v611, %v638
  %v694 = vsub.f32 %v612, %v641
  %v695 = vsub.f32 %v613, %v645
  %v696 = vsub.f32 %v614, %v648
  %v697 = vsub.f32 %v615, %v651
  %v698 = vsub.f32 %v616, %v654
  %v699 = vsub.f32 %v617, %v657
  %v700 = vsub.f32 %v618, %v660
  %v701 = vsub.f32 %v619, %v663
  %v702 = vsub.f32 %v620, %v666
  %v703 = vsub.f32 %v621, %v669
  %v704 = vsub.f32 %v622, %v672
  %v705 = vsub.f32 %v623, %v675
  %v706 = vsub.f32 %v624, %v678
  %v707 = vsub.f32 %v625, %v681
  %v708 = vsub.f32 %v626, %v684
  %v709 = vsub.f32 %v627, %v687
  %v710 = vsub.f32 %v628, %v690
  %v711 = vmul.f32 %v691, 1.442695
  %v712 = vpow.pop %v711
  %v713 = vmul.f32 %v692, 1.442695
  %v714 = vpow.pop %v713
  %v715 = vmul.f32 %v693, 1.442695
  %v716 = vpow.pop %v715
  %v717 = vmul.f32 %v694, 1.442695
  %v718 = vpow.pop %v717
  %v719 = vmul.f32 %v695, 1.442695
  %v720 = vpow.pop %v719
  %v721 = vmul.f32 %v696, 1.442695
  %v722 = vpow.pop %v721
  %v723 = vmul.f32 %v697, 1.442695
  %v724 = vpow.pop %v723
  %v725 = vmul.f32 %v698, 1.442695
  %v726 = vpow.pop %v725
  %v727 = vmul.f32 %v699, 1.442695
  %v728 = vpow.pop %v727
  %v729 = vmul.f32 %v700, 1.442695
  %v730 = vpow.pop %v729
  %v731 = vmul.f32 %v701, 1.442695
  %v732 = vpow.pop %v731
  %v733 = vmul.f32 %v702, 1.442695
  %v734 = vpow.pop %v733
  %v735 = vmul.f32 %v703, 1.442695
  %v736 = vpow.pop %v735
  %v737 = vmul.f32 %v704, 1.442695
  %v738 = vpow.pop %v737
  %v739 = vmul.f32 %v705, 1.442695
  %v740 = vpow.pop %v739
  %v741 = vmul.f32 %v706, 1.442695
  %v742 = vpow.pop %v741
  %v743 = vmul.f32 %v707, 1.442695
  %v744 = vpow.pop %v743
  %v745 = vmul.f32 %v708, 1.442695
  %v746 = vpow.pop %v745
  %v747 = vmul.f32 %v709, 1.442695
  %v748 = vpow.pop %v747
  %v749 = vmul.f32 %v710, 1.442695
  %v750 = vpow.pop %v749
  %v751 = vsel %vm629, %v712, 0.0
  %752 = vadd.xlane.f32.xlu0 %v751
  %v753 = vpop.xlane.xlu0 %752
  %v754 = vsel %vm629, %v714, 0.0
  %755 = vadd.xlane.f32.xlu0 %v754
  %v756 = vpop.xlane.xlu0 %755
  %v757 = vsel %vm629, %v716, 0.0
  %758 = vadd.xlane.f32.xlu0 %v757
  %v759 = vpop.xlane.xlu0 %758
  %v760 = vsel %vm629, %v718, 0.0
  %761 = vadd.xlane.f32.xlu0 %v760
  %v762 = vpop.xlane.xlu0 %761
  %v763 = vsel %vm642, %v720, 0.0
  %764 = vadd.xlane.f32.xlu0 %v763
  %v765 = vpop.xlane.xlu0 %764
  %v766 = vsel %vm629, %v722, 0.0
  %767 = vadd.xlane.f32.xlu0 %v766
  %v768 = vpop.xlane.xlu0 %767
  %v769 = vsel %vm629, %v724, 0.0
  %770 = vadd.xlane.f32.xlu0 %v769
  %v771 = vpop.xlane.xlu0 %770
  %v772 = vsel %vm629, %v726, 0.0
  %773 = vadd.xlane.f32.xlu0 %v772
  %v774 = vpop.xlane.xlu0 %773
  %v775 = vsel %vm629, %v728, 0.0
  %776 = vadd.xlane.f32.xlu0 %v775
  %v777 = vpop.xlane.xlu0 %776
  %v778 = vsel %vm642, %v730, 0.0
  %779 = vadd.xlane.f32.xlu0 %v778
  %v780 = vpop.xlane.xlu0 %779
  %v781 = vsel %vm629, %v732, 0.0
  %782 = vadd.xlane.f32.xlu0 %v781
  %v783 = vpop.xlane.xlu0 %782
  %v784 = vsel %vm629, %v734, 0.0
  %785 = vadd.xlane.f32.xlu0 %v784
  %v786 = vpop.xlane.xlu0 %785
  %v787 = vsel %vm629, %v736, 0.0
  %788 = vadd.xlane.f32.xlu0 %v787
  %v789 = vpop.xlane.xlu0 %788
  %v790 = vsel %vm629, %v738, 0.0
  %791 = vadd.xlane.f32.xlu0 %v790
  %v792 = vpop.xlane.xlu0 %791
  %v793 = vsel %vm642, %v740, 0.0
  %794 = vadd.xlane.f32.xlu0 %v793
  %v795 = vpop.xlane.xlu0 %794
  %v796 = vsel %vm629, %v742, 0.0
  %797 = vadd.xlane.f32.xlu0 %v796
  %v798 = vpop.xlane.xlu0 %797
  %v799 = vsel %vm629, %v744, 0.0
  %800 = vadd.xlane.f32.xlu0 %v799
  %v801 = vpop.xlane.xlu0 %800
  %v802 = vsel %vm629, %v746, 0.0
  %803 = vadd.xlane.f32.xlu0 %v802
  %v804 = vpop.xlane.xlu0 %803
  %v805 = vsel %vm629, %v748, 0.0
  %806 = vadd.xlane.f32.xlu0 %v805
  %v807 = vpop.xlane.xlu0 %806
  %v808 = vsel %vm642, %v750, 0.0
  %809 = vadd.xlane.f32.xlu0 %v808
  %v810 = vpop.xlane.xlu0 %809
  %v811 = vrcp.pop %v753
  %v812 = vmul.f32 %v753, %v811
  %v813 = vsub.f32 1.0, %v812
  %v814 = vmul.f32 %v811, %v813
  %v815 = vadd.f32 %v811, %v814
  %vm816 = vweird.f32 %v753
  %vm817 = vweird.f32 %v811
  %vm818 = vmor %vm816, %vm817
  %v819 = vsel %vm818, %v811, %v815
  %v820 = vand.u32 2147483647, %v753
  %vm821 = vcmp.eq.f32.partialorder %v820, 8.507059e+37
  %v822 = vand.u32 %v753, 2147483648
  %v823 = vor.u32 1.1754944e-38, %v822
  %v824 = vsel %vm821, %v823, %v819
  %v825 = vrcp.pop %v756
  %v826 = vmul.f32 %v756, %v825
  %v827 = vsub.f32 1.0, %v826
  %v828 = vmul.f32 %v825, %v827
  %v829 = vadd.f32 %v825, %v828
  %vm830 = vweird.f32 %v756
  %vm831 = vweird.f32 %v825
  %vm832 = vmor %vm830, %vm831
  %v833 = vsel %vm832, %v825, %v829
  %v834 = vand.u32 2147483647, %v756
  %vm835 = vcmp.eq.f32.partialorder %v834, 8.507059e+37
  %v836 = vand.u32 %v756, 2147483648
  %v837 = vor.u32 1.1754944e-38, %v836
  %v838 = vsel %vm835, %v837, %v833
  %v839 = vrcp.pop %v759
  %v840 = vmul.f32 %v759, %v839
  %v841 = vsub.f32 1.0, %v840
  %v842 = vmul.f32 %v839, %v841
  %v843 = vadd.f32 %v839, %v842
  %vm844 = vweird.f32 %v759
  %vm845 = vweird.f32 %v839
  %vm846 = vmor %vm844, %vm845
  %v847 = vsel %vm846, %v839, %v843
  %v848 = vand.u32 2147483647, %v759
  %vm849 = vcmp.eq.f32.partialorder %v848, 8.507059e+37
  %v850 = vand.u32 %v759, 2147483648
  %v851 = vor.u32 1.1754944e-38, %v850
  %v852 = vsel %vm849, %v851, %v847
  %v853 = vrcp.pop %v762
  %v854 = vmul.f32 %v762, %v853
  %v855 = vsub.f32 1.0, %v854
  %v856 = vmul.f32 %v853, %v855
  %v857 = vadd.f32 %v853, %v856
  %vm858 = vweird.f32 %v762
  %vm859 = vweird.f32 %v853
  %vm860 = vmor %vm858, %vm859
  %v861 = vsel %vm860, %v853, %v857
  %v862 = vand.u32 2147483647, %v762
  %vm863 = vcmp.eq.f32.partialorder %v862, 8.507059e+37
  %v864 = vand.u32 %v762, 2147483648
  %v865 = vor.u32 1.1754944e-38, %v864
  %v866 = vsel %vm863, %v865, %v861
  %v867 = vrcp.pop %v765
  %v868 = vmul.f32 %v765, %v867
  %v869 = vsub.f32 1.0, %v868
  %v870 = vmul.f32 %v867, %v869
  %v871 = vadd.f32 %v867, %v870
  %vm872 = vweird.f32 %v765
  %vm873 = vweird.f32 %v867
  %vm874 = vmor %vm872, %vm873
  %v875 = vsel %vm874, %v867, %v871
  %v876 = vand.u32 2147483647, %v765
  %vm877 = vcmp.eq.f32.partialorder %v876, 8.507059e+37
  %v878 = vand.u32 %v765, 2147483648
  %v879 = vor.u32 1.1754944e-38, %v878
  %v880 = vsel %vm877, %v879, %v875
  %v881 = vrcp.pop %v768
  %v882 = vmul.f32 %v768, %v881
  %v883 = vsub.f32 1.0, %v882
  %v884 = vmul.f32 %v881, %v883
  %v885 = vadd.f32 %v881, %v884
  %vm886 = vweird.f32 %v768
  %vm887 = vweird.f32 %v881
  %vm888 = vmor %vm886, %vm887
  %v889 = vsel %vm888, %v881, %v885
  %v890 = vand.u32 2147483647, %v768
  %vm891 = vcmp.eq.f32.partialorder %v890, 8.507059e+37
  %v892 = vand.u32 %v768, 2147483648
  %v893 = vor.u32 1.1754944e-38, %v892
  %v894 = vsel %vm891, %v893, %v889
  %v895 = vrcp.pop %v771
  %v896 = vmul.f32 %v771, %v895
  %v897 = vsub.f32 1.0, %v896
  %v898 = vmul.f32 %v895, %v897
  %v899 = vadd.f32 %v895, %v898
  %vm900 = vweird.f32 %v771
  %vm901 = vweird.f32 %v895
  %vm902 = vmor %vm900, %vm901
  %v903 = vsel %vm902, %v895, %v899
  %v904 = vand.u32 2147483647, %v771
  %vm905 = vcmp.eq.f32.partialorder %v904, 8.507059e+37
  %v906 = vand.u32 %v771, 2147483648
  %v907 = vor.u32 1.1754944e-38, %v906
  %v908 = vsel %vm905, %v907, %v903
  %v909 = vrcp.pop %v774
  %v910 = vmul.f32 %v774, %v909
  %v911 = vsub.f32 1.0, %v910
  %v912 = vmul.f32 %v909, %v911
  %v913 = vadd.f32 %v909, %v912
  %vm914 = vweird.f32 %v774
  %vm915 = vweird.f32 %v909
  %vm916 = vmor %vm914, %vm915
  %v917 = vsel %vm916, %v909, %v913
  %v918 = vand.u32 2147483647, %v774
  %vm919 = vcmp.eq.f32.partialorder %v918, 8.507059e+37
  %v920 = vand.u32 %v774, 2147483648
  %v921 = vor.u32 1.1754944e-38, %v920
  %v922 = vsel %vm919, %v921, %v917
  %v923 = vrcp.pop %v777
  %v924 = vmul.f32 %v777, %v923
  %v925 = vsub.f32 1.0, %v924
  %v926 = vmul.f32 %v923, %v925
  %v927 = vadd.f32 %v923, %v926
  %vm928 = vweird.f32 %v777
  %vm929 = vweird.f32 %v923
  %vm930 = vmor %vm928, %vm929
  %v931 = vsel %vm930, %v923, %v927
  %v932 = vand.u32 2147483647, %v777
  %vm933 = vcmp.eq.f32.partialorder %v932, 8.507059e+37
  %v934 = vand.u32 %v777, 2147483648
  %v935 = vor.u32 1.1754944e-38, %v934
  %v936 = vsel %vm933, %v935, %v931
  %v937 = vrcp.pop %v780
  %v938 = vmul.f32 %v780, %v937
  %v939 = vsub.f32 1.0, %v938
  %v940 = vmul.f32 %v937, %v939
  %v941 = vadd.f32 %v937, %v940
  %vm942 = vweird.f32 %v780
  %vm943 = vweird.f32 %v937
  %vm944 = vmor %vm942, %vm943
  %v945 = vsel %vm944, %v937, %v941
  %v946 = vand.u32 2147483647, %v780
  %vm947 = vcmp.eq.f32.partialorder %v946, 8.507059e+37
  %v948 = vand.u32 %v780, 2147483648
  %v949 = vor.u32 1.1754944e-38, %v948
  %v950 = vsel %vm947, %v949, %v945
  %v951 = vrcp.pop %v783
  %v952 = vmul.f32 %v783, %v951
  %v953 = vsub.f32 1.0, %v952
  %v954 = vmul.f32 %v951, %v953
  %v955 = vadd.f32 %v951, %v954
  %vm956 = vweird.f32 %v783
  %vm957 = vweird.f32 %v951
  %vm958 = vmor %vm956, %vm957
  %v959 = vsel %vm958, %v951, %v955
  %v960 = vand.u32 2147483647, %v783
  %vm961 = vcmp.eq.f32.partialorder %v960, 8.507059e+37
  %v962 = vand.u32 %v783, 2147483648
  %v963 = vor.u32 1.1754944e-38, %v962
  %v964 = vsel %vm961, %v963, %v959
  %v965 = vrcp.pop %v786
  %v966 = vmul.f32 %v786, %v965
  %v967 = vsub.f32 1.0, %v966
  %v968 = vmul.f32 %v965, %v967
  %v969 = vadd.f32 %v965, %v968
  %vm970 = vweird.f32 %v786
  %vm971 = vweird.f32 %v965
  %vm972 = vmor %vm970, %vm971
  %v973 = vsel %vm972, %v965, %v969
  %v974 = vand.u32 2147483647, %v786
  %vm975 = vcmp.eq.f32.partialorder %v974, 8.507059e+37
  %v976 = vand.u32 %v786, 2147483648
  %v977 = vor.u32 1.1754944e-38, %v976
  %v978 = vsel %vm975, %v977, %v973
  %v979 = vrcp.pop %v789
  %v980 = vmul.f32 %v789, %v979
  %v981 = vsub.f32 1.0, %v980
  %v982 = vmul.f32 %v979, %v981
  %v983 = vadd.f32 %v979, %v982
  %vm984 = vweird.f32 %v789
  %vm985 = vweird.f32 %v979
  %vm986 = vmor %vm984, %vm985
  %v987 = vsel %vm986, %v979, %v983
  %v988 = vand.u32 2147483647, %v789
  %vm989 = vcmp.eq.f32.partialorder %v988, 8.507059e+37
  %v990 = vand.u32 %v789, 2147483648
  %v991 = vor.u32 1.1754944e-38, %v990
  %v992 = vsel %vm989, %v991, %v987
  %v993 = vrcp.pop %v792
  %v994 = vmul.f32 %v792, %v993
  %v995 = vsub.f32 1.0, %v994
  %v996 = vmul.f32 %v993, %v995
  %v997 = vadd.f32 %v993, %v996
  %vm998 = vweird.f32 %v792
  %vm999 = vweird.f32 %v993
  %vm1000 = vmor %vm998, %vm999
  %v1001 = vsel %vm1000, %v993, %v997
  %v1002 = vand.u32 2147483647, %v792
  %vm1003 = vcmp.eq.f32.partialorder %v1002, 8.507059e+37
  %v1004 = vand.u32 %v792, 2147483648
  %v1005 = vor.u32 1.1754944e-38, %v1004
  %v1006 = vsel %vm1003, %v1005, %v1001
  %v1007 = vrcp.pop %v795
  %v1008 = vmul.f32 %v795, %v1007
  %v1009 = vsub.f32 1.0, %v1008
  %v1010 = vmul.f32 %v1007, %v1009
  %v1011 = vadd.f32 %v1007, %v1010
  %vm1012 = vweird.f32 %v795
  %vm1013 = vweird.f32 %v1007
  %vm1014 = vmor %vm1012, %vm1013
  %v1015 = vsel %vm1014, %v1007, %v1011
  %v1016 = vand.u32 2147483647, %v795
  %vm1017 = vcmp.eq.f32.partialorder %v1016, 8.507059e+37
  %v1018 = vand.u32 %v795, 2147483648
  %v1019 = vor.u32 1.1754944e-38, %v1018
  %v1020 = vsel %vm1017, %v1019, %v1015
  %v1021 = vrcp.pop %v798
  %v1022 = vmul.f32 %v798, %v1021
  %v1023 = vsub.f32 1.0, %v1022
  %v1024 = vmul.f32 %v1021, %v1023
  %v1025 = vadd.f32 %v1021, %v1024
  %vm1026 = vweird.f32 %v798
  %vm1027 = vweird.f32 %v1021
  %vm1028 = vmor %vm1026, %vm1027
  %v1029 = vsel %vm1028, %v1021, %v1025
  %v1030 = vand.u32 2147483647, %v798
  %vm1031 = vcmp.eq.f32.partialorder %v1030, 8.507059e+37
  %v1032 = vand.u32 %v798, 2147483648
  %v1033 = vor.u32 1.1754944e-38, %v1032
  %v1034 = vsel %vm1031, %v1033, %v1029
  %v1035 = vrcp.pop %v801
  %v1036 = vmul.f32 %v801, %v1035
  %v1037 = vsub.f32 1.0, %v1036
  %v1038 = vmul.f32 %v1035, %v1037
  %v1039 = vadd.f32 %v1035, %v1038
  %vm1040 = vweird.f32 %v801
  %vm1041 = vweird.f32 %v1035
  %vm1042 = vmor %vm1040, %vm1041
  %v1043 = vsel %vm1042, %v1035, %v1039
  %v1044 = vand.u32 2147483647, %v801
  %vm1045 = vcmp.eq.f32.partialorder %v1044, 8.507059e+37
  %v1046 = vand.u32 %v801, 2147483648
  %v1047 = vor.u32 1.1754944e-38, %v1046
  %v1048 = vsel %vm1045, %v1047, %v1043
  %v1049 = vrcp.pop %v804
  %v1050 = vmul.f32 %v804, %v1049
  %v1051 = vsub.f32 1.0, %v1050
  %v1052 = vmul.f32 %v1049, %v1051
  %v1053 = vadd.f32 %v1049, %v1052
  %vm1054 = vweird.f32 %v804
  %vm1055 = vweird.f32 %v1049
  %vm1056 = vmor %vm1054, %vm1055
  %v1057 = vsel %vm1056, %v1049, %v1053
  %v1058 = vand.u32 2147483647, %v804
  %vm1059 = vcmp.eq.f32.partialorder %v1058, 8.507059e+37
  %v1060 = vand.u32 %v804, 2147483648
  %v1061 = vor.u32 1.1754944e-38, %v1060
  %v1062 = vsel %vm1059, %v1061, %v1057
  %v1063 = vrcp.pop %v807
  %v1064 = vmul.f32 %v807, %v1063
  %v1065 = vsub.f32 1.0, %v1064
  %v1066 = vmul.f32 %v1063, %v1065
  %v1067 = vadd.f32 %v1063, %v1066
  %vm1068 = vweird.f32 %v807
  %vm1069 = vweird.f32 %v1063
  %vm1070 = vmor %vm1068, %vm1069
  %v1071 = vsel %vm1070, %v1063, %v1067
  %v1072 = vand.u32 2147483647, %v807
  %vm1073 = vcmp.eq.f32.partialorder %v1072, 8.507059e+37
  %v1074 = vand.u32 %v807, 2147483648
  %v1075 = vor.u32 1.1754944e-38, %v1074
  %v1076 = vsel %vm1073, %v1075, %v1071
  %v1077 = vrcp.pop %v810
  %v1078 = vmul.f32 %v810, %v1077
  %v1079 = vsub.f32 1.0, %v1078
  %v1080 = vmul.f32 %v1077, %v1079
  %v1081 = vadd.f32 %v1077, %v1080
  %vm1082 = vweird.f32 %v810
  %vm1083 = vweird.f32 %v1077
  %vm1084 = vmor %vm1082, %vm1083
  %v1085 = vsel %vm1084, %v1077, %v1081
  %v1086 = vand.u32 2147483647, %v810
  %vm1087 = vcmp.eq.f32.partialorder %v1086, 8.507059e+37
  %v1088 = vand.u32 %v810, 2147483648
  %v1089 = vor.u32 1.1754944e-38, %v1088
  %v1090 = vsel %vm1087, %v1089, %v1085
  %v1091 = vmul.f32 %v712, %v824
  %v1092 = vmul.f32 %v714, %v838
  %v1093 = vmul.f32 %v716, %v852
  %v1094 = vmul.f32 %v718, %v866
  %v1095 = vmul.f32 %v720, %v880
  %v1096 = vmul.f32 %v722, %v894
  %v1097 = vmul.f32 %v724, %v908
  %v1098 = vmul.f32 %v726, %v922
  %v1099 = vmul.f32 %v728, %v936
  %v1100 = vmul.f32 %v730, %v950
  %v1101 = vmul.f32 %v732, %v964
  %v1102 = vmul.f32 %v734, %v978
  %v1103 = vmul.f32 %v736, %v992
  %v1104 = vmul.f32 %v738, %v1006
  %v1105 = vmul.f32 %v740, %v1020
  %v1106 = vmul.f32 %v742, %v1034
  %v1107 = vmul.f32 %v744, %v1048
  %v1108 = vmul.f32 %v746, %v1062
  %v1109 = vmul.f32 %v748, %v1076
  %v1110 = vmul.f32 %v750, %v1090
  %1111 = vrot.lane.b32.xlu0 %v292, 64
  %v1112 = vpop.permute.xlu0 %1111
  %1113 = vrot.lane.b32.xlu0 %v294, 64
  %v1114 = vpop.permute.xlu0 %1113
  %1115 = vrot.lane.b32.xlu0 %v297, 64
  %v1116 = vpop.permute.xlu0 %1115
  %1117 = vrot.lane.b32.xlu0 %v299, 64
  %v1118 = vpop.permute.xlu0 %1117
  %1119 = vrot.lane.b32.xlu0 %v302, 64
  %v1120 = vpop.permute.xlu0 %1119
  %v1126 = vsel %vm629, %v1091, 0
  %v1129 = vsel %vm629, %v1092, 0
  %v1132 = vsel %vm629, %v1093, 0
  %v1135 = vsel %vm629, %v1094, 0
  %v1138 = vsel %vm629, %v1095, 0
  %vm1140 = vcmask 1041408
  %v1141 = vsel %vm1140, %v1120, 0
  %1143 = vmatpush.msra.mxu0 0.0
  %1144 = vmatpush.msra.mxu0 0.0
  %1145 = vmatpush.msra.mxu0 0.0
  %1146 = vmatpush.msra.mxu0 0.0
  %1147 = vmatpush.msra.mxu0 0.0
  %1148 = vmatpush.msra.mxu0 0.0
  %1149 = vmatpush.msra.mxu0 0.0
  %1150 = vmatpush.msra.mxu0 0.0
  %1151 = vmatpush.msra.mxu0 0.0
  %1152 = vmatpush.msra.mxu0 0.0
  %1153 = vmatpush.msra.mxu0 0.0
  %1154 = vmatpush.msra.mxu0 %v1141
  %1155 = vmatpush.msra.mxu0 %v1118
  %1156 = vmatpush.msra.mxu0 %v1116
  %1157 = vmatpush.msra.mxu0 %v1114
  %1158 = vmatpush.msra.mxu0 %v1112
  %1159 = vmatmul.f32.gmra.mxu0 %v1126
  %v1160 = vpop.f32.mrf.mxu0
  %v1161 = vadd.f32 0.0, %v1160
  %1162 = vmatmul.f32.gmra.mxu0 %v1129
  %v1163 = vpop.f32.mrf.mxu0
  %v1164 = vadd.f32 0.0, %v1163
  %1165 = vmatmul.f32.gmra.mxu0 %v1132
  %v1166 = vpop.f32.mrf.mxu0
  %v1167 = vadd.f32 0.0, %v1166
  %1168 = vmatmul.f32.gmra.mxu0 %v1135
  %v1169 = vpop.f32.mrf.mxu0
  %v1170 = vadd.f32 0.0, %v1169
  %1171 = vmatmul.f32.gmra.mxu0 %v1138
  %v1172 = vpop.f32.mrf.mxu0
  %v1173 = vadd.f32 0.0, %v1172
  %1174 = vdwg.mxu0
  %1175 = vrot.lane.b32.xlu0 %v311, 64
  %v1176 = vpop.permute.xlu0 %1175
  %1177 = vrot.lane.b32.xlu0 %v313, 64
  %v1178 = vpop.permute.xlu0 %1177
  %1179 = vrot.lane.b32.xlu0 %v315, 64
  %v1180 = vpop.permute.xlu0 %1179
  %1181 = vrot.lane.b32.xlu0 %v317, 64
  %v1182 = vpop.permute.xlu0 %1181
  %1183 = vrot.lane.b32.xlu0 %v319, 64
  %v1184 = vpop.permute.xlu0 %1183
  %v1190 = vsel %vm629, %v1096, 0
  %v1193 = vsel %vm629, %v1097, 0
  %v1196 = vsel %vm629, %v1098, 0
  %v1199 = vsel %vm629, %v1099, 0
  %v1202 = vsel %vm629, %v1100, 0
  %v1204 = vsel %vm1140, %v1184, 0
  %1206 = vmatpush.msra.mxu0 0.0
  %1207 = vmatpush.msra.mxu0 0.0
  %1208 = vmatpush.msra.mxu0 0.0
  %1209 = vmatpush.msra.mxu0 0.0
  %1210 = vmatpush.msra.mxu0 0.0
  %1211 = vmatpush.msra.mxu0 0.0
  %1212 = vmatpush.msra.mxu0 0.0
  %1213 = vmatpush.msra.mxu0 0.0
  %1214 = vmatpush.msra.mxu0 0.0
  %1215 = vmatpush.msra.mxu0 0.0
  %1216 = vmatpush.msra.mxu0 0.0
  %1217 = vmatpush.msra.mxu0 %v1204
  %1218 = vmatpush.msra.mxu0 %v1182
  %1219 = vmatpush.msra.mxu0 %v1180
  %1220 = vmatpush.msra.mxu0 %v1178
  %1221 = vmatpush.msra.mxu0 %v1176
  %1222 = vmatmul.f32.gmra.mxu0 %v1190
  %v1223 = vpop.f32.mrf.mxu0
  %v1224 = vadd.f32 0.0, %v1223
  %1225 = vmatmul.f32.gmra.mxu0 %v1193
  %v1226 = vpop.f32.mrf.mxu0
  %v1227 = vadd.f32 0.0, %v1226
  %1228 = vmatmul.f32.gmra.mxu0 %v1196
  %v1229 = vpop.f32.mrf.mxu0
  %v1230 = vadd.f32 0.0, %v1229
  %1231 = vmatmul.f32.gmra.mxu0 %v1199
  %v1232 = vpop.f32.mrf.mxu0
  %v1233 = vadd.f32 0.0, %v1232
  %1234 = vmatmul.f32.gmra.mxu0 %v1202
  %v1235 = vpop.f32.mrf.mxu0
  %v1236 = vadd.f32 0.0, %v1235
  %1237 = vdwg.mxu0
  %1238 = vrot.lane.b32.xlu0 %v321, 64
  %v1239 = vpop.permute.xlu0 %1238
  %1240 = vrot.lane.b32.xlu0 %v323, 64
  %v1241 = vpop.permute.xlu0 %1240
  %1242 = vrot.lane.b32.xlu0 %v325, 64
  %v1243 = vpop.permute.xlu0 %1242
  %1244 = vrot.lane.b32.xlu0 %v327, 64
  %v1245 = vpop.permute.xlu0 %1244
  %1246 = vrot.lane.b32.xlu0 %v329, 64
  %v1247 = vpop.permute.xlu0 %1246
  %v1253 = vsel %vm629, %v1101, 0
  %v1256 = vsel %vm629, %v1102, 0
  %v1259 = vsel %vm629, %v1103, 0
  %v1262 = vsel %vm629, %v1104, 0
  %v1265 = vsel %vm629, %v1105, 0
  %v1267 = vsel %vm1140, %v1247, 0
  %1269 = vmatpush.msra.mxu0 0.0
  %1270 = vmatpush.msra.mxu0 0.0
  %1271 = vmatpush.msra.mxu0 0.0
  %1272 = vmatpush.msra.mxu0 0.0
  %1273 = vmatpush.msra.mxu0 0.0
  %1274 = vmatpush.msra.mxu0 0.0
  %1275 = vmatpush.msra.mxu0 0.0
  %1276 = vmatpush.msra.mxu0 0.0
  %1277 = vmatpush.msra.mxu0 0.0
  %1278 = vmatpush.msra.mxu0 0.0
  %1279 = vmatpush.msra.mxu0 0.0
  %1280 = vmatpush.msra.mxu0 %v1267
  %1281 = vmatpush.msra.mxu0 %v1245
  %1282 = vmatpush.msra.mxu0 %v1243
  %1283 = vmatpush.msra.mxu0 %v1241
  %1284 = vmatpush.msra.mxu0 %v1239
  %1285 = vmatmul.f32.gmra.mxu0 %v1253
  %v1286 = vpop.f32.mrf.mxu0
  %v1287 = vadd.f32 0.0, %v1286
  %1288 = vmatmul.f32.gmra.mxu0 %v1256
  %v1289 = vpop.f32.mrf.mxu0
  %v1290 = vadd.f32 0.0, %v1289
  %1291 = vmatmul.f32.gmra.mxu0 %v1259
  %v1292 = vpop.f32.mrf.mxu0
  %v1293 = vadd.f32 0.0, %v1292
  %1294 = vmatmul.f32.gmra.mxu0 %v1262
  %v1295 = vpop.f32.mrf.mxu0
  %v1296 = vadd.f32 0.0, %v1295
  %1297 = vmatmul.f32.gmra.mxu0 %v1265
  %v1298 = vpop.f32.mrf.mxu0
  %v1299 = vadd.f32 0.0, %v1298
  %1300 = vdwg.mxu0
  %1301 = vrot.lane.b32.xlu0 %v331, 64
  %v1302 = vpop.permute.xlu0 %1301
  %1303 = vrot.lane.b32.xlu0 %v333, 64
  %v1304 = vpop.permute.xlu0 %1303
  %1305 = vrot.lane.b32.xlu0 %v335, 64
  %v1306 = vpop.permute.xlu0 %1305
  %1307 = vrot.lane.b32.xlu0 %v337, 64
  %v1308 = vpop.permute.xlu0 %1307
  %1309 = vrot.lane.b32.xlu0 %v339, 64
  %v1310 = vpop.permute.xlu0 %1309
  %v1316 = vsel %vm629, %v1106, 0
  %v1319 = vsel %vm629, %v1107, 0
  %v1322 = vsel %vm629, %v1108, 0
  %v1325 = vsel %vm629, %v1109, 0
  %v1328 = vsel %vm629, %v1110, 0
  %v1330 = vsel %vm1140, %v1310, 0
  %1332 = vmatpush.msra.mxu0 0.0
  %1333 = vmatpush.msra.mxu0 0.0
  %1334 = vmatpush.msra.mxu0 0.0
  %1335 = vmatpush.msra.mxu0 0.0
  %1336 = vmatpush.msra.mxu0 0.0
  %1337 = vmatpush.msra.mxu0 0.0
  %1338 = vmatpush.msra.mxu0 0.0
  %1339 = vmatpush.msra.mxu0 0.0
  %1340 = vmatpush.msra.mxu0 0.0
  %1341 = vmatpush.msra.mxu0 0.0
  %1342 = vmatpush.msra.mxu0 0.0
  %1343 = vmatpush.msra.mxu0 %v1330
  %1344 = vmatpush.msra.mxu0 %v1308
  %1345 = vmatpush.msra.mxu0 %v1306
  %1346 = vmatpush.msra.mxu0 %v1304
  %1347 = vmatpush.msra.mxu0 %v1302
  %1348 = vmatmul.f32.gmra.mxu0 %v1316
  %v1349 = vpop.f32.mrf.mxu0
  %v1350 = vadd.f32 0.0, %v1349
  %1351 = vmatmul.f32.gmra.mxu0 %v1319
  %v1352 = vpop.f32.mrf.mxu0
  %v1353 = vadd.f32 0.0, %v1352
  %1354 = vmatmul.f32.gmra.mxu0 %v1322
  %v1355 = vpop.f32.mrf.mxu0
  %v1356 = vadd.f32 0.0, %v1355
  %1357 = vmatmul.f32.gmra.mxu0 %v1325
  %v1358 = vpop.f32.mrf.mxu0
  %v1359 = vadd.f32 0.0, %v1358
  %1360 = vmatmul.f32.gmra.mxu0 %v1328
  %v1361 = vpop.f32.mrf.mxu0
  %v1362 = vadd.f32 0.0, %v1361
  %1363 = vdwg.mxu0
  %1369 = vrot.lane.b32.xlu0 %v1224, 8
  %v1370 = vpop.permute.xlu0 %1369
  %1371 = vrot.lane.b32.xlu0 %v1227, 8
  %v1372 = vpop.permute.xlu0 %1371
  %1373 = vrot.lane.b32.xlu0 %v1230, 8
  %v1374 = vpop.permute.xlu0 %1373
  %1375 = vrot.lane.b32.xlu0 %v1233, 8
  %v1376 = vpop.permute.xlu0 %1375
  %1377 = vrot.lane.b32.xlu0 %v1236, 8
  %v1378 = vpop.permute.xlu0 %1377
  %1389 = vrot.lane.b32.xlu0 %v1287, 16
  %v1390 = vpop.permute.xlu0 %1389
  %1391 = vrot.lane.b32.xlu0 %v1290, 16
  %v1392 = vpop.permute.xlu0 %1391
  %1393 = vrot.lane.b32.xlu0 %v1293, 16
  %v1394 = vpop.permute.xlu0 %1393
  %1395 = vrot.lane.b32.xlu0 %v1296, 16
  %v1396 = vpop.permute.xlu0 %1395
  %1397 = vrot.lane.b32.xlu0 %v1299, 16
  %v1398 = vpop.permute.xlu0 %1397
  %1409 = vrot.lane.b32.xlu0 %v1350, 24
  %v1410 = vpop.permute.xlu0 %1409
  %1411 = vrot.lane.b32.xlu0 %v1353, 24
  %v1412 = vpop.permute.xlu0 %1411
  %1413 = vrot.lane.b32.xlu0 %v1356, 24
  %v1414 = vpop.permute.xlu0 %1413
  %1415 = vrot.lane.b32.xlu0 %v1359, 24
  %v1416 = vpop.permute.xlu0 %1415
  %1417 = vrot.lane.b32.xlu0 %v1362, 24
  %v1418 = vpop.permute.xlu0 %1417
  %v1424 = vsel %vm350, %v1161, %v1370
  %v1425 = vsel %vm350, %v1164, %v1372
  %v1426 = vsel %vm350, %v1167, %v1374
  %v1427 = vsel %vm350, %v1170, %v1376
  %v1428 = vsel %vm350, %v1173, %v1378
  %vm1429 = vcmask 130048
  %v1430 = vsel %vm1429, %v1424, %v1390
  %v1431 = vsel %vm1429, %v1425, %v1392
  %v1432 = vsel %vm1429, %v1426, %v1394
  %v1433 = vsel %vm1429, %v1427, %v1396
  %v1434 = vsel %vm1429, %v1428, %v1398
  %vm1435 = vcmask 195584
  %v1436 = vsel %vm1435, %v1430, %v1410
  %v1437 = vsel %vm1435, %v1431, %v1412
  %v1438 = vsel %vm1435, %v1432, %v1414
  %v1439 = vsel %vm1435, %v1433, %v1416
  %v1440 = vsel %vm1435, %v1434, %v1418
  %v1441 = vpack.c.bf16 %v1437, %v1436
  %v1442 = vpack.c.bf16 %v1439, %v1438
  %v1443 = vpack.c.bf16 %v1440, %v1440
  %1444 = vrot.lane.b32.xlu0 %v269, 32
  %v1445 = vpop.permute.xlu0 %1444
  %1446 = vrot.lane.b32.xlu0 %v270, 32
  %v1447 = vpop.permute.xlu0 %1446
  %v1451 = vsel %vm123, %v1441, 0
  %v1454 = vsel %vm123, %v1442, 0
  %v1457 = vsel %vm123, %v1443, 0
  %1459 = vmatpush.bf16.msra.mxu0 0
  %1460 = vmatpush.bf16.msra.mxu0 0
  %1461 = vmatpush.bf16.msra.mxu0 0
  %1462 = vmatpush.bf16.msra.mxu0 0
  %1463 = vmatpush.bf16.msra.mxu0 0
  %1464 = vmatpush.bf16.msra.mxu0 0
  %1465 = vmatpush.bf16.msra.mxu0 %v1447
  %1466 = vmatpush.bf16.msra.mxu0 %v1445
  %1467 = vmatmul.bf16.gmra.mxu0 %v1451
  %v1468 = vpop.f32.mrf.mxu0
  %v1469 = vadd.f32 0.0, %v1468
  %v1470 = vpop.f32.mrf.mxu0
  %v1471 = vadd.f32 0.0, %v1470
  %1472 = vmatmul.bf16.gmra.mxu0 %v1454
  %v1473 = vpop.f32.mrf.mxu0
  %v1474 = vadd.f32 0.0, %v1473
  %v1475 = vpop.f32.mrf.mxu0
  %v1476 = vadd.f32 0.0, %v1475
  %1477 = vmatmul.bf16.gmra.mxu0 %v1457
  %v1478 = vpop.f32.mrf.mxu0
  %v1479 = vadd.f32 0.0, %v1478
  %v1480 = vpop.f32.mrf.mxu0
  %1481 = vdwg.mxu0
  %v1482 = vadd.f32 %v94, %v1469
  %v1483 = vadd.f32 %v96, %v1471
  %v1484 = vadd.f32 %v99, %v1474
  %v1485 = vadd.f32 %v101, %v1476
  %v1486 = vadd.f32 %v104, %v1479
  %v1487 = vperm.slane %v122, 0
  %1489 = vrot.lane.b32.xlu0 %v1487, 64
  %v1490 = vpop.permute.xlu0 %1489
  %v1492 = vadd.f32 %v1482, %v1490
  %v1493 = vadd.f32 %v1483, %v1490
  %v1494 = vadd.f32 %v1484, %v1490
  %v1495 = vadd.f32 %v1485, %v1490
  %v1496 = vadd.f32 %v1486, %v1490
  %v1497 = vsel %vm123, %v1492, 0.0
  %1498 = vadd.xlane.f32.xlu0 %v1497
  %v1499 = vpop.xlane.xlu0 %1498
  %v1500 = vsel %vm123, %v1493, 0.0
  %1501 = vadd.xlane.f32.xlu0 %v1500
  %v1502 = vpop.xlane.xlu0 %1501
  %v1503 = vsel %vm123, %v1494, 0.0
  %1504 = vadd.xlane.f32.xlu0 %v1503
  %v1505 = vpop.xlane.xlu0 %1504
  %v1506 = vsel %vm123, %v1495, 0.0
  %1507 = vadd.xlane.f32.xlu0 %v1506
  %v1508 = vpop.xlane.xlu0 %1507
  %v1509 = vsel %vm136, %v1496, 0.0
  %1510 = vadd.xlane.f32.xlu0 %v1509
  %v1511 = vpop.xlane.xlu0 %1510
  %v1512 = vmul.f32 %v1499, %v146
  %v1513 = vmul.f32 %v1502, %v146
  %v1514 = vmul.f32 %v1505, %v146
  %v1515 = vmul.f32 %v1508, %v146
  %v1516 = vmul.f32 %v1511, %v146
  %v1517 = vsub.f32 %v1492, %v1512
  %v1518 = vsub.f32 %v1493, %v1513
  %v1519 = vsub.f32 %v1494, %v1514
  %v1520 = vsub.f32 %v1495, %v1515
  %v1521 = vsub.f32 %v1496, %v1516
  %v1522 = vmul.f32 %v1517, %v1517
  %v1523 = vmul.f32 %v1518, %v1518
  %v1524 = vmul.f32 %v1519, %v1519
  %v1525 = vmul.f32 %v1520, %v1520
  %v1526 = vmul.f32 %v1521, %v1521
  %v1527 = vsel %vm123, %v1522, 0.0
  %1528 = vadd.xlane.f32.xlu0 %v1527
  %v1529 = vpop.xlane.xlu0 %1528
  %v1530 = vsel %vm123, %v1523, 0.0
  %1531 = vadd.xlane.f32.xlu0 %v1530
  %v1532 = vpop.xlane.xlu0 %1531
  %v1533 = vsel %vm123, %v1524, 0.0
  %1534 = vadd.xlane.f32.xlu0 %v1533
  %v1535 = vpop.xlane.xlu0 %1534
  %v1536 = vsel %vm123, %v1525, 0.0
  %1537 = vadd.xlane.f32.xlu0 %v1536
  %v1538 = vpop.xlane.xlu0 %1537
  %v1539 = vsel %vm136, %v1526, 0.0
  %1540 = vadd.xlane.f32.xlu0 %v1539
  %v1541 = vpop.xlane.xlu0 %1540
  %v1542 = vmul.f32 %v1529, %v146
  %v1543 = vmul.f32 %v1532, %v146
  %v1544 = vmul.f32 %v1535, %v146
  %v1545 = vmul.f32 %v1538, %v146
  %v1546 = vmul.f32 %v1541, %v146
  %v1547 = vadd.f32 %v1542, 1e-05
  %v1548 = vadd.f32 %v1543, 1e-05
  %v1549 = vadd.f32 %v1544, 1e-05
  %v1550 = vadd.f32 %v1545, 1e-05
  %v1551 = vadd.f32 %v1546, 1e-05
  %v1552 = vrsqrt.pop %v1547
  %v1553 = vmul.f32 %v1552, %v1547
  %v1554 = vmul.f32 %v1553, %v1552
  %v1555 = vmul.f32 0.5, %v1554
  %v1556 = vsub.f32 1.5, %v1555
  %v1557 = vmul.f32 %v1552, %v1556
  %vm1558 = vweird.f32 %v1547
  %vm1559 = vweird.f32 %v1552
  %vm1560 = vmor %vm1558, %vm1559
  %v1561 = vsel %vm1560, %v1552, %v1557
  %v1562 = vrsqrt.pop %v1548
  %v1563 = vmul.f32 %v1562, %v1548
  %v1564 = vmul.f32 %v1563, %v1562
  %v1565 = vmul.f32 0.5, %v1564
  %v1566 = vsub.f32 1.5, %v1565
  %v1567 = vmul.f32 %v1562, %v1566
  %vm1568 = vweird.f32 %v1548
  %vm1569 = vweird.f32 %v1562
  %vm1570 = vmor %vm1568, %vm1569
  %v1571 = vsel %vm1570, %v1562, %v1567
  %v1572 = vrsqrt.pop %v1549
  %v1573 = vmul.f32 %v1572, %v1549
  %v1574 = vmul.f32 %v1573, %v1572
  %v1575 = vmul.f32 0.5, %v1574
  %v1576 = vsub.f32 1.5, %v1575
  %v1577 = vmul.f32 %v1572, %v1576
  %vm1578 = vweird.f32 %v1549
  %vm1579 = vweird.f32 %v1572
  %vm1580 = vmor %vm1578, %vm1579
  %v1581 = vsel %vm1580, %v1572, %v1577
  %v1582 = vrsqrt.pop %v1550
  %v1583 = vmul.f32 %v1582, %v1550
  %v1584 = vmul.f32 %v1583, %v1582
  %v1585 = vmul.f32 0.5, %v1584
  %v1586 = vsub.f32 1.5, %v1585
  %v1587 = vmul.f32 %v1582, %v1586
  %vm1588 = vweird.f32 %v1550
  %vm1589 = vweird.f32 %v1582
  %vm1590 = vmor %vm1588, %vm1589
  %v1591 = vsel %vm1590, %v1582, %v1587
  %v1592 = vrsqrt.pop %v1551
  %v1593 = vmul.f32 %v1592, %v1551
  %v1594 = vmul.f32 %v1593, %v1592
  %v1595 = vmul.f32 0.5, %v1594
  %v1596 = vsub.f32 1.5, %v1595
  %v1597 = vmul.f32 %v1592, %v1596
  %vm1598 = vweird.f32 %v1551
  %vm1599 = vweird.f32 %v1592
  %vm1600 = vmor %vm1598, %vm1599
  %v1601 = vsel %vm1600, %v1592, %v1597
  %v1602 = vmul.f32 %v1517, %v1561
  %v1603 = vmul.f32 %v1518, %v1571
  %v1604 = vmul.f32 %v1519, %v1581
  %v1605 = vmul.f32 %v1520, %v1591
  %v1606 = vmul.f32 %v1521, %v1601
  %1607 = vrot.lane.b32.xlu0 %v242, 64
  %v1608 = vpop.permute.xlu0 %1607
  %v1610 = vmul.f32 %v1602, %v1608
  %v1611 = vmul.f32 %v1603, %v1608
  %v1612 = vmul.f32 %v1604, %v1608
  %v1613 = vmul.f32 %v1605, %v1608
  %v1614 = vmul.f32 %v1606, %v1608
  %1615 = vrot.lane.b32.xlu0 %v242, 32
  %v1616 = vpop.permute.xlu0 %1615
  %v1618 = vadd.f32 %v1610, %v1616
  %v1619 = vadd.f32 %v1611, %v1616
  %v1620 = vadd.f32 %v1612, %v1616
  %v1621 = vadd.f32 %v1613, %v1616
  %v1622 = vadd.f32 %v1614, %v1616
  %v1623 = vpack.c.bf16 %v1619, %v1618
  %v1624 = vpack.c.bf16 %v1621, %v1620
  %v1625 = vpack.c.bf16 %v1622, %v1622
  %v1630 = vunpack.c.l.b16 %v116
  %v1631 = vunpack.c.l.b16 %v117
  %v1632 = vunpack.c.l.b16 %v118
  %v1633 = vunpack.c.l.b16 %v119
  %v1634 = vpack.c.b16 %v1631, %v1630
  %v1635 = vpack.c.b16 %v1633, %v1632
  %v1639 = vsel %vm123, %v1623, 0
  %v1642 = vsel %vm123, %v1624, 0
  %v1645 = vsel %vm123, %v1625, 0
  %1647 = vmatpush.bf16.msra.mxu0 0
  %1648 = vmatpush.bf16.msra.mxu0 0
  %1649 = vmatpush.bf16.msra.mxu0 0
  %1650 = vmatpush.bf16.msra.mxu0 0
  %1651 = vmatpush.bf16.msra.mxu0 0
  %1652 = vmatpush.bf16.msra.mxu0 0
  %1653 = vmatpush.bf16.msra.mxu0 %v1635
  %1654 = vmatpush.bf16.msra.mxu0 %v1634
  %1655 = vmatmul.bf16.gmra.mxu0 %v1639
  %v1656 = vpop.f32.mrf.mxu0
  %v1657 = vadd.f32 %v1487, %v1656
  %v1658 = vpop.f32.mrf.mxu0
  %v1659 = vadd.f32 %v1487, %v1658
  %1660 = vmatmul.bf16.gmra.mxu0 %v1642
  %v1661 = vpop.f32.mrf.mxu0
  %v1662 = vadd.f32 %v1487, %v1661
  %v1663 = vpop.f32.mrf.mxu0
  %v1664 = vadd.f32 %v1487, %v1663
  %1665 = vmatmul.bf16.gmra.mxu0 %v1645
  %v1666 = vpop.f32.mrf.mxu0
  %v1667 = vadd.f32 %v1487, %v1666
  %v1668 = vpop.f32.mrf.mxu0
  %1669 = vdwg.mxu0
  %v1670 = vmul.f32 %v1657, 0.5
  %v1671 = vmul.f32 %v1659, 0.5
  %v1672 = vmul.f32 %v1662, 0.5
  %v1673 = vmul.f32 %v1664, 0.5
  %v1674 = vmul.f32 %v1667, 0.5
  %v1675 = vmul.f32 %v1657, 0.044715
  %v1676 = vmul.f32 %v1659, 0.044715
  %v1677 = vmul.f32 %v1662, 0.044715
  %v1678 = vmul.f32 %v1664, 0.044715
  %v1679 = vmul.f32 %v1667, 0.044715
  %v1680 = vmul.f32 %v1675, %v1657
  %v1681 = vmul.f32 %v1676, %v1659
  %v1682 = vmul.f32 %v1677, %v1662
  %v1683 = vmul.f32 %v1678, %v1664
  %v1684 = vmul.f32 %v1679, %v1667
  %v1685 = vmul.f32 %v1680, %v1657
  %v1686 = vmul.f32 %v1681, %v1659
  %v1687 = vmul.f32 %v1682, %v1662
  %v1688 = vmul.f32 %v1683, %v1664
  %v1689 = vmul.f32 %v1684, %v1667
  %v1690 = vadd.f32 %v1657, %v1685
  %v1691 = vadd.f32 %v1659, %v1686
  %v1692 = vadd.f32 %v1662, %v1687
  %v1693 = vadd.f32 %v1664, %v1688
  %v1694 = vadd.f32 %v1667, %v1689
  %v1695 = vmul.f32 %v1690, 0.7978846
  %v1696 = vmul.f32 %v1691, 0.7978846
  %v1697 = vmul.f32 %v1692, 0.7978846
  %v1698 = vmul.f32 %v1693, 0.7978846
  %v1699 = vmul.f32 %v1694, 0.7978846
  %v1700 = vtanh.pop %v1695
  %v1701 = vtanh.pop %v1696
  %v1702 = vtanh.pop %v1697
  %v1703 = vtanh.pop %v1698
  %v1704 = vtanh.pop %v1699
  %v1705 = vadd.f32 %v1700, 1.0
  %v1706 = vadd.f32 %v1701, 1.0
  %v1707 = vadd.f32 %v1702, 1.0
  %v1708 = vadd.f32 %v1703, 1.0
  %v1709 = vadd.f32 %v1704, 1.0
  %v1710 = vmul.f32 %v1670, %v1705
  %v1711 = vmul.f32 %v1671, %v1706
  %v1712 = vmul.f32 %v1672, %v1707
  %v1713 = vmul.f32 %v1673, %v1708
  %v1714 = vmul.f32 %v1674, %v1709
  %v1715 = vpack.c.bf16 %v1711, %v1710
  %v1716 = vpack.c.bf16 %v1713, %v1712
  %v1717 = vpack.c.bf16 %v1714, %v1714
  %1718 = vrot.lane.b32.xlu0 %v1634, 64
  %v1719 = vpop.permute.xlu0 %1718
  %1720 = vrot.lane.b32.xlu0 %v1635, 64
  %v1721 = vpop.permute.xlu0 %1720
  %vm1722 = vcmask 523264
  %v1724 = vsel %vm1722, %v1715, 0
  %v1727 = vsel %vm1722, %v1716, 0
  %v1730 = vsel %vm1722, %v1717, 0
  %v1733 = vsel %vm1722, %v1719, 0
  %v1736 = vsel %vm1722, %v1721, 0
  %1738 = vmatpush.bf16.xpose.msra.mxu0 0
  %1739 = vmatpush.bf16.xpose.msra.mxu0 0
  %1740 = vmatpush.bf16.xpose.msra.mxu0 0
  %1741 = vmatpush.bf16.xpose.msra.mxu0 0
  %1742 = vmatpush.bf16.xpose.msra.mxu0 0
  %1743 = vmatpush.bf16.xpose.msra.mxu0 0
  %1744 = vmatpush.bf16.xpose.msra.mxu0 %v1736
  %1745 = vmatpush.bf16.xpose.msra.mxu0 %v1733
  %1746 = vmatmul.bf16.gmra.mxu0 %v1724
  %v1747 = vpop.f32.mrf.mxu0
  %v1748 = vadd.f32 0.0, %v1747
  %v1749 = vpop.f32.mrf.mxu0
  %v1750 = vadd.f32 0.0, %v1749
  %1751 = vmatmul.bf16.gmra.mxu0 %v1727
  %v1752 = vpop.f32.mrf.mxu0
  %v1753 = vadd.f32 0.0, %v1752
  %v1754 = vpop.f32.mrf.mxu0
  %v1755 = vadd.f32 0.0, %v1754
  %1756 = vmatmul.bf16.gmra.mxu0 %v1730
  %v1757 = vpop.f32.mrf.mxu0
  %v1758 = vadd.f32 0.0, %v1757
  %v1759 = vpop.f32.mrf.mxu0
  %1760 = vdwg.mxu0
  %v1761 = vadd.f32 %v1492, %v1748
  %v1762 = vadd.f32 %v1493, %v1750
  %v1763 = vadd.f32 %v1494, %v1753
  %v1764 = vadd.f32 %v1495, %v1755
  %v1765 = vadd.f32 %v1496, %v1758
  %1766 = vrot.lane.b32.xlu0 %v1487, 32
  %v1767 = vpop.permute.xlu0 %1766
  %v1769 = vadd.f32 %v1761, %v1767
  %v1770 = vadd.f32 %v1762, %v1767
  %v1771 = vadd.f32 %v1763, %v1767
  %v1772 = vadd.f32 %v1764, %v1767
  %v1773 = vadd.f32 %v1765, %v1767
  %s1774 = scalar_lea.vmem %s4, 32
  %v1775 = vld [vmem:[%s1774] sm:$0xf]
  %v1776 = vld [vmem:[%s1774 + $0x4] sm:$0xf]
  %v1777 = vld [vmem:[%s1774 + $0x8] sm:$0xf]
  %v1778 = vld [vmem:[%s1774 + $0xc] sm:$0xf]
  %v1779 = vld [vmem:[%s1774 + $0x10] sm:$0xf]
  %v1780 = vld [vmem:[%s1774 + $0x14] sm:$0xf]
  %v1781 = vld [vmem:[%s1774 + $0x18] sm:$0xf]
  %v1782 = vld [vmem:[%s1774 + $0x1c] sm:$0xf]
  %s1783 = scalar_lea.vmem %s5, 4
  %v1784 = vld [vmem:[%s1783] sm:$0x1]
  %v1785 = vld [vmem:[%s1783 + $0x1] sm:$0x1]
  %v1786 = vld [vmem:[%s1783 + $0x2] sm:$0x1]
  %v1787 = vsel %vm123, %v1769, 0.0
  %1788 = vadd.xlane.f32.xlu0 %v1787
  %v1789 = vpop.xlane.xlu0 %1788
  %v1790 = vsel %vm123, %v1770, 0.0
  %1791 = vadd.xlane.f32.xlu0 %v1790
  %v1792 = vpop.xlane.xlu0 %1791
  %v1793 = vsel %vm123, %v1771, 0.0
  %1794 = vadd.xlane.f32.xlu0 %v1793
  %v1795 = vpop.xlane.xlu0 %1794
  %v1796 = vsel %vm123, %v1772, 0.0
  %1797 = vadd.xlane.f32.xlu0 %v1796
  %v1798 = vpop.xlane.xlu0 %1797
  %v1799 = vsel %vm136, %v1773, 0.0
  %1800 = vadd.xlane.f32.xlu0 %v1799
  %v1801 = vpop.xlane.xlu0 %1800
  %v1802 = vmul.f32 %v1789, %v146
  %v1803 = vmul.f32 %v1792, %v146
  %v1804 = vmul.f32 %v1795, %v146
  %v1805 = vmul.f32 %v1798, %v146
  %v1806 = vmul.f32 %v1801, %v146
  %v1807 = vsub.f32 %v1769, %v1802
  %v1808 = vsub.f32 %v1770, %v1803
  %v1809 = vsub.f32 %v1771, %v1804
  %v1810 = vsub.f32 %v1772, %v1805
  %v1811 = vsub.f32 %v1773, %v1806
  %v1812 = vmul.f32 %v1807, %v1807
  %v1813 = vmul.f32 %v1808, %v1808
  %v1814 = vmul.f32 %v1809, %v1809
  %v1815 = vmul.f32 %v1810, %v1810
  %v1816 = vmul.f32 %v1811, %v1811
  %v1817 = vsel %vm123, %v1812, 0.0
  %1818 = vadd.xlane.f32.xlu0 %v1817
  %v1819 = vpop.xlane.xlu0 %1818
  %v1820 = vsel %vm123, %v1813, 0.0
  %1821 = vadd.xlane.f32.xlu0 %v1820
  %v1822 = vpop.xlane.xlu0 %1821
  %v1823 = vsel %vm123, %v1814, 0.0
  %1824 = vadd.xlane.f32.xlu0 %v1823
  %v1825 = vpop.xlane.xlu0 %1824
  %v1826 = vsel %vm123, %v1815, 0.0
  %1827 = vadd.xlane.f32.xlu0 %v1826
  %v1828 = vpop.xlane.xlu0 %1827
  %v1829 = vsel %vm136, %v1816, 0.0
  %1830 = vadd.xlane.f32.xlu0 %v1829
  %v1831 = vpop.xlane.xlu0 %1830
  %v1832 = vmul.f32 %v1819, %v146
  %v1833 = vmul.f32 %v1822, %v146
  %v1834 = vmul.f32 %v1825, %v146
  %v1835 = vmul.f32 %v1828, %v146
  %v1836 = vmul.f32 %v1831, %v146
  %v1837 = vadd.f32 %v1832, 1e-05
  %v1838 = vadd.f32 %v1833, 1e-05
  %v1839 = vadd.f32 %v1834, 1e-05
  %v1840 = vadd.f32 %v1835, 1e-05
  %v1841 = vadd.f32 %v1836, 1e-05
  %v1842 = vrsqrt.pop %v1837
  %v1843 = vmul.f32 %v1842, %v1837
  %v1844 = vmul.f32 %v1843, %v1842
  %v1845 = vmul.f32 0.5, %v1844
  %v1846 = vsub.f32 1.5, %v1845
  %v1847 = vmul.f32 %v1842, %v1846
  %vm1848 = vweird.f32 %v1837
  %vm1849 = vweird.f32 %v1842
  %vm1850 = vmor %vm1848, %vm1849
  %v1851 = vsel %vm1850, %v1842, %v1847
  %v1852 = vrsqrt.pop %v1838
  %v1853 = vmul.f32 %v1852, %v1838
  %v1854 = vmul.f32 %v1853, %v1852
  %v1855 = vmul.f32 0.5, %v1854
  %v1856 = vsub.f32 1.5, %v1855
  %v1857 = vmul.f32 %v1852, %v1856
  %vm1858 = vweird.f32 %v1838
  %vm1859 = vweird.f32 %v1852
  %vm1860 = vmor %vm1858, %vm1859
  %v1861 = vsel %vm1860, %v1852, %v1857
  %v1862 = vrsqrt.pop %v1839
  %v1863 = vmul.f32 %v1862, %v1839
  %v1864 = vmul.f32 %v1863, %v1862
  %v1865 = vmul.f32 0.5, %v1864
  %v1866 = vsub.f32 1.5, %v1865
  %v1867 = vmul.f32 %v1862, %v1866
  %vm1868 = vweird.f32 %v1839
  %vm1869 = vweird.f32 %v1862
  %vm1870 = vmor %vm1868, %vm1869
  %v1871 = vsel %vm1870, %v1862, %v1867
  %v1872 = vrsqrt.pop %v1840
  %v1873 = vmul.f32 %v1872, %v1840
  %v1874 = vmul.f32 %v1873, %v1872
  %v1875 = vmul.f32 0.5, %v1874
  %v1876 = vsub.f32 1.5, %v1875
  %v1877 = vmul.f32 %v1872, %v1876
  %vm1878 = vweird.f32 %v1840
  %vm1879 = vweird.f32 %v1872
  %vm1880 = vmor %vm1878, %vm1879
  %v1881 = vsel %vm1880, %v1872, %v1877
  %v1882 = vrsqrt.pop %v1841
  %v1883 = vmul.f32 %v1882, %v1841
  %v1884 = vmul.f32 %v1883, %v1882
  %v1885 = vmul.f32 0.5, %v1884
  %v1886 = vsub.f32 1.5, %v1885
  %v1887 = vmul.f32 %v1882, %v1886
  %vm1888 = vweird.f32 %v1841
  %vm1889 = vweird.f32 %v1882
  %vm1890 = vmor %vm1888, %vm1889
  %v1891 = vsel %vm1890, %v1882, %v1887
  %v1892 = vmul.f32 %v1807, %v1851
  %v1893 = vmul.f32 %v1808, %v1861
  %v1894 = vmul.f32 %v1809, %v1871
  %v1895 = vmul.f32 %v1810, %v1881
  %v1896 = vmul.f32 %v1811, %v1891
  %v1897 = vperm.slane %v1785, 0
  %v1898 = vmul.f32 %v1892, %v1897
  %v1899 = vmul.f32 %v1893, %v1897
  %v1900 = vmul.f32 %v1894, %v1897
  %v1901 = vmul.f32 %v1895, %v1897
  %v1902 = vmul.f32 %v1896, %v1897
  %1904 = vrot.lane.b32.xlu0 %v1897, 96
  %v1905 = vpop.permute.xlu0 %1904
  %v1907 = vadd.f32 %v1898, %v1905
  %v1908 = vadd.f32 %v1899, %v1905
  %v1909 = vadd.f32 %v1900, %v1905
  %v1910 = vadd.f32 %v1901, %v1905
  %v1911 = vadd.f32 %v1902, %v1905
  %v1912 = vpack.c.bf16 %v1908, %v1907
  %v1913 = vpack.c.bf16 %v1910, %v1909
  %v1914 = vpack.c.bf16 %v1911, %v1911
  %v1915 = vperm.slane %v1784, 0
  %v1920 = vunpack.c.l.b16 %v1775
  %v1921 = vunpack.c.l.b16 %v1776
  %v1922 = vunpack.c.l.b16 %v1777
  %v1923 = vunpack.c.l.b16 %v1778
  %v1924 = vpack.c.b16 %v1921, %v1920
  %v1925 = vpack.c.b16 %v1923, %v1922
  %v1929 = vsel %vm123, %v1912, 0
  %v1932 = vsel %vm123, %v1913, 0
  %v1935 = vsel %vm123, %v1914, 0
  %1937 = vmatpush.bf16.msra.mxu0 0
  %1938 = vmatpush.bf16.msra.mxu0 0
  %1939 = vmatpush.bf16.msra.mxu0 0
  %1940 = vmatpush.bf16.msra.mxu0 0
  %1941 = vmatpush.bf16.msra.mxu0 0
  %1942 = vmatpush.bf16.msra.mxu0 0
  %1943 = vmatpush.bf16.msra.mxu0 %v1925
  %1944 = vmatpush.bf16.msra.mxu0 %v1924
  %1945 = vmatmul.bf16.gmra.mxu0 %v1929
  %v1946 = vpop.f32.mrf.mxu0
  %v1947 = vadd.f32 %v1915, %v1946
  %v1948 = vpop.f32.mrf.mxu0
  %v1949 = vadd.f32 %v1915, %v1948
  %1950 = vmatmul.bf16.gmra.mxu0 %v1932
  %v1951 = vpop.f32.mrf.mxu0
  %v1952 = vadd.f32 %v1915, %v1951
  %v1953 = vpop.f32.mrf.mxu0
  %v1954 = vadd.f32 %v1915, %v1953
  %1955 = vmatmul.bf16.gmra.mxu0 %v1935
  %v1956 = vpop.f32.mrf.mxu0
  %v1957 = vadd.f32 %v1915, %v1956
  %v1958 = vpop.f32.mrf.mxu0
  %1959 = vdwg.mxu0
  %1965 = vrot.lane.b32.xlu0 %v1947, 120
  %v1966 = vpop.permute.xlu0 %1965
  %1967 = vrot.lane.b32.xlu0 %v1949, 120
  %v1968 = vpop.permute.xlu0 %1967
  %1969 = vrot.lane.b32.xlu0 %v1952, 120
  %v1970 = vpop.permute.xlu0 %1969
  %1971 = vrot.lane.b32.xlu0 %v1954, 120
  %v1972 = vpop.permute.xlu0 %1971
  %1973 = vrot.lane.b32.xlu0 %v1957, 120
  %v1974 = vpop.permute.xlu0 %1973
  %1975 = vrot.lane.b32.xlu0 %v1947, 112
  %v1976 = vpop.permute.xlu0 %1975
  %1977 = vrot.lane.b32.xlu0 %v1949, 112
  %v1978 = vpop.permute.xlu0 %1977
  %1979 = vrot.lane.b32.xlu0 %v1952, 112
  %v1980 = vpop.permute.xlu0 %1979
  %1981 = vrot.lane.b32.xlu0 %v1954, 112
  %v1982 = vpop.permute.xlu0 %1981
  %1983 = vrot.lane.b32.xlu0 %v1957, 112
  %v1984 = vpop.permute.xlu0 %1983
  %1985 = vrot.lane.b32.xlu0 %v1947, 104
  %v1986 = vpop.permute.xlu0 %1985
  %1987 = vrot.lane.b32.xlu0 %v1949, 104
  %v1988 = vpop.permute.xlu0 %1987
  %1989 = vrot.lane.b32.xlu0 %v1952, 104
  %v1990 = vpop.permute.xlu0 %1989
  %1991 = vrot.lane.b32.xlu0 %v1954, 104
  %v1992 = vpop.permute.xlu0 %1991
  %1993 = vrot.lane.b32.xlu0 %v1957, 104
  %v1994 = vpop.permute.xlu0 %1993
  %1995 = vrot.lane.b32.xlu0 %v1947, 96
  %v1996 = vpop.permute.xlu0 %1995
  %1997 = vrot.lane.b32.xlu0 %v1949, 96
  %v1998 = vpop.permute.xlu0 %1997
  %1999 = vrot.lane.b32.xlu0 %v1952, 96
  %v2000 = vpop.permute.xlu0 %1999
  %2001 = vrot.lane.b32.xlu0 %v1954, 96
  %v2002 = vpop.permute.xlu0 %2001
  %2003 = vrot.lane.b32.xlu0 %v1957, 96
  %v2004 = vpop.permute.xlu0 %2003
  %v2005 = vsel %vm350, %v1947, 0
  %v2007 = vsel %vm350, %v1949, 0
  %v2009 = vsel %vm350, %v1952, 0
  %v2011 = vsel %vm350, %v1954, 0
  %v2013 = vsel %vm350, %v1957, 0
  %v2015 = vsel %vm350, %v1996, 0
  %v2017 = vsel %vm350, %v1998, 0
  %v2019 = vsel %vm350, %v2000, 0
  %v2021 = vsel %vm350, %v2002, 0
  %v2023 = vsel %vm350, %v2004, 0
  %2025 = vmatpush.xpose.msra.mxu0 0.0
  %2026 = vmatpush.xpose.msra.mxu0 0.0
  %2027 = vmatpush.xpose.msra.mxu0 0.0
  %2028 = vmatpush.xpose.msra.mxu0 0.0
  %2029 = vmatpush.xpose.msra.mxu0 0.0
  %2030 = vmatpush.xpose.msra.mxu0 0.0
  %2031 = vmatpush.xpose.msra.mxu0 0.0
  %2032 = vmatpush.xpose.msra.mxu0 0.0
  %2033 = vmatpush.xpose.msra.mxu0 0.0
  %2034 = vmatpush.xpose.msra.mxu0 0.0
  %2035 = vmatpush.xpose.msra.mxu0 0.0
  %2036 = vmatpush.xpose.msra.mxu0 %v2023
  %2037 = vmatpush.xpose.msra.mxu0 %v2021
  %2038 = vmatpush.xpose.msra.mxu0 %v2019
  %2039 = vmatpush.xpose.msra.mxu0 %v2017
  %2040 = vmatpush.xpose.msra.mxu0 %v2015
  %2041 = vmatmul.f32.gmra.mxu0 %v2005
  %v2042 = vpop.f32.mrf.mxu0
  %v2043 = vadd.f32 0.0, %v2042
  %2044 = vmatmul.f32.gmra.mxu0 %v2007
  %v2045 = vpop.f32.mrf.mxu0
  %v2046 = vadd.f32 0.0, %v2045
  %2047 = vmatmul.f32.gmra.mxu0 %v2009
  %v2048 = vpop.f32.mrf.mxu0
  %v2049 = vadd.f32 0.0, %v2048
  %2050 = vmatmul.f32.gmra.mxu0 %v2011
  %v2051 = vpop.f32.mrf.mxu0
  %v2052 = vadd.f32 0.0, %v2051
  %2053 = vmatmul.f32.gmra.mxu0 %v2013
  %v2054 = vpop.f32.mrf.mxu0
  %v2055 = vadd.f32 0.0, %v2054
  %2056 = vdwg.mxu0
  %2057 = vrot.lane.b32.xlu0 %v1966, 96
  %v2058 = vpop.permute.xlu0 %2057
  %2059 = vrot.lane.b32.xlu0 %v1968, 96
  %v2060 = vpop.permute.xlu0 %2059
  %2061 = vrot.lane.b32.xlu0 %v1970, 96
  %v2062 = vpop.permute.xlu0 %2061
  %2063 = vrot.lane.b32.xlu0 %v1972, 96
  %v2064 = vpop.permute.xlu0 %2063
  %2065 = vrot.lane.b32.xlu0 %v1974, 96
  %v2066 = vpop.permute.xlu0 %2065
  %v2067 = vsel %vm350, %v1966, 0
  %v2069 = vsel %vm350, %v1968, 0
  %v2071 = vsel %vm350, %v1970, 0
  %v2073 = vsel %vm350, %v1972, 0
  %v2075 = vsel %vm350, %v1974, 0
  %v2077 = vsel %vm350, %v2058, 0
  %v2079 = vsel %vm350, %v2060, 0
  %v2081 = vsel %vm350, %v2062, 0
  %v2083 = vsel %vm350, %v2064, 0
  %v2085 = vsel %vm350, %v2066, 0
  %2087 = vmatpush.xpose.msra.mxu0 0.0
  %2088 = vmatpush.xpose.msra.mxu0 0.0
  %2089 = vmatpush.xpose.msra.mxu0 0.0
  %2090 = vmatpush.xpose.msra.mxu0 0.0
  %2091 = vmatpush.xpose.msra.mxu0 0.0
  %2092 = vmatpush.xpose.msra.mxu0 0.0
  %2093 = vmatpush.xpose.msra.mxu0 0.0
  %2094 = vmatpush.xpose.msra.mxu0 0.0
  %2095 = vmatpush.xpose.msra.mxu0 0.0
  %2096 = vmatpush.xpose.msra.mxu0 0.0
  %2097 = vmatpush.xpose.msra.mxu0 0.0
  %2098 = vmatpush.xpose.msra.mxu0 %v2085
  %2099 = vmatpush.xpose.msra.mxu0 %v2083
  %2100 = vmatpush.xpose.msra.mxu0 %v2081
  %2101 = vmatpush.xpose.msra.mxu0 %v2079
  %2102 = vmatpush.xpose.msra.mxu0 %v2077
  %2103 = vmatmul.f32.gmra.mxu0 %v2067
  %v2104 = vpop.f32.mrf.mxu0
  %v2105 = vadd.f32 0.0, %v2104
  %2106 = vmatmul.f32.gmra.mxu0 %v2069
  %v2107 = vpop.f32.mrf.mxu0
  %v2108 = vadd.f32 0.0, %v2107
  %2109 = vmatmul.f32.gmra.mxu0 %v2071
  %v2110 = vpop.f32.mrf.mxu0
  %v2111 = vadd.f32 0.0, %v2110
  %2112 = vmatmul.f32.gmra.mxu0 %v2073
  %v2113 = vpop.f32.mrf.mxu0
  %v2114 = vadd.f32 0.0, %v2113
  %2115 = vmatmul.f32.gmra.mxu0 %v2075
  %v2116 = vpop.f32.mrf.mxu0
  %v2117 = vadd.f32 0.0, %v2116
  %2118 = vdwg.mxu0
  %2119 = vrot.lane.b32.xlu0 %v1976, 96
  %v2120 = vpop.permute.xlu0 %2119
  %2121 = vrot.lane.b32.xlu0 %v1978, 96
  %v2122 = vpop.permute.xlu0 %2121
  %2123 = vrot.lane.b32.xlu0 %v1980, 96
  %v2124 = vpop.permute.xlu0 %2123
  %2125 = vrot.lane.b32.xlu0 %v1982, 96
  %v2126 = vpop.permute.xlu0 %2125
  %2127 = vrot.lane.b32.xlu0 %v1984, 96
  %v2128 = vpop.permute.xlu0 %2127
  %v2129 = vsel %vm350, %v1976, 0
  %v2131 = vsel %vm350, %v1978, 0
  %v2133 = vsel %vm350, %v1980, 0
  %v2135 = vsel %vm350, %v1982, 0
  %v2137 = vsel %vm350, %v1984, 0
  %v2139 = vsel %vm350, %v2120, 0
  %v2141 = vsel %vm350, %v2122, 0
  %v2143 = vsel %vm350, %v2124, 0
  %v2145 = vsel %vm350, %v2126, 0
  %v2147 = vsel %vm350, %v2128, 0
  %2149 = vmatpush.xpose.msra.mxu0 0.0
  %2150 = vmatpush.xpose.msra.mxu0 0.0
  %2151 = vmatpush.xpose.msra.mxu0 0.0
  %2152 = vmatpush.xpose.msra.mxu0 0.0
  %2153 = vmatpush.xpose.msra.mxu0 0.0
  %2154 = vmatpush.xpose.msra.mxu0 0.0
  %2155 = vmatpush.xpose.msra.mxu0 0.0
  %2156 = vmatpush.xpose.msra.mxu0 0.0
  %2157 = vmatpush.xpose.msra.mxu0 0.0
  %2158 = vmatpush.xpose.msra.mxu0 0.0
  %2159 = vmatpush.xpose.msra.mxu0 0.0
  %2160 = vmatpush.xpose.msra.mxu0 %v2147
  %2161 = vmatpush.xpose.msra.mxu0 %v2145
  %2162 = vmatpush.xpose.msra.mxu0 %v2143
  %2163 = vmatpush.xpose.msra.mxu0 %v2141
  %2164 = vmatpush.xpose.msra.mxu0 %v2139
  %2165 = vmatmul.f32.gmra.mxu0 %v2129
  %v2166 = vpop.f32.mrf.mxu0
  %v2167 = vadd.f32 0.0, %v2166
  %2168 = vmatmul.f32.gmra.mxu0 %v2131
  %v2169 = vpop.f32.mrf.mxu0
  %v2170 = vadd.f32 0.0, %v2169
  %2171 = vmatmul.f32.gmra.mxu0 %v2133
  %v2172 = vpop.f32.mrf.mxu0
  %v2173 = vadd.f32 0.0, %v2172
  %2174 = vmatmul.f32.gmra.mxu0 %v2135
  %v2175 = vpop.f32.mrf.mxu0
  %v2176 = vadd.f32 0.0, %v2175
  %2177 = vmatmul.f32.gmra.mxu0 %v2137
  %v2178 = vpop.f32.mrf.mxu0
  %v2179 = vadd.f32 0.0, %v2178
  %2180 = vdwg.mxu0
  %2181 = vrot.lane.b32.xlu0 %v1986, 96
  %v2182 = vpop.permute.xlu0 %2181
  %2183 = vrot.lane.b32.xlu0 %v1988, 96
  %v2184 = vpop.permute.xlu0 %2183
  %2185 = vrot.lane.b32.xlu0 %v1990, 96
  %v2186 = vpop.permute.xlu0 %2185
  %2187 = vrot.lane.b32.xlu0 %v1992, 96
  %v2188 = vpop.permute.xlu0 %2187
  %2189 = vrot.lane.b32.xlu0 %v1994, 96
  %v2190 = vpop.permute.xlu0 %2189
  %v2191 = vsel %vm350, %v1986, 0
  %v2193 = vsel %vm350, %v1988, 0
  %v2195 = vsel %vm350, %v1990, 0
  %v2197 = vsel %vm350, %v1992, 0
  %v2199 = vsel %vm350, %v1994, 0
  %v2201 = vsel %vm350, %v2182, 0
  %v2203 = vsel %vm350, %v2184, 0
  %v2205 = vsel %vm350, %v2186, 0
  %v2207 = vsel %vm350, %v2188, 0
  %v2209 = vsel %vm350, %v2190, 0
  %2211 = vmatpush.xpose.msra.mxu0 0.0
  %2212 = vmatpush.xpose.msra.mxu0 0.0
  %2213 = vmatpush.xpose.msra.mxu0 0.0
  %2214 = vmatpush.xpose.msra.mxu0 0.0
  %2215 = vmatpush.xpose.msra.mxu0 0.0
  %2216 = vmatpush.xpose.msra.mxu0 0.0
  %2217 = vmatpush.xpose.msra.mxu0 0.0
  %2218 = vmatpush.xpose.msra.mxu0 0.0
  %2219 = vmatpush.xpose.msra.mxu0 0.0
  %2220 = vmatpush.xpose.msra.mxu0 0.0
  %2221 = vmatpush.xpose.msra.mxu0 0.0
  %2222 = vmatpush.xpose.msra.mxu0 %v2209
  %2223 = vmatpush.xpose.msra.mxu0 %v2207
  %2224 = vmatpush.xpose.msra.mxu0 %v2205
  %2225 = vmatpush.xpose.msra.mxu0 %v2203
  %2226 = vmatpush.xpose.msra.mxu0 %v2201
  %2227 = vmatmul.f32.gmra.mxu0 %v2191
  %v2228 = vpop.f32.mrf.mxu0
  %v2229 = vadd.f32 0.0, %v2228
  %2230 = vmatmul.f32.gmra.mxu0 %v2193
  %v2231 = vpop.f32.mrf.mxu0
  %v2232 = vadd.f32 0.0, %v2231
  %2233 = vmatmul.f32.gmra.mxu0 %v2195
  %v2234 = vpop.f32.mrf.mxu0
  %v2235 = vadd.f32 0.0, %v2234
  %2236 = vmatmul.f32.gmra.mxu0 %v2197
  %v2237 = vpop.f32.mrf.mxu0
  %v2238 = vadd.f32 0.0, %v2237
  %2239 = vmatmul.f32.gmra.mxu0 %v2199
  %v2240 = vpop.f32.mrf.mxu0
  %v2241 = vadd.f32 0.0, %v2240
  %2242 = vdwg.mxu0
  %v2243 = vmul.f32 %v2043, 0.35355338
  %v2244 = vmul.f32 %v2046, 0.35355338
  %v2245 = vmul.f32 %v2049, 0.35355338
  %v2246 = vmul.f32 %v2052, 0.35355338
  %v2247 = vmul.f32 %v2055, 0.35355338
  %v2248 = vmul.f32 %v2105, 0.35355338
  %v2249 = vmul.f32 %v2108, 0.35355338
  %v2250 = vmul.f32 %v2111, 0.35355338
  %v2251 = vmul.f32 %v2114, 0.35355338
  %v2252 = vmul.f32 %v2117, 0.35355338
  %v2253 = vmul.f32 %v2167, 0.35355338
  %v2254 = vmul.f32 %v2170, 0.35355338
  %v2255 = vmul.f32 %v2173, 0.35355338
  %v2256 = vmul.f32 %v2176, 0.35355338
  %v2257 = vmul.f32 %v2179, 0.35355338
  %v2258 = vmul.f32 %v2229, 0.35355338
  %v2259 = vmul.f32 %v2232, 0.35355338
  %v2260 = vmul.f32 %v2235, 0.35355338
  %v2261 = vmul.f32 %v2238, 0.35355338
  %v2262 = vmul.f32 %v2241, 0.35355338
  %v2263 = vadd.f32 %v2243, %v107
  %v2264 = vadd.f32 %v2244, %v108
  %v2265 = vadd.f32 %v2245, %v109
  %v2266 = vadd.f32 %v2246, %v110
  %v2267 = vadd.f32 %v2247, %v111
  %v2268 = vadd.f32 %v2248, %v107
  %v2269 = vadd.f32 %v2249, %v108
  %v2270 = vadd.f32 %v2250, %v109
  %v2271 = vadd.f32 %v2251, %v110
  %v2272 = vadd.f32 %v2252, %v111
  %v2273 = vadd.f32 %v2253, %v107
  %v2274 = vadd.f32 %v2254, %v108
  %v2275 = vadd.f32 %v2255, %v109
  %v2276 = vadd.f32 %v2256, %v110
  %v2277 = vadd.f32 %v2257, %v111
  %v2278 = vadd.f32 %v2258, %v107
  %v2279 = vadd.f32 %v2259, %v108
  %v2280 = vadd.f32 %v2260, %v109
  %v2281 = vadd.f32 %v2261, %v110
  %v2282 = vadd.f32 %v2262, %v111
  %v2283 = vsel %vm629, %v2263, -inf
  %2284 = vmax.xlane.f32.xlu0 %v2283
  %v2285 = vpop.xlane.xlu0 %2284
  %v2286 = vsel %vm629, %v2264, -inf
  %2287 = vmax.xlane.f32.xlu0 %v2286
  %v2288 = vpop.xlane.xlu0 %2287
  %v2289 = vsel %vm629, %v2265, -inf
  %2290 = vmax.xlane.f32.xlu0 %v2289
  %v2291 = vpop.xlane.xlu0 %2290
  %v2292 = vsel %vm629, %v2266, -inf
  %2293 = vmax.xlane.f32.xlu0 %v2292
  %v2294 = vpop.xlane.xlu0 %2293
  %v2295 = vsel %vm642, %v2267, -inf
  %2296 = vmax.xlane.f32.xlu0 %v2295
  %v2297 = vpop.xlane.xlu0 %2296
  %v2298 = vsel %vm629, %v2268, -inf
  %2299 = vmax.xlane.f32.xlu0 %v2298
  %v2300 = vpop.xlane.xlu0 %2299
  %v2301 = vsel %vm629, %v2269, -inf
  %2302 = vmax.xlane.f32.xlu0 %v2301
  %v2303 = vpop.xlane.xlu0 %2302
  %v2304 = vsel %vm629, %v2270, -inf
  %2305 = vmax.xlane.f32.xlu0 %v2304
  %v2306 = vpop.xlane.xlu0 %2305
  %v2307 = vsel %vm629, %v2271, -inf
  %2308 = vmax.xlane.f32.xlu0 %v2307
  %v2309 = vpop.xlane.xlu0 %2308
  %v2310 = vsel %vm642, %v2272, -inf
  %2311 = vmax.xlane.f32.xlu0 %v2310
  %v2312 = vpop.xlane.xlu0 %2311
  %v2313 = vsel %vm629, %v2273, -inf
  %2314 = vmax.xlane.f32.xlu0 %v2313
  %v2315 = vpop.xlane.xlu0 %2314
  %v2316 = vsel %vm629, %v2274, -inf
  %2317 = vmax.xlane.f32.xlu0 %v2316
  %v2318 = vpop.xlane.xlu0 %2317
  %v2319 = vsel %vm629, %v2275, -inf
  %2320 = vmax.xlane.f32.xlu0 %v2319
  %v2321 = vpop.xlane.xlu0 %2320
  %v2322 = vsel %vm629, %v2276, -inf
  %2323 = vmax.xlane.f32.xlu0 %v2322
  %v2324 = vpop.xlane.xlu0 %2323
  %v2325 = vsel %vm642, %v2277, -inf
  %2326 = vmax.xlane.f32.xlu0 %v2325
  %v2327 = vpop.xlane.xlu0 %2326
  %v2328 = vsel %vm629, %v2278, -inf
  %2329 = vmax.xlane.f32.xlu0 %v2328
  %v2330 = vpop.xlane.xlu0 %2329
  %v2331 = vsel %vm629, %v2279, -inf
  %2332 = vmax.xlane.f32.xlu0 %v2331
  %v2333 = vpop.xlane.xlu0 %2332
  %v2334 = vsel %vm629, %v2280, -inf
  %2335 = vmax.xlane.f32.xlu0 %v2334
  %v2336 = vpop.xlane.xlu0 %2335
  %v2337 = vsel %vm629, %v2281, -inf
  %2338 = vmax.xlane.f32.xlu0 %v2337
  %v2339 = vpop.xlane.xlu0 %2338
  %v2340 = vsel %vm642, %v2282, -inf
  %2341 = vmax.xlane.f32.xlu0 %v2340
  %v2342 = vpop.xlane.xlu0 %2341
  %v2343 = vsub.f32 %v2263, %v2285
  %v2344 = vsub.f32 %v2264, %v2288
  %v2345 = vsub.f32 %v2265, %v2291
  %v2346 = vsub.f32 %v2266, %v2294
  %v2347 = vsub.f32 %v2267, %v2297
  %v2348 = vsub.f32 %v2268, %v2300
  %v2349 = vsub.f32 %v2269, %v2303
  %v2350 = vsub.f32 %v2270, %v2306
  %v2351 = vsub.f32 %v2271, %v2309
  %v2352 = vsub.f32 %v2272, %v2312
  %v2353 = vsub.f32 %v2273, %v2315
  %v2354 = vsub.f32 %v2274, %v2318
  %v2355 = vsub.f32 %v2275, %v2321
  %v2356 = vsub.f32 %v2276, %v2324
  %v2357 = vsub.f32 %v2277, %v2327
  %v2358 = vsub.f32 %v2278, %v2330
  %v2359 = vsub.f32 %v2279, %v2333
  %v2360 = vsub.f32 %v2280, %v2336
  %v2361 = vsub.f32 %v2281, %v2339
  %v2362 = vsub.f32 %v2282, %v2342
  %v2363 = vmul.f32 %v2343, 1.442695
  %v2364 = vpow.pop %v2363
  %v2365 = vmul.f32 %v2344, 1.442695
  %v2366 = vpow.pop %v2365
  %v2367 = vmul.f32 %v2345, 1.442695
  %v2368 = vpow.pop %v2367
  %v2369 = vmul.f32 %v2346, 1.442695
  %v2370 = vpow.pop %v2369
  %v2371 = vmul.f32 %v2347, 1.442695
  %v2372 = vpow.pop %v2371
  %v2373 = vmul.f32 %v2348, 1.442695
  %v2374 = vpow.pop %v2373
  %v2375 = vmul.f32 %v2349, 1.442695
  %v2376 = vpow.pop %v2375
  %v2377 = vmul.f32 %v2350, 1.442695
  %v2378 = vpow.pop %v2377
  %v2379 = vmul.f32 %v2351, 1.442695
  %v2380 = vpow.pop %v2379
  %v2381 = vmul.f32 %v2352, 1.442695
  %v2382 = vpow.pop %v2381
  %v2383 = vmul.f32 %v2353, 1.442695
  %v2384 = vpow.pop %v2383
  %v2385 = vmul.f32 %v2354, 1.442695
  %v2386 = vpow.pop %v2385
  %v2387 = vmul.f32 %v2355, 1.442695
  %v2388 = vpow.pop %v2387
  %v2389 = vmul.f32 %v2356, 1.442695
  %v2390 = vpow.pop %v2389
  %v2391 = vmul.f32 %v2357, 1.442695
  %v2392 = vpow.pop %v2391
  %v2393 = vmul.f32 %v2358, 1.442695
  %v2394 = vpow.pop %v2393
  %v2395 = vmul.f32 %v2359, 1.442695
  %v2396 = vpow.pop %v2395
  %v2397 = vmul.f32 %v2360, 1.442695
  %v2398 = vpow.pop %v2397
  %v2399 = vmul.f32 %v2361, 1.442695
  %v2400 = vpow.pop %v2399
  %v2401 = vmul.f32 %v2362, 1.442695
  %v2402 = vpow.pop %v2401
  %v2403 = vsel %vm629, %v2364, 0.0
  %2404 = vadd.xlane.f32.xlu0 %v2403
  %v2405 = vpop.xlane.xlu0 %2404
  %v2406 = vsel %vm629, %v2366, 0.0
  %2407 = vadd.xlane.f32.xlu0 %v2406
  %v2408 = vpop.xlane.xlu0 %2407
  %v2409 = vsel %vm629, %v2368, 0.0
  %2410 = vadd.xlane.f32.xlu0 %v2409
  %v2411 = vpop.xlane.xlu0 %2410
  %v2412 = vsel %vm629, %v2370, 0.0
  %2413 = vadd.xlane.f32.xlu0 %v2412
  %v2414 = vpop.xlane.xlu0 %2413
  %v2415 = vsel %vm642, %v2372, 0.0
  %2416 = vadd.xlane.f32.xlu0 %v2415
  %v2417 = vpop.xlane.xlu0 %2416
  %v2418 = vsel %vm629, %v2374, 0.0
  %2419 = vadd.xlane.f32.xlu0 %v2418
  %v2420 = vpop.xlane.xlu0 %2419
  %v2421 = vsel %vm629, %v2376, 0.0
  %2422 = vadd.xlane.f32.xlu0 %v2421
  %v2423 = vpop.xlane.xlu0 %2422
  %v2424 = vsel %vm629, %v2378, 0.0
  %2425 = vadd.xlane.f32.xlu0 %v2424
  %v2426 = vpop.xlane.xlu0 %2425
  %v2427 = vsel %vm629, %v2380, 0.0
  %2428 = vadd.xlane.f32.xlu0 %v2427
  %v2429 = vpop.xlane.xlu0 %2428
  %v2430 = vsel %vm642, %v2382, 0.0
  %2431 = vadd.xlane.f32.xlu0 %v2430
  %v2432 = vpop.xlane.xlu0 %2431
  %v2433 = vsel %vm629, %v2384, 0.0
  %2434 = vadd.xlane.f32.xlu0 %v2433
  %v2435 = vpop.xlane.xlu0 %2434
  %v2436 = vsel %vm629, %v2386, 0.0
  %2437 = vadd.xlane.f32.xlu0 %v2436
  %v2438 = vpop.xlane.xlu0 %2437
  %v2439 = vsel %vm629, %v2388, 0.0
  %2440 = vadd.xlane.f32.xlu0 %v2439
  %v2441 = vpop.xlane.xlu0 %2440
  %v2442 = vsel %vm629, %v2390, 0.0
  %2443 = vadd.xlane.f32.xlu0 %v2442
  %v2444 = vpop.xlane.xlu0 %2443
  %v2445 = vsel %vm642, %v2392, 0.0
  %2446 = vadd.xlane.f32.xlu0 %v2445
  %v2447 = vpop.xlane.xlu0 %2446
  %v2448 = vsel %vm629, %v2394, 0.0
  %2449 = vadd.xlane.f32.xlu0 %v2448
  %v2450 = vpop.xlane.xlu0 %2449
  %v2451 = vsel %vm629, %v2396, 0.0
  %2452 = vadd.xlane.f32.xlu0 %v2451
  %v2453 = vpop.xlane.xlu0 %2452
  %v2454 = vsel %vm629, %v2398, 0.0
  %2455 = vadd.xlane.f32.xlu0 %v2454
  %v2456 = vpop.xlane.xlu0 %2455
  %v2457 = vsel %vm629, %v2400, 0.0
  %2458 = vadd.xlane.f32.xlu0 %v2457
  %v2459 = vpop.xlane.xlu0 %2458
  %v2460 = vsel %vm642, %v2402, 0.0
  %2461 = vadd.xlane.f32.xlu0 %v2460
  %v2462 = vpop.xlane.xlu0 %2461
  %v2463 = vrcp.pop %v2405
  %v2464 = vmul.f32 %v2405, %v2463
  %v2465 = vsub.f32 1.0, %v2464
  %v2466 = vmul.f32 %v2463, %v2465
  %v2467 = vadd.f32 %v2463, %v2466
  %vm2468 = vweird.f32 %v2405
  %vm2469 = vweird.f32 %v2463
  %vm2470 = vmor %vm2468, %vm2469
  %v2471 = vsel %vm2470, %v2463, %v2467
  %v2472 = vand.u32 2147483647, %v2405
  %vm2473 = vcmp.eq.f32.partialorder %v2472, 8.507059e+37
  %v2474 = vand.u32 %v2405, 2147483648
  %v2475 = vor.u32 1.1754944e-38, %v2474
  %v2476 = vsel %vm2473, %v2475, %v2471
  %v2477 = vrcp.pop %v2408
  %v2478 = vmul.f32 %v2408, %v2477
  %v2479 = vsub.f32 1.0, %v2478
  %v2480 = vmul.f32 %v2477, %v2479
  %v2481 = vadd.f32 %v2477, %v2480
  %vm2482 = vweird.f32 %v2408
  %vm2483 = vweird.f32 %v2477
  %vm2484 = vmor %vm2482, %vm2483
  %v2485 = vsel %vm2484, %v2477, %v2481
  %v2486 = vand.u32 2147483647, %v2408
  %vm2487 = vcmp.eq.f32.partialorder %v2486, 8.507059e+37
  %v2488 = vand.u32 %v2408, 2147483648
  %v2489 = vor.u32 1.1754944e-38, %v2488
  %v2490 = vsel %vm2487, %v2489, %v2485
  %v2491 = vrcp.pop %v2411
  %v2492 = vmul.f32 %v2411, %v2491
  %v2493 = vsub.f32 1.0, %v2492
  %v2494 = vmul.f32 %v2491, %v2493
  %v2495 = vadd.f32 %v2491, %v2494
  %vm2496 = vweird.f32 %v2411
  %vm2497 = vweird.f32 %v2491
  %vm2498 = vmor %vm2496, %vm2497
  %v2499 = vsel %vm2498, %v2491, %v2495
  %v2500 = vand.u32 2147483647, %v2411
  %vm2501 = vcmp.eq.f32.partialorder %v2500, 8.507059e+37
  %v2502 = vand.u32 %v2411, 2147483648
  %v2503 = vor.u32 1.1754944e-38, %v2502
  %v2504 = vsel %vm2501, %v2503, %v2499
  %v2505 = vrcp.pop %v2414
  %v2506 = vmul.f32 %v2414, %v2505
  %v2507 = vsub.f32 1.0, %v2506
  %v2508 = vmul.f32 %v2505, %v2507
  %v2509 = vadd.f32 %v2505, %v2508
  %vm2510 = vweird.f32 %v2414
  %vm2511 = vweird.f32 %v2505
  %vm2512 = vmor %vm2510, %vm2511
  %v2513 = vsel %vm2512, %v2505, %v2509
  %v2514 = vand.u32 2147483647, %v2414
  %vm2515 = vcmp.eq.f32.partialorder %v2514, 8.507059e+37
  %v2516 = vand.u32 %v2414, 2147483648
  %v2517 = vor.u32 1.1754944e-38, %v2516
  %v2518 = vsel %vm2515, %v2517, %v2513
  %v2519 = vrcp.pop %v2417
  %v2520 = vmul.f32 %v2417, %v2519
  %v2521 = vsub.f32 1.0, %v2520
  %v2522 = vmul.f32 %v2519, %v2521
  %v2523 = vadd.f32 %v2519, %v2522
  %vm2524 = vweird.f32 %v2417
  %vm2525 = vweird.f32 %v2519
  %vm2526 = vmor %vm2524, %vm2525
  %v2527 = vsel %vm2526, %v2519, %v2523
  %v2528 = vand.u32 2147483647, %v2417
  %vm2529 = vcmp.eq.f32.partialorder %v2528, 8.507059e+37
  %v2530 = vand.u32 %v2417, 2147483648
  %v2531 = vor.u32 1.1754944e-38, %v2530
  %v2532 = vsel %vm2529, %v2531, %v2527
  %v2533 = vrcp.pop %v2420
  %v2534 = vmul.f32 %v2420, %v2533
  %v2535 = vsub.f32 1.0, %v2534
  %v2536 = vmul.f32 %v2533, %v2535
  %v2537 = vadd.f32 %v2533, %v2536
  %vm2538 = vweird.f32 %v2420
  %vm2539 = vweird.f32 %v2533
  %vm2540 = vmor %vm2538, %vm2539
  %v2541 = vsel %vm2540, %v2533, %v2537
  %v2542 = vand.u32 2147483647, %v2420
  %vm2543 = vcmp.eq.f32.partialorder %v2542, 8.507059e+37
  %v2544 = vand.u32 %v2420, 2147483648
  %v2545 = vor.u32 1.1754944e-38, %v2544
  %v2546 = vsel %vm2543, %v2545, %v2541
  %v2547 = vrcp.pop %v2423
  %v2548 = vmul.f32 %v2423, %v2547
  %v2549 = vsub.f32 1.0, %v2548
  %v2550 = vmul.f32 %v2547, %v2549
  %v2551 = vadd.f32 %v2547, %v2550
  %vm2552 = vweird.f32 %v2423
  %vm2553 = vweird.f32 %v2547
  %vm2554 = vmor %vm2552, %vm2553
  %v2555 = vsel %vm2554, %v2547, %v2551
  %v2556 = vand.u32 2147483647, %v2423
  %vm2557 = vcmp.eq.f32.partialorder %v2556, 8.507059e+37
  %v2558 = vand.u32 %v2423, 2147483648
  %v2559 = vor.u32 1.1754944e-38, %v2558
  %v2560 = vsel %vm2557, %v2559, %v2555
  %v2561 = vrcp.pop %v2426
  %v2562 = vmul.f32 %v2426, %v2561
  %v2563 = vsub.f32 1.0, %v2562
  %v2564 = vmul.f32 %v2561, %v2563
  %v2565 = vadd.f32 %v2561, %v2564
  %vm2566 = vweird.f32 %v2426
  %vm2567 = vweird.f32 %v2561
  %vm2568 = vmor %vm2566, %vm2567
  %v2569 = vsel %vm2568, %v2561, %v2565
  %v2570 = vand.u32 2147483647, %v2426
  %vm2571 = vcmp.eq.f32.partialorder %v2570, 8.507059e+37
  %v2572 = vand.u32 %v2426, 2147483648
  %v2573 = vor.u32 1.1754944e-38, %v2572
  %v2574 = vsel %vm2571, %v2573, %v2569
  %v2575 = vrcp.pop %v2429
  %v2576 = vmul.f32 %v2429, %v2575
  %v2577 = vsub.f32 1.0, %v2576
  %v2578 = vmul.f32 %v2575, %v2577
  %v2579 = vadd.f32 %v2575, %v2578
  %vm2580 = vweird.f32 %v2429
  %vm2581 = vweird.f32 %v2575
  %vm2582 = vmor %vm2580, %vm2581
  %v2583 = vsel %vm2582, %v2575, %v2579
  %v2584 = vand.u32 2147483647, %v2429
  %vm2585 = vcmp.eq.f32.partialorder %v2584, 8.507059e+37
  %v2586 = vand.u32 %v2429, 2147483648
  %v2587 = vor.u32 1.1754944e-38, %v2586
  %v2588 = vsel %vm2585, %v2587, %v2583
  %v2589 = vrcp.pop %v2432
  %v2590 = vmul.f32 %v2432, %v2589
  %v2591 = vsub.f32 1.0, %v2590
  %v2592 = vmul.f32 %v2589, %v2591
  %v2593 = vadd.f32 %v2589, %v2592
  %vm2594 = vweird.f32 %v2432
  %vm2595 = vweird.f32 %v2589
  %vm2596 = vmor %vm2594, %vm2595
  %v2597 = vsel %vm2596, %v2589, %v2593
  %v2598 = vand.u32 2147483647, %v2432
  %vm2599 = vcmp.eq.f32.partialorder %v2598, 8.507059e+37
  %v2600 = vand.u32 %v2432, 2147483648
  %v2601 = vor.u32 1.1754944e-38, %v2600
  %v2602 = vsel %vm2599, %v2601, %v2597
  %v2603 = vrcp.pop %v2435
  %v2604 = vmul.f32 %v2435, %v2603
  %v2605 = vsub.f32 1.0, %v2604
  %v2606 = vmul.f32 %v2603, %v2605
  %v2607 = vadd.f32 %v2603, %v2606
  %vm2608 = vweird.f32 %v2435
  %vm2609 = vweird.f32 %v2603
  %vm2610 = vmor %vm2608, %vm2609
  %v2611 = vsel %vm2610, %v2603, %v2607
  %v2612 = vand.u32 2147483647, %v2435
  %vm2613 = vcmp.eq.f32.partialorder %v2612, 8.507059e+37
  %v2614 = vand.u32 %v2435, 2147483648
  %v2615 = vor.u32 1.1754944e-38, %v2614
  %v2616 = vsel %vm2613, %v2615, %v2611
  %v2617 = vrcp.pop %v2438
  %v2618 = vmul.f32 %v2438, %v2617
  %v2619 = vsub.f32 1.0, %v2618
  %v2620 = vmul.f32 %v2617, %v2619
  %v2621 = vadd.f32 %v2617, %v2620
  %vm2622 = vweird.f32 %v2438
  %vm2623 = vweird.f32 %v2617
  %vm2624 = vmor %vm2622, %vm2623
  %v2625 = vsel %vm2624, %v2617, %v2621
  %v2626 = vand.u32 2147483647, %v2438
  %vm2627 = vcmp.eq.f32.partialorder %v2626, 8.507059e+37
  %v2628 = vand.u32 %v2438, 2147483648
  %v2629 = vor.u32 1.1754944e-38, %v2628
  %v2630 = vsel %vm2627, %v2629, %v2625
  %v2631 = vrcp.pop %v2441
  %v2632 = vmul.f32 %v2441, %v2631
  %v2633 = vsub.f32 1.0, %v2632
  %v2634 = vmul.f32 %v2631, %v2633
  %v2635 = vadd.f32 %v2631, %v2634
  %vm2636 = vweird.f32 %v2441
  %vm2637 = vweird.f32 %v2631
  %vm2638 = vmor %vm2636, %vm2637
  %v2639 = vsel %vm2638, %v2631, %v2635
  %v2640 = vand.u32 2147483647, %v2441
  %vm2641 = vcmp.eq.f32.partialorder %v2640, 8.507059e+37
  %v2642 = vand.u32 %v2441, 2147483648
  %v2643 = vor.u32 1.1754944e-38, %v2642
  %v2644 = vsel %vm2641, %v2643, %v2639
  %v2645 = vrcp.pop %v2444
  %v2646 = vmul.f32 %v2444, %v2645
  %v2647 = vsub.f32 1.0, %v2646
  %v2648 = vmul.f32 %v2645, %v2647
  %v2649 = vadd.f32 %v2645, %v2648
  %vm2650 = vweird.f32 %v2444
  %vm2651 = vweird.f32 %v2645
  %vm2652 = vmor %vm2650, %vm2651
  %v2653 = vsel %vm2652, %v2645, %v2649
  %v2654 = vand.u32 2147483647, %v2444
  %vm2655 = vcmp.eq.f32.partialorder %v2654, 8.507059e+37
  %v2656 = vand.u32 %v2444, 2147483648
  %v2657 = vor.u32 1.1754944e-38, %v2656
  %v2658 = vsel %vm2655, %v2657, %v2653
  %v2659 = vrcp.pop %v2447
  %v2660 = vmul.f32 %v2447, %v2659
  %v2661 = vsub.f32 1.0, %v2660
  %v2662 = vmul.f32 %v2659, %v2661
  %v2663 = vadd.f32 %v2659, %v2662
  %vm2664 = vweird.f32 %v2447
  %vm2665 = vweird.f32 %v2659
  %vm2666 = vmor %vm2664, %vm2665
  %v2667 = vsel %vm2666, %v2659, %v2663
  %v2668 = vand.u32 2147483647, %v2447
  %vm2669 = vcmp.eq.f32.partialorder %v2668, 8.507059e+37
  %v2670 = vand.u32 %v2447, 2147483648
  %v2671 = vor.u32 1.1754944e-38, %v2670
  %v2672 = vsel %vm2669, %v2671, %v2667
  %v2673 = vrcp.pop %v2450
  %v2674 = vmul.f32 %v2450, %v2673
  %v2675 = vsub.f32 1.0, %v2674
  %v2676 = vmul.f32 %v2673, %v2675
  %v2677 = vadd.f32 %v2673, %v2676
  %vm2678 = vweird.f32 %v2450
  %vm2679 = vweird.f32 %v2673
  %vm2680 = vmor %vm2678, %vm2679
  %v2681 = vsel %vm2680, %v2673, %v2677
  %v2682 = vand.u32 2147483647, %v2450
  %vm2683 = vcmp.eq.f32.partialorder %v2682, 8.507059e+37
  %v2684 = vand.u32 %v2450, 2147483648
  %v2685 = vor.u32 1.1754944e-38, %v2684
  %v2686 = vsel %vm2683, %v2685, %v2681
  %v2687 = vrcp.pop %v2453
  %v2688 = vmul.f32 %v2453, %v2687
  %v2689 = vsub.f32 1.0, %v2688
  %v2690 = vmul.f32 %v2687, %v2689
  %v2691 = vadd.f32 %v2687, %v2690
  %vm2692 = vweird.f32 %v2453
  %vm2693 = vweird.f32 %v2687
  %vm2694 = vmor %vm2692, %vm2693
  %v2695 = vsel %vm2694, %v2687, %v2691
  %v2696 = vand.u32 2147483647, %v2453
  %vm2697 = vcmp.eq.f32.partialorder %v2696, 8.507059e+37
  %v2698 = vand.u32 %v2453, 2147483648
  %v2699 = vor.u32 1.1754944e-38, %v2698
  %v2700 = vsel %vm2697, %v2699, %v2695
  %v2701 = vrcp.pop %v2456
  %v2702 = vmul.f32 %v2456, %v2701
  %v2703 = vsub.f32 1.0, %v2702
  %v2704 = vmul.f32 %v2701, %v2703
  %v2705 = vadd.f32 %v2701, %v2704
  %vm2706 = vweird.f32 %v2456
  %vm2707 = vweird.f32 %v2701
  %vm2708 = vmor %vm2706, %vm2707
  %v2709 = vsel %vm2708, %v2701, %v2705
  %v2710 = vand.u32 2147483647, %v2456
  %vm2711 = vcmp.eq.f32.partialorder %v2710, 8.507059e+37
  %v2712 = vand.u32 %v2456, 2147483648
  %v2713 = vor.u32 1.1754944e-38, %v2712
  %v2714 = vsel %vm2711, %v2713, %v2709
  %v2715 = vrcp.pop %v2459
  %v2716 = vmul.f32 %v2459, %v2715
  %v2717 = vsub.f32 1.0, %v2716
  %v2718 = vmul.f32 %v2715, %v2717
  %v2719 = vadd.f32 %v2715, %v2718
  %vm2720 = vweird.f32 %v2459
  %vm2721 = vweird.f32 %v2715
  %vm2722 = vmor %vm2720, %vm2721
  %v2723 = vsel %vm2722, %v2715, %v2719
  %v2724 = vand.u32 2147483647, %v2459
  %vm2725 = vcmp.eq.f32.partialorder %v2724, 8.507059e+37
  %v2726 = vand.u32 %v2459, 2147483648
  %v2727 = vor.u32 1.1754944e-38, %v2726
  %v2728 = vsel %vm2725, %v2727, %v2723
  %v2729 = vrcp.pop %v2462
  %v2730 = vmul.f32 %v2462, %v2729
  %v2731 = vsub.f32 1.0, %v2730
  %v2732 = vmul.f32 %v2729, %v2731
  %v2733 = vadd.f32 %v2729, %v2732
  %vm2734 = vweird.f32 %v2462
  %vm2735 = vweird.f32 %v2729
  %vm2736 = vmor %vm2734, %vm2735
  %v2737 = vsel %vm2736, %v2729, %v2733
  %v2738 = vand.u32 2147483647, %v2462
  %vm2739 = vcmp.eq.f32.partialorder %v2738, 8.507059e+37
  %v2740 = vand.u32 %v2462, 2147483648
  %v2741 = vor.u32 1.1754944e-38, %v2740
  %v2742 = vsel %vm2739, %v2741, %v2737
  %v2743 = vmul.f32 %v2364, %v2476
  %v2744 = vmul.f32 %v2366, %v2490
  %v2745 = vmul.f32 %v2368, %v2504
  %v2746 = vmul.f32 %v2370, %v2518
  %v2747 = vmul.f32 %v2372, %v2532
  %v2748 = vmul.f32 %v2374, %v2546
  %v2749 = vmul.f32 %v2376, %v2560
  %v2750 = vmul.f32 %v2378, %v2574
  %v2751 = vmul.f32 %v2380, %v2588
  %v2752 = vmul.f32 %v2382, %v2602
  %v2753 = vmul.f32 %v2384, %v2616
  %v2754 = vmul.f32 %v2386, %v2630
  %v2755 = vmul.f32 %v2388, %v2644
  %v2756 = vmul.f32 %v2390, %v2658
  %v2757 = vmul.f32 %v2392, %v2672
  %v2758 = vmul.f32 %v2394, %v2686
  %v2759 = vmul.f32 %v2396, %v2700
  %v2760 = vmul.f32 %v2398, %v2714
  %v2761 = vmul.f32 %v2400, %v2728
  %v2762 = vmul.f32 %v2402, %v2742
  %2763 = vrot.lane.b32.xlu0 %v1947, 64
  %v2764 = vpop.permute.xlu0 %2763
  %2765 = vrot.lane.b32.xlu0 %v1949, 64
  %v2766 = vpop.permute.xlu0 %2765
  %2767 = vrot.lane.b32.xlu0 %v1952, 64
  %v2768 = vpop.permute.xlu0 %2767
  %2769 = vrot.lane.b32.xlu0 %v1954, 64
  %v2770 = vpop.permute.xlu0 %2769
  %2771 = vrot.lane.b32.xlu0 %v1957, 64
  %v2772 = vpop.permute.xlu0 %2771
  %v2778 = vsel %vm629, %v2743, 0
  %v2781 = vsel %vm629, %v2744, 0
  %v2784 = vsel %vm629, %v2745, 0
  %v2787 = vsel %vm629, %v2746, 0
  %v2790 = vsel %vm629, %v2747, 0
  %v2792 = vsel %vm1140, %v2772, 0
  %2794 = vmatpush.msra.mxu0 0.0
  %2795 = vmatpush.msra.mxu0 0.0
  %2796 = vmatpush.msra.mxu0 0.0
  %2797 = vmatpush.msra.mxu0 0.0
  %2798 = vmatpush.msra.mxu0 0.0
  %2799 = vmatpush.msra.mxu0 0.0
  %2800 = vmatpush.msra.mxu0 0.0
  %2801 = vmatpush.msra.mxu0 0.0
  %2802 = vmatpush.msra.mxu0 0.0
  %2803 = vmatpush.msra.mxu0 0.0
  %2804 = vmatpush.msra.mxu0 0.0
  %2805 = vmatpush.msra.mxu0 %v2792
  %2806 = vmatpush.msra.mxu0 %v2770
  %2807 = vmatpush.msra.mxu0 %v2768
  %2808 = vmatpush.msra.mxu0 %v2766
  %2809 = vmatpush.msra.mxu0 %v2764
  %2810 = vmatmul.f32.gmra.mxu0 %v2778
  %v2811 = vpop.f32.mrf.mxu0
  %v2812 = vadd.f32 0.0, %v2811
  %2813 = vmatmul.f32.gmra.mxu0 %v2781
  %v2814 = vpop.f32.mrf.mxu0
  %v2815 = vadd.f32 0.0, %v2814
  %2816 = vmatmul.f32.gmra.mxu0 %v2784
  %v2817 = vpop.f32.mrf.mxu0
  %v2818 = vadd.f32 0.0, %v2817
  %2819 = vmatmul.f32.gmra.mxu0 %v2787
  %v2820 = vpop.f32.mrf.mxu0
  %v2821 = vadd.f32 0.0, %v2820
  %2822 = vmatmul.f32.gmra.mxu0 %v2790
  %v2823 = vpop.f32.mrf.mxu0
  %v2824 = vadd.f32 0.0, %v2823
  %2825 = vdwg.mxu0
  %2826 = vrot.lane.b32.xlu0 %v1966, 64
  %v2827 = vpop.permute.xlu0 %2826
  %2828 = vrot.lane.b32.xlu0 %v1968, 64
  %v2829 = vpop.permute.xlu0 %2828
  %2830 = vrot.lane.b32.xlu0 %v1970, 64
  %v2831 = vpop.permute.xlu0 %2830
  %2832 = vrot.lane.b32.xlu0 %v1972, 64
  %v2833 = vpop.permute.xlu0 %2832
  %2834 = vrot.lane.b32.xlu0 %v1974, 64
  %v2835 = vpop.permute.xlu0 %2834
  %v2841 = vsel %vm629, %v2748, 0
  %v2844 = vsel %vm629, %v2749, 0
  %v2847 = vsel %vm629, %v2750, 0
  %v2850 = vsel %vm629, %v2751, 0
  %v2853 = vsel %vm629, %v2752, 0
  %v2855 = vsel %vm1140, %v2835, 0
  %2857 = vmatpush.msra.mxu0 0.0
  %2858 = vmatpush.msra.mxu0 0.0
  %2859 = vmatpush.msra.mxu0 0.0
  %2860 = vmatpush.msra.mxu0 0.0
  %2861 = vmatpush.msra.mxu0 0.0
  %2862 = vmatpush.msra.mxu0 0.0
  %2863 = vmatpush.msra.mxu0 0.0
  %2864 = vmatpush.msra.mxu0 0.0
  %2865 = vmatpush.msra.mxu0 0.0
  %2866 = vmatpush.msra.mxu0 0.0
  %2867 = vmatpush.msra.mxu0 0.0
  %2868 = vmatpush.msra.mxu0 %v2855
  %2869 = vmatpush.msra.mxu0 %v2833
  %2870 = vmatpush.msra.mxu0 %v2831
  %2871 = vmatpush.msra.mxu0 %v2829
  %2872 = vmatpush.msra.mxu0 %v2827
  %2873 = vmatmul.f32.gmra.mxu0 %v2841
  %v2874 = vpop.f32.mrf.mxu0
  %v2875 = vadd.f32 0.0, %v2874
  %2876 = vmatmul.f32.gmra.mxu0 %v2844
  %v2877 = vpop.f32.mrf.mxu0
  %v2878 = vadd.f32 0.0, %v2877
  %2879 = vmatmul.f32.gmra.mxu0 %v2847
  %v2880 = vpop.f32.mrf.mxu0
  %v2881 = vadd.f32 0.0, %v2880
  %2882 = vmatmul.f32.gmra.mxu0 %v2850
  %v2883 = vpop.f32.mrf.mxu0
  %v2884 = vadd.f32 0.0, %v2883
  %2885 = vmatmul.f32.gmra.mxu0 %v2853
  %v2886 = vpop.f32.mrf.mxu0
  %v2887 = vadd.f32 0.0, %v2886
  %2888 = vdwg.mxu0
  %2889 = vrot.lane.b32.xlu0 %v1976, 64
  %v2890 = vpop.permute.xlu0 %2889
  %2891 = vrot.lane.b32.xlu0 %v1978, 64
  %v2892 = vpop.permute.xlu0 %2891
  %2893 = vrot.lane.b32.xlu0 %v1980, 64
  %v2894 = vpop.permute.xlu0 %2893
  %2895 = vrot.lane.b32.xlu0 %v1982, 64
  %v2896 = vpop.permute.xlu0 %2895
  %2897 = vrot.lane.b32.xlu0 %v1984, 64
  %v2898 = vpop.permute.xlu0 %2897
  %v2904 = vsel %vm629, %v2753, 0
  %v2907 = vsel %vm629, %v2754, 0
  %v2910 = vsel %vm629, %v2755, 0
  %v2913 = vsel %vm629, %v2756, 0
  %v2916 = vsel %vm629, %v2757, 0
  %v2918 = vsel %vm1140, %v2898, 0
  %2920 = vmatpush.msra.mxu0 0.0
  %2921 = vmatpush.msra.mxu0 0.0
  %2922 = vmatpush.msra.mxu0 0.0
  %2923 = vmatpush.msra.mxu0 0.0
  %2924 = vmatpush.msra.mxu0 0.0
  %2925 = vmatpush.msra.mxu0 0.0
  %2926 = vmatpush.msra.mxu0 0.0
  %2927 = vmatpush.msra.mxu0 0.0
  %2928 = vmatpush.msra.mxu0 0.0
  %2929 = vmatpush.msra.mxu0 0.0
  %2930 = vmatpush.msra.mxu0 0.0
  %2931 = vmatpush.msra.mxu0 %v2918
  %2932 = vmatpush.msra.mxu0 %v2896
  %2933 = vmatpush.msra.mxu0 %v2894
  %2934 = vmatpush.msra.mxu0 %v2892
  %2935 = vmatpush.msra.mxu0 %v2890
  %2936 = vmatmul.f32.gmra.mxu0 %v2904
  %v2937 = vpop.f32.mrf.mxu0
  %v2938 = vadd.f32 0.0, %v2937
  %2939 = vmatmul.f32.gmra.mxu0 %v2907
  %v2940 = vpop.f32.mrf.mxu0
  %v2941 = vadd.f32 0.0, %v2940
  %2942 = vmatmul.f32.gmra.mxu0 %v2910
  %v2943 = vpop.f32.mrf.mxu0
  %v2944 = vadd.f32 0.0, %v2943
  %2945 = vmatmul.f32.gmra.mxu0 %v2913
  %v2946 = vpop.f32.mrf.mxu0
  %v2947 = vadd.f32 0.0, %v2946
  %2948 = vmatmul.f32.gmra.mxu0 %v2916
  %v2949 = vpop.f32.mrf.mxu0
  %v2950 = vadd.f32 0.0, %v2949
  %2951 = vdwg.mxu0
  %2952 = vrot.lane.b32.xlu0 %v1986, 64
  %v2953 = vpop.permute.xlu0 %2952
  %2954 = vrot.lane.b32.xlu0 %v1988, 64
  %v2955 = vpop.permute.xlu0 %2954
  %2956 = vrot.lane.b32.xlu0 %v1990, 64
  %v2957 = vpop.permute.xlu0 %2956
  %2958 = vrot.lane.b32.xlu0 %v1992, 64
  %v2959 = vpop.permute.xlu0 %2958
  %2960 = vrot.lane.b32.xlu0 %v1994, 64
  %v2961 = vpop.permute.xlu0 %2960
  %v2967 = vsel %vm629, %v2758, 0
  %v2970 = vsel %vm629, %v2759, 0
  %v2973 = vsel %vm629, %v2760, 0
  %v2976 = vsel %vm629, %v2761, 0
  %v2979 = vsel %vm629, %v2762, 0
  %v2981 = vsel %vm1140, %v2961, 0
  %2983 = vmatpush.msra.mxu0 0.0
  %2984 = vmatpush.msra.mxu0 0.0
  %2985 = vmatpush.msra.mxu0 0.0
  %2986 = vmatpush.msra.mxu0 0.0
  %2987 = vmatpush.msra.mxu0 0.0
  %2988 = vmatpush.msra.mxu0 0.0
  %2989 = vmatpush.msra.mxu0 0.0
  %2990 = vmatpush.msra.mxu0 0.0
  %2991 = vmatpush.msra.mxu0 0.0
  %2992 = vmatpush.msra.mxu0 0.0
  %2993 = vmatpush.msra.mxu0 0.0
  %2994 = vmatpush.msra.mxu0 %v2981
  %2995 = vmatpush.msra.mxu0 %v2959
  %2996 = vmatpush.msra.mxu0 %v2957
  %2997 = vmatpush.msra.mxu0 %v2955
  %2998 = vmatpush.msra.mxu0 %v2953
  %2999 = vmatmul.f32.gmra.mxu0 %v2967
  %v3000 = vpop.f32.mrf.mxu0
  %v3001 = vadd.f32 0.0, %v3000
  %3002 = vmatmul.f32.gmra.mxu0 %v2970
  %v3003 = vpop.f32.mrf.mxu0
  %v3004 = vadd.f32 0.0, %v3003
  %3005 = vmatmul.f32.gmra.mxu0 %v2973
  %v3006 = vpop.f32.mrf.mxu0
  %v3007 = vadd.f32 0.0, %v3006
  %3008 = vmatmul.f32.gmra.mxu0 %v2976
  %v3009 = vpop.f32.mrf.mxu0
  %v3010 = vadd.f32 0.0, %v3009
  %3011 = vmatmul.f32.gmra.mxu0 %v2979
  %v3012 = vpop.f32.mrf.mxu0
  %v3013 = vadd.f32 0.0, %v3012
  %3014 = vdwg.mxu0
  %3020 = vrot.lane.b32.xlu0 %v2875, 8
  %v3021 = vpop.permute.xlu0 %3020
  %3022 = vrot.lane.b32.xlu0 %v2878, 8
  %v3023 = vpop.permute.xlu0 %3022
  %3024 = vrot.lane.b32.xlu0 %v2881, 8
  %v3025 = vpop.permute.xlu0 %3024
  %3026 = vrot.lane.b32.xlu0 %v2884, 8
  %v3027 = vpop.permute.xlu0 %3026
  %3028 = vrot.lane.b32.xlu0 %v2887, 8
  %v3029 = vpop.permute.xlu0 %3028
  %3040 = vrot.lane.b32.xlu0 %v2938, 16
  %v3041 = vpop.permute.xlu0 %3040
  %3042 = vrot.lane.b32.xlu0 %v2941, 16
  %v3043 = vpop.permute.xlu0 %3042
  %3044 = vrot.lane.b32.xlu0 %v2944, 16
  %v3045 = vpop.permute.xlu0 %3044
  %3046 = vrot.lane.b32.xlu0 %v2947, 16
  %v3047 = vpop.permute.xlu0 %3046
  %3048 = vrot.lane.b32.xlu0 %v2950, 16
  %v3049 = vpop.permute.xlu0 %3048
  %3060 = vrot.lane.b32.xlu0 %v3001, 24
  %v3061 = vpop.permute.xlu0 %3060
  %3062 = vrot.lane.b32.xlu0 %v3004, 24
  %v3063 = vpop.permute.xlu0 %3062
  %3064 = vrot.lane.b32.xlu0 %v3007, 24
  %v3065 = vpop.permute.xlu0 %3064
  %3066 = vrot.lane.b32.xlu0 %v3010, 24
  %v3067 = vpop.permute.xlu0 %3066
  %3068 = vrot.lane.b32.xlu0 %v3013, 24
  %v3069 = vpop.permute.xlu0 %3068
  %v3075 = vsel %vm350, %v2812, %v3021
  %v3076 = vsel %vm350, %v2815, %v3023
  %v3077 = vsel %vm350, %v2818, %v3025
  %v3078 = vsel %vm350, %v2821, %v3027
  %v3079 = vsel %vm350, %v2824, %v3029
  %v3080 = vsel %vm1429, %v3075, %v3041
  %v3081 = vsel %vm1429, %v3076, %v3043
  %v3082 = vsel %vm1429, %v3077, %v3045
  %v3083 = vsel %vm1429, %v3078, %v3047
  %v3084 = vsel %vm1429, %v3079, %v3049
  %v3085 = vsel %vm1435, %v3080, %v3061
  %v3086 = vsel %vm1435, %v3081, %v3063
  %v3087 = vsel %vm1435, %v3082, %v3065
  %v3088 = vsel %vm1435, %v3083, %v3067
  %v3089 = vsel %vm1435, %v3084, %v3069
  %v3090 = vpack.c.bf16 %v3086, %v3085
  %v3091 = vpack.c.bf16 %v3088, %v3087
  %v3092 = vpack.c.bf16 %v3089, %v3089
  %3093 = vrot.lane.b32.xlu0 %v1924, 32
  %v3094 = vpop.permute.xlu0 %3093
  %3095 = vrot.lane.b32.xlu0 %v1925, 32
  %v3096 = vpop.permute.xlu0 %3095
  %v3100 = vsel %vm123, %v3090, 0
  %v3103 = vsel %vm123, %v3091, 0
  %v3106 = vsel %vm123, %v3092, 0
  %3108 = vmatpush.bf16.msra.mxu0 0
  %3109 = vmatpush.bf16.msra.mxu0 0
  %3110 = vmatpush.bf16.msra.mxu0 0
  %3111 = vmatpush.bf16.msra.mxu0 0
  %3112 = vmatpush.bf16.msra.mxu0 0
  %3113 = vmatpush.bf16.msra.mxu0 0
  %3114 = vmatpush.bf16.msra.mxu0 %v3096
  %3115 = vmatpush.bf16.msra.mxu0 %v3094
  %3116 = vmatmul.bf16.gmra.mxu0 %v3100
  %v3117 = vpop.f32.mrf.mxu0
  %v3118 = vadd.f32 0.0, %v3117
  %v3119 = vpop.f32.mrf.mxu0
  %v3120 = vadd.f32 0.0, %v3119
  %3121 = vmatmul.bf16.gmra.mxu0 %v3103
  %v3122 = vpop.f32.mrf.mxu0
  %v3123 = vadd.f32 0.0, %v3122
  %v3124 = vpop.f32.mrf.mxu0
  %v3125 = vadd.f32 0.0, %v3124
  %3126 = vmatmul.bf16.gmra.mxu0 %v3106
  %v3127 = vpop.f32.mrf.mxu0
  %v3128 = vadd.f32 0.0, %v3127
  %v3129 = vpop.f32.mrf.mxu0
  %3130 = vdwg.mxu0
  %v3131 = vadd.f32 %v1769, %v3118
  %v3132 = vadd.f32 %v1770, %v3120
  %v3133 = vadd.f32 %v1771, %v3123
  %v3134 = vadd.f32 %v1772, %v3125
  %v3135 = vadd.f32 %v1773, %v3128
  %v3136 = vperm.slane %v1786, 0
  %3138 = vrot.lane.b32.xlu0 %v3136, 64
  %v3139 = vpop.permute.xlu0 %3138
  %v3141 = vadd.f32 %v3131, %v3139
  %v3142 = vadd.f32 %v3132, %v3139
  %v3143 = vadd.f32 %v3133, %v3139
  %v3144 = vadd.f32 %v3134, %v3139
  %v3145 = vadd.f32 %v3135, %v3139
  %v3146 = vsel %vm123, %v3141, 0.0
  %3147 = vadd.xlane.f32.xlu0 %v3146
  %v3148 = vpop.xlane.xlu0 %3147
  %v3149 = vsel %vm123, %v3142, 0.0
  %3150 = vadd.xlane.f32.xlu0 %v3149
  %v3151 = vpop.xlane.xlu0 %3150
  %v3152 = vsel %vm123, %v3143, 0.0
  %3153 = vadd.xlane.f32.xlu0 %v3152
  %v3154 = vpop.xlane.xlu0 %3153
  %v3155 = vsel %vm123, %v3144, 0.0
  %3156 = vadd.xlane.f32.xlu0 %v3155
  %v3157 = vpop.xlane.xlu0 %3156
  %v3158 = vsel %vm136, %v3145, 0.0
  %3159 = vadd.xlane.f32.xlu0 %v3158
  %v3160 = vpop.xlane.xlu0 %3159
  %v3161 = vmul.f32 %v3148, %v146
  %v3162 = vmul.f32 %v3151, %v146
  %v3163 = vmul.f32 %v3154, %v146
  %v3164 = vmul.f32 %v3157, %v146
  %v3165 = vmul.f32 %v3160, %v146
  %v3166 = vsub.f32 %v3141, %v3161
  %v3167 = vsub.f32 %v3142, %v3162
  %v3168 = vsub.f32 %v3143, %v3163
  %v3169 = vsub.f32 %v3144, %v3164
  %v3170 = vsub.f32 %v3145, %v3165
  %v3171 = vmul.f32 %v3166, %v3166
  %v3172 = vmul.f32 %v3167, %v3167
  %v3173 = vmul.f32 %v3168, %v3168
  %v3174 = vmul.f32 %v3169, %v3169
  %v3175 = vmul.f32 %v3170, %v3170
  %v3176 = vsel %vm123, %v3171, 0.0
  %3177 = vadd.xlane.f32.xlu0 %v3176
  %v3178 = vpop.xlane.xlu0 %3177
  %v3179 = vsel %vm123, %v3172, 0.0
  %3180 = vadd.xlane.f32.xlu0 %v3179
  %v3181 = vpop.xlane.xlu0 %3180
  %v3182 = vsel %vm123, %v3173, 0.0
  %3183 = vadd.xlane.f32.xlu0 %v3182
  %v3184 = vpop.xlane.xlu0 %3183
  %v3185 = vsel %vm123, %v3174, 0.0
  %3186 = vadd.xlane.f32.xlu0 %v3185
  %v3187 = vpop.xlane.xlu0 %3186
  %v3188 = vsel %vm136, %v3175, 0.0
  %3189 = vadd.xlane.f32.xlu0 %v3188
  %v3190 = vpop.xlane.xlu0 %3189
  %v3191 = vmul.f32 %v3178, %v146
  %v3192 = vmul.f32 %v3181, %v146
  %v3193 = vmul.f32 %v3184, %v146
  %v3194 = vmul.f32 %v3187, %v146
  %v3195 = vmul.f32 %v3190, %v146
  %v3196 = vadd.f32 %v3191, 1e-05
  %v3197 = vadd.f32 %v3192, 1e-05
  %v3198 = vadd.f32 %v3193, 1e-05
  %v3199 = vadd.f32 %v3194, 1e-05
  %v3200 = vadd.f32 %v3195, 1e-05
  %v3201 = vrsqrt.pop %v3196
  %v3202 = vmul.f32 %v3201, %v3196
  %v3203 = vmul.f32 %v3202, %v3201
  %v3204 = vmul.f32 0.5, %v3203
  %v3205 = vsub.f32 1.5, %v3204
  %v3206 = vmul.f32 %v3201, %v3205
  %vm3207 = vweird.f32 %v3196
  %vm3208 = vweird.f32 %v3201
  %vm3209 = vmor %vm3207, %vm3208
  %v3210 = vsel %vm3209, %v3201, %v3206
  %v3211 = vrsqrt.pop %v3197
  %v3212 = vmul.f32 %v3211, %v3197
  %v3213 = vmul.f32 %v3212, %v3211
  %v3214 = vmul.f32 0.5, %v3213
  %v3215 = vsub.f32 1.5, %v3214
  %v3216 = vmul.f32 %v3211, %v3215
  %vm3217 = vweird.f32 %v3197
  %vm3218 = vweird.f32 %v3211
  %vm3219 = vmor %vm3217, %vm3218
  %v3220 = vsel %vm3219, %v3211, %v3216
  %v3221 = vrsqrt.pop %v3198
  %v3222 = vmul.f32 %v3221, %v3198
  %v3223 = vmul.f32 %v3222, %v3221
  %v3224 = vmul.f32 0.5, %v3223
  %v3225 = vsub.f32 1.5, %v3224
  %v3226 = vmul.f32 %v3221, %v3225
  %vm3227 = vweird.f32 %v3198
  %vm3228 = vweird.f32 %v3221
  %vm3229 = vmor %vm3227, %vm3228
  %v3230 = vsel %vm3229, %v3221, %v3226
  %v3231 = vrsqrt.pop %v3199
  %v3232 = vmul.f32 %v3231, %v3199
  %v3233 = vmul.f32 %v3232, %v3231
  %v3234 = vmul.f32 0.5, %v3233
  %v3235 = vsub.f32 1.5, %v3234
  %v3236 = vmul.f32 %v3231, %v3235
  %vm3237 = vweird.f32 %v3199
  %vm3238 = vweird.f32 %v3231
  %vm3239 = vmor %vm3237, %vm3238
  %v3240 = vsel %vm3239, %v3231, %v3236
  %v3241 = vrsqrt.pop %v3200
  %v3242 = vmul.f32 %v3241, %v3200
  %v3243 = vmul.f32 %v3242, %v3241
  %v3244 = vmul.f32 0.5, %v3243
  %v3245 = vsub.f32 1.5, %v3244
  %v3246 = vmul.f32 %v3241, %v3245
  %vm3247 = vweird.f32 %v3200
  %vm3248 = vweird.f32 %v3241
  %vm3249 = vmor %vm3247, %vm3248
  %v3250 = vsel %vm3249, %v3241, %v3246
  %v3251 = vmul.f32 %v3166, %v3210
  %v3252 = vmul.f32 %v3167, %v3220
  %v3253 = vmul.f32 %v3168, %v3230
  %v3254 = vmul.f32 %v3169, %v3240
  %v3255 = vmul.f32 %v3170, %v3250
  %3256 = vrot.lane.b32.xlu0 %v1897, 64
  %v3257 = vpop.permute.xlu0 %3256
  %v3259 = vmul.f32 %v3251, %v3257
  %v3260 = vmul.f32 %v3252, %v3257
  %v3261 = vmul.f32 %v3253, %v3257
  %v3262 = vmul.f32 %v3254, %v3257
  %v3263 = vmul.f32 %v3255, %v3257
  %3264 = vrot.lane.b32.xlu0 %v1897, 32
  %v3265 = vpop.permute.xlu0 %3264
  %v3267 = vadd.f32 %v3259, %v3265
  %v3268 = vadd.f32 %v3260, %v3265
  %v3269 = vadd.f32 %v3261, %v3265
  %v3270 = vadd.f32 %v3262, %v3265
  %v3271 = vadd.f32 %v3263, %v3265
  %v3272 = vpack.c.bf16 %v3268, %v3267
  %v3273 = vpack.c.bf16 %v3270, %v3269
  %v3274 = vpack.c.bf16 %v3271, %v3271
  %v3279 = vunpack.c.l.b16 %v1779
  %v3280 = vunpack.c.l.b16 %v1780
  %v3281 = vunpack.c.l.b16 %v1781
  %v3282 = vunpack.c.l.b16 %v1782
  %v3283 = vpack.c.b16 %v3280, %v3279
  %v3284 = vpack.c.b16 %v3282, %v3281
  %v3288 = vsel %vm123, %v3272, 0
  %v3291 = vsel %vm123, %v3273, 0
  %v3294 = vsel %vm123, %v3274, 0
  %3296 = vmatpush.bf16.msra.mxu0 0
  %3297 = vmatpush.bf16.msra.mxu0 0
  %3298 = vmatpush.bf16.msra.mxu0 0
  %3299 = vmatpush.bf16.msra.mxu0 0
  %3300 = vmatpush.bf16.msra.mxu0 0
  %3301 = vmatpush.bf16.msra.mxu0 0
  %3302 = vmatpush.bf16.msra.mxu0 %v3284
  %3303 = vmatpush.bf16.msra.mxu0 %v3283
  %3304 = vmatmul.bf16.gmra.mxu0 %v3288
  %v3305 = vpop.f32.mrf.mxu0
  %v3306 = vadd.f32 %v3136, %v3305
  %v3307 = vpop.f32.mrf.mxu0
  %v3308 = vadd.f32 %v3136, %v3307
  %3309 = vmatmul.bf16.gmra.mxu0 %v3291
  %v3310 = vpop.f32.mrf.mxu0
  %v3311 = vadd.f32 %v3136, %v3310
  %v3312 = vpop.f32.mrf.mxu0
  %v3313 = vadd.f32 %v3136, %v3312
  %3314 = vmatmul.bf16.gmra.mxu0 %v3294
  %v3315 = vpop.f32.mrf.mxu0
  %v3316 = vadd.f32 %v3136, %v3315
  %v3317 = vpop.f32.mrf.mxu0
  %3318 = vdwg.mxu0
  %v3319 = vmul.f32 %v3306, 0.5
  %v3320 = vmul.f32 %v3308, 0.5
  %v3321 = vmul.f32 %v3311, 0.5
  %v3322 = vmul.f32 %v3313, 0.5
  %v3323 = vmul.f32 %v3316, 0.5
  %v3324 = vmul.f32 %v3306, 0.044715
  %v3325 = vmul.f32 %v3308, 0.044715
  %v3326 = vmul.f32 %v3311, 0.044715
  %v3327 = vmul.f32 %v3313, 0.044715
  %v3328 = vmul.f32 %v3316, 0.044715
  %v3329 = vmul.f32 %v3324, %v3306
  %v3330 = vmul.f32 %v3325, %v3308
  %v3331 = vmul.f32 %v3326, %v3311
  %v3332 = vmul.f32 %v3327, %v3313
  %v3333 = vmul.f32 %v3328, %v3316
  %v3334 = vmul.f32 %v3329, %v3306
  %v3335 = vmul.f32 %v3330, %v3308
  %v3336 = vmul.f32 %v3331, %v3311
  %v3337 = vmul.f32 %v3332, %v3313
  %v3338 = vmul.f32 %v3333, %v3316
  %v3339 = vadd.f32 %v3306, %v3334
  %v3340 = vadd.f32 %v3308, %v3335
  %v3341 = vadd.f32 %v3311, %v3336
  %v3342 = vadd.f32 %v3313, %v3337
  %v3343 = vadd.f32 %v3316, %v3338
  %v3344 = vmul.f32 %v3339, 0.7978846
  %v3345 = vmul.f32 %v3340, 0.7978846
  %v3346 = vmul.f32 %v3341, 0.7978846
  %v3347 = vmul.f32 %v3342, 0.7978846
  %v3348 = vmul.f32 %v3343, 0.7978846
  %v3349 = vtanh.pop %v3344
  %v3350 = vtanh.pop %v3345
  %v3351 = vtanh.pop %v3346
  %v3352 = vtanh.pop %v3347
  %v3353 = vtanh.pop %v3348
  %v3354 = vadd.f32 %v3349, 1.0
  %v3355 = vadd.f32 %v3350, 1.0
  %v3356 = vadd.f32 %v3351, 1.0
  %v3357 = vadd.f32 %v3352, 1.0
  %v3358 = vadd.f32 %v3353, 1.0
  %v3359 = vmul.f32 %v3319, %v3354
  %v3360 = vmul.f32 %v3320, %v3355
  %v3361 = vmul.f32 %v3321, %v3356
  %v3362 = vmul.f32 %v3322, %v3357
  %v3363 = vmul.f32 %v3323, %v3358
  %v3364 = vpack.c.bf16 %v3360, %v3359
  %v3365 = vpack.c.bf16 %v3362, %v3361
  %v3366 = vpack.c.bf16 %v3363, %v3363
  %3367 = vrot.lane.b32.xlu0 %v3283, 64
  %v3368 = vpop.permute.xlu0 %3367
  %3369 = vrot.lane.b32.xlu0 %v3284, 64
  %v3370 = vpop.permute.xlu0 %3369
  %v3372 = vsel %vm1722, %v3364, 0
  %v3375 = vsel %vm1722, %v3365, 0
  %v3378 = vsel %vm1722, %v3366, 0
  %v3381 = vsel %vm1722, %v3368, 0
  %v3384 = vsel %vm1722, %v3370, 0
  %3386 = vmatpush.bf16.xpose.msra.mxu0 0
  %3387 = vmatpush.bf16.xpose.msra.mxu0 0
  %3388 = vmatpush.bf16.xpose.msra.mxu0 0
  %3389 = vmatpush.bf16.xpose.msra.mxu0 0
  %3390 = vmatpush.bf16.xpose.msra.mxu0 0
  %3391 = vmatpush.bf16.xpose.msra.mxu0 0
  %3392 = vmatpush.bf16.xpose.msra.mxu0 %v3384
  %3393 = vmatpush.bf16.xpose.msra.mxu0 %v3381
  %3394 = vmatmul.bf16.gmra.mxu0 %v3372
  %v3395 = vpop.f32.mrf.mxu0
  %v3396 = vadd.f32 0.0, %v3395
  %v3397 = vpop.f32.mrf.mxu0
  %v3398 = vadd.f32 0.0, %v3397
  %3399 = vmatmul.bf16.gmra.mxu0 %v3375
  %v3400 = vpop.f32.mrf.mxu0
  %v3401 = vadd.f32 0.0, %v3400
  %v3402 = vpop.f32.mrf.mxu0
  %v3403 = vadd.f32 0.0, %v3402
  %3404 = vmatmul.bf16.gmra.mxu0 %v3378
  %v3405 = vpop.f32.mrf.mxu0
  %v3406 = vadd.f32 0.0, %v3405
  %v3407 = vpop.f32.mrf.mxu0
  %3408 = vdwg.mxu0
  %v3409 = vadd.f32 %v3141, %v3396
  %v3410 = vadd.f32 %v3142, %v3398
  %v3411 = vadd.f32 %v3143, %v3401
  %v3412 = vadd.f32 %v3144, %v3403
  %v3413 = vadd.f32 %v3145, %v3406
  %3414 = vrot.lane.b32.xlu0 %v3136, 32
  %v3415 = vpop.permute.xlu0 %3414
  %v3417 = vadd.f32 %v3409, %v3415
  %v3418 = vadd.f32 %v3410, %v3415
  %v3419 = vadd.f32 %v3411, %v3415
  %v3420 = vadd.f32 %v3412, %v3415
  %v3421 = vadd.f32 %v3413, %v3415
  %v3422 = vld [vmem:[%s6] sm:$0x1]
  %v3423 = vld [vmem:[%s6 + $0x1] sm:$0x1]
  %v3424 = vsel %vm123, %v3417, 0.0
  %3425 = vadd.xlane.f32.xlu0 %v3424
  %v3426 = vpop.xlane.xlu0 %3425
  %v3427 = vsel %vm123, %v3418, 0.0
  %3428 = vadd.xlane.f32.xlu0 %v3427
  %v3429 = vpop.xlane.xlu0 %3428
  %v3430 = vsel %vm123, %v3419, 0.0
  %3431 = vadd.xlane.f32.xlu0 %v3430
  %v3432 = vpop.xlane.xlu0 %3431
  %v3433 = vsel %vm123, %v3420, 0.0
  %3434 = vadd.xlane.f32.xlu0 %v3433
  %v3435 = vpop.xlane.xlu0 %3434
  %v3436 = vsel %vm136, %v3421, 0.0
  %3437 = vadd.xlane.f32.xlu0 %v3436
  %v3438 = vpop.xlane.xlu0 %3437
  %v3439 = vmul.f32 %v3426, %v146
  %v3440 = vmul.f32 %v3429, %v146
  %v3441 = vmul.f32 %v3432, %v146
  %v3442 = vmul.f32 %v3435, %v146
  %v3443 = vmul.f32 %v3438, %v146
  %v3444 = vsub.f32 %v3417, %v3439
  %v3445 = vsub.f32 %v3418, %v3440
  %v3446 = vsub.f32 %v3419, %v3441
  %v3447 = vsub.f32 %v3420, %v3442
  %v3448 = vsub.f32 %v3421, %v3443
  %v3449 = vmul.f32 %v3444, %v3444
  %v3450 = vmul.f32 %v3445, %v3445
  %v3451 = vmul.f32 %v3446, %v3446
  %v3452 = vmul.f32 %v3447, %v3447
  %v3453 = vmul.f32 %v3448, %v3448
  %v3454 = vsel %vm123, %v3449, 0.0
  %3455 = vadd.xlane.f32.xlu0 %v3454
  %v3456 = vpop.xlane.xlu0 %3455
  %v3457 = vsel %vm123, %v3450, 0.0
  %3458 = vadd.xlane.f32.xlu0 %v3457
  %v3459 = vpop.xlane.xlu0 %3458
  %v3460 = vsel %vm123, %v3451, 0.0
  %3461 = vadd.xlane.f32.xlu0 %v3460
  %v3462 = vpop.xlane.xlu0 %3461
  %v3463 = vsel %vm123, %v3452, 0.0
  %3464 = vadd.xlane.f32.xlu0 %v3463
  %v3465 = vpop.xlane.xlu0 %3464
  %v3466 = vsel %vm136, %v3453, 0.0
  %3467 = vadd.xlane.f32.xlu0 %v3466
  %v3468 = vpop.xlane.xlu0 %3467
  %v3469 = vmul.f32 %v3456, %v146
  %v3470 = vmul.f32 %v3459, %v146
  %v3471 = vmul.f32 %v3462, %v146
  %v3472 = vmul.f32 %v3465, %v146
  %v3473 = vmul.f32 %v3468, %v146
  %v3474 = vadd.f32 %v3469, 1e-05
  %v3475 = vadd.f32 %v3470, 1e-05
  %v3476 = vadd.f32 %v3471, 1e-05
  %v3477 = vadd.f32 %v3472, 1e-05
  %v3478 = vadd.f32 %v3473, 1e-05
  %v3479 = vrsqrt.pop %v3474
  %v3480 = vmul.f32 %v3479, %v3474
  %v3481 = vmul.f32 %v3480, %v3479
  %v3482 = vmul.f32 0.5, %v3481
  %v3483 = vsub.f32 1.5, %v3482
  %v3484 = vmul.f32 %v3479, %v3483
  %vm3485 = vweird.f32 %v3474
  %vm3486 = vweird.f32 %v3479
  %vm3487 = vmor %vm3485, %vm3486
  %v3488 = vsel %vm3487, %v3479, %v3484
  %v3489 = vrsqrt.pop %v3475
  %v3490 = vmul.f32 %v3489, %v3475
  %v3491 = vmul.f32 %v3490, %v3489
  %v3492 = vmul.f32 0.5, %v3491
  %v3493 = vsub.f32 1.5, %v3492
  %v3494 = vmul.f32 %v3489, %v3493
  %vm3495 = vweird.f32 %v3475
  %vm3496 = vweird.f32 %v3489
  %vm3497 = vmor %vm3495, %vm3496
  %v3498 = vsel %vm3497, %v3489, %v3494
  %v3499 = vrsqrt.pop %v3476
  %v3500 = vmul.f32 %v3499, %v3476
  %v3501 = vmul.f32 %v3500, %v3499
  %v3502 = vmul.f32 0.5, %v3501
  %v3503 = vsub.f32 1.5, %v3502
  %v3504 = vmul.f32 %v3499, %v3503
  %vm3505 = vweird.f32 %v3476
  %vm3506 = vweird.f32 %v3499
  %vm3507 = vmor %vm3505, %vm3506
  %v3508 = vsel %vm3507, %v3499, %v3504
  %v3509 = vrsqrt.pop %v3477
  %v3510 = vmul.f32 %v3509, %v3477
  %v3511 = vmul.f32 %v3510, %v3509
  %v3512 = vmul.f32 0.5, %v3511
  %v3513 = vsub.f32 1.5, %v3512
  %v3514 = vmul.f32 %v3509, %v3513
  %vm3515 = vweird.f32 %v3477
  %vm3516 = vweird.f32 %v3509
  %vm3517 = vmor %vm3515, %vm3516
  %v3518 = vsel %vm3517, %v3509, %v3514
  %v3519 = vrsqrt.pop %v3478
  %v3520 = vmul.f32 %v3519, %v3478
  %v3521 = vmul.f32 %v3520, %v3519
  %v3522 = vmul.f32 0.5, %v3521
  %v3523 = vsub.f32 1.5, %v3522
  %v3524 = vmul.f32 %v3519, %v3523
  %vm3525 = vweird.f32 %v3478
  %vm3526 = vweird.f32 %v3519
  %vm3527 = vmor %vm3525, %vm3526
  %v3528 = vsel %vm3527, %v3519, %v3524
  %v3529 = vmul.f32 %v3444, %v3488
  %v3530 = vmul.f32 %v3445, %v3498
  %v3531 = vmul.f32 %v3446, %v3508
  %v3532 = vmul.f32 %v3447, %v3518
  %v3533 = vmul.f32 %v3448, %v3528
  %v3534 = vperm.slane %v3422, 0
  %v3535 = vmul.f32 %v3529, %v3534
  %v3536 = vmul.f32 %v3530, %v3534
  %v3537 = vmul.f32 %v3531, %v3534
  %v3538 = vmul.f32 %v3532, %v3534
  %v3539 = vmul.f32 %v3533, %v3534
  %v3540 = vperm.slane %v3423, 0
  %v3541 = vadd.f32 %v3535, %v3540
  %v3542 = vadd.f32 %v3536, %v3540
  %v3543 = vadd.f32 %v3537, %v3540
  %v3544 = vadd.f32 %v3538, %v3540
  %v3545 = vadd.f32 %v3539, %v3540
  %v3546 = vlaneseq
  %v3547 = vshrl.u32 %v3546, 7
  %v3548 = vlaneseq
  %v3549 = vand.u32 %v3548, 127
  %v3550 = vmul.u32 %v3547, 17
  %vm3551 = vcmp.eq.s32.totalorder %v3549, %v3550
  %v3552 = vsel %vm3551, 1, 0
  %v3553 = vcvt.s32.f32 %v3552
  %v3555 = vsel %vm629, %v3553, 0
  %v3558 = vsel %vm1140, %v3545, 0
  %3560 = vmatpush.msra.mxu0 0.0
  %3561 = vmatpush.msra.mxu0 0.0
  %3562 = vmatpush.msra.mxu0 0.0
  %3563 = vmatpush.msra.mxu0 0.0
  %3564 = vmatpush.msra.mxu0 0.0
  %3565 = vmatpush.msra.mxu0 0.0
  %3566 = vmatpush.msra.mxu0 0.0
  %3567 = vmatpush.msra.mxu0 0.0
  %3568 = vmatpush.msra.mxu0 0.0
  %3569 = vmatpush.msra.mxu0 0.0
  %3570 = vmatpush.msra.mxu0 0.0
  %3571 = vmatpush.msra.mxu0 %v3558
  %3572 = vmatpush.msra.mxu0 %v3544
  %3573 = vmatpush.msra.mxu0 %v3543
  %3574 = vmatpush.msra.mxu0 %v3542
  %3575 = vmatpush.msra.mxu0 %v3541
  %3576 = vmatmul.f32.gmra.mxu0 %v3555
  %v3577 = vpop.f32.mrf.mxu0
  %v3578 = vadd.f32 0.0, %v3577
  %3579 = vdwg.mxu0
  %v3580 = vld [vmem:[%s6 + $0x8] sm:$0xff]
  %v3581 = vld [vmem:[%s6 + $0x10] sm:$0xff]
  %v3582 = vld [vmem:[%s6 + $0x18] sm:$0xff]
  %v3583 = vld [vmem:[%s6 + $0x20] sm:$0xff]
  %v3584 = vld [vmem:[%s6 + $0x2] sm:$0x1]
  %v3585 = vperm.slane %v3584, 0
  %v3587 = vsel %vm123, %v3578, 0
  %3589 = vmatpush.msra.mxu0 0.0
  %3590 = vmatpush.msra.mxu0 0.0
  %3591 = vmatpush.msra.mxu0 0.0
  %3592 = vmatpush.msra.mxu0 0.0
  %3593 = vmatpush.msra.mxu0 0.0
  %3594 = vmatpush.msra.mxu0 0.0
  %3595 = vmatpush.msra.mxu0 0.0
  %3596 = vmatpush.msra.mxu0 0.0
  %3597 = vmatpush.msra.mxu0 0.0
  %3598 = vmatpush.msra.mxu0 0.0
  %3599 = vmatpush.msra.mxu0 0.0
  %3600 = vmatpush.msra.mxu0 0.0
  %3601 = vmatpush.msra.mxu0 %v3583
  %3602 = vmatpush.msra.mxu0 %v3582
  %3603 = vmatpush.msra.mxu0 %v3581
  %3604 = vmatpush.msra.mxu0 %v3580
  %3605 = vmatmul.f32.gmra.mxu0 %v3587
  %v3606 = vpop.f32.mrf.mxu0
  %v3607 = vadd.f32 %v3585, %v3606
  %3608 = vdwg.mxu0
  %3609 = vst [vmem:[%s7] sm:$0xff] %v3607
  // Predicated region
  $region30: #{forward.1} parent=0 // pred_check
    _
  $region31: #{forward.1} parent=0 // pred_check_branch
    %3611 = sbr.rel (0) target = $region33
  $region32: #{forward.1} parent=0 // pred_region
    _
  $region33: #{forward.1} parent=0 // pred_fallthru
    _
  // Predicated region
  $region34: #{forward.1} parent=0 // pred_check
    _
  $region35: #{forward.1} parent=0 // pred_check_branch
    %3613 = sbr.rel (0) target = $region37
  $region36: #{forward.1} parent=0 // pred_region
    _
  $region37: #{forward.1} parent=0 // pred_fallthru
    _

</llo_original>
